<compile_context>
chip_gen: v5e
topology: v5e:2x2
jax: 0.10.0
libtpu: 0.0.40
codegen_flags: <defaults>
</compile_context>

<pallas_src>
import functools

import jax
import jax.numpy as jnp
from jax import lax
from jax.experimental import pallas as pl
from jax.experimental.pallas import tpu as pltpu


# ----------------------------------------------------------------------------
# Pallas kernels
# ----------------------------------------------------------------------------
def _group_norm_silu(y, g_ref, bt_ref, gmat_ref, gmatT_ref, n, co, groups, eps,
                     act):
    """GroupNorm(groups, co) over an (n, co) tile, optional SiLU."""
    cnt = float(n * (co // groups))
    s1 = jnp.dot(jnp.sum(y, axis=0, keepdims=True), gmat_ref[...])        # (1, g)
    s2 = jnp.dot(jnp.sum(y * y, axis=0, keepdims=True), gmat_ref[...])    # (1, g)
    mean_g = s1 / cnt
    var_g = s2 / cnt - mean_g * mean_g                                    # biased
    inv_g = lax.rsqrt(var_g + eps)
    mean_c = jnp.dot(mean_g, gmatT_ref[...])                              # (1, co)
    inv_c = jnp.dot(inv_g, gmatT_ref[...])                                # (1, co)
    y = (y - mean_c) * inv_c * g_ref[...] + bt_ref[...]
    if act:
        # SiLU; the divide goes to the EUP slot.
        y = y * pl.reciprocal(1.0 + jnp.exp(-y), approx=True)
    return y


def _ws_conv_gn_silu_res_kernel(xc_ref, w_ref, wres_ref, b_ref, bres_ref,
                                g_ref, bt_ref, gmat_ref, gmatT_ref,
                                y_ref, res_ref,
                                *, k, W, n, kcin, co, groups, eps):
    # xc_ref : (1, (H+2p)*W, k*cin)  column shifts folded into channels,
    #                                 rows zero-padded (see _im2col_rows).
    # w_ref  : (k*k*cin, co)  weight-standardized 3x3 weights (row-major taps)
    # wres_ref: (k*cin, co)   1x1 res conv weights embedded at the centre tap
    p = k // 2
    acc = jnp.zeros((n, co), jnp.float32)
    res = None
    for dy in range(k):                                   # k dots, K = k*cin each
        x_dy = xc_ref[0, dy * W:dy * W + n, :]            # (n, k*cin)
        acc = acc + jnp.dot(x_dy, w_ref[dy * kcin:(dy + 1) * kcin, :],
                            preferred_element_type=jnp.float32)
        if dy == p:
            # fused 1x1 residual conv: reuses the already-loaded centre row band
            res = jnp.dot(x_dy, wres_ref[...],
                          preferred_element_type=jnp.float32) + bres_ref[...]
    y = acc + b_ref[...]
    y = _group_norm_silu(y, g_ref, bt_ref, gmat_ref, gmatT_ref,
                         n, co, groups, eps, act=True)
    y_ref[0] = y.astype(y_ref.dtype)
    res_ref[0] = res.astype(res_ref.dtype)


def _ws_conv_gn_silu_add_kernel(xc_ref, res_ref, w_ref, b_ref,
                                g_ref, bt_ref, gmat_ref, gmatT_ref, o_ref,
                                *, k, W, n, kcin, co, groups, eps):
    acc = jnp.zeros((n, co), jnp.float32)
    for dy in range(k):
        acc = acc + jnp.dot(xc_ref[0, dy * W:dy * W + n, :],
                            w_ref[dy * kcin:(dy + 1) * kcin, :],
                            preferred_element_type=jnp.float32)
    y = acc + b_ref[...]
    y = _group_norm_silu(y, g_ref, bt_ref, gmat_ref, gmatT_ref,
                         n, co, groups, eps, act=True)
    o_ref[0] = (y + res_ref[0]).astype(o_ref.dtype)       # res(x) + conv(conv(x))


def _attn_up_residual_kernel(x_ref, pre_g_ref, pre_b_ref, wq_ref, wk_ref,
                             wv_ref, wo_ref, bo_ref, og_ref, ob_ref,
                             wu_ref, bu_ref, o_ref,
                             *, n, c, heads, scale, eps):
    # Full Residual(PreNorm(LinearAttention)) branch for one batch element,
    # plus the Up 1x1 conv as the epilogue (commutes with nearest upsample).
    x = x_ref[0]                                          # (n, c)
    cnt = float(n * c)

    def gn1(t, gamma, beta):                              # GroupNorm(1, c)
        s1 = jnp.sum(jnp.sum(t, axis=0, keepdims=True), axis=1, keepdims=True)
        s2 = jnp.sum(jnp.sum(t * t, axis=0, keepdims=True), axis=1, keepdims=True)
        mean = s1 / cnt
        var = s2 / cnt - mean * mean
        return (t - mean) * lax.rsqrt(var + eps) * gamma + beta

    xn = gn1(x, pre_g_ref[...], pre_b_ref[...])           # PreNorm
    att = jnp.zeros((n, c), jnp.float32)
    for h in range(heads):
        q = jnp.dot(xn, wq_ref[h], preferred_element_type=jnp.float32)   # (n, d)
        k = jnp.dot(xn, wk_ref[h], preferred_element_type=jnp.float32)   # (n, d)
        v = jnp.dot(xn, wv_ref[h], preferred_element_type=jnp.float32)   # (n, e)
        # q: softmax over the head-channel axis (torch dim=-2), then * scale
        qe = jnp.exp(q - jnp.max(q, axis=1, keepdims=True))
        q = qe * pl.reciprocal(jnp.sum(qe, axis=1, keepdims=True),
                               approx=True) * scale
        # k: softmax over the spatial axis (torch dim=-1), sublane reduction
        ke = jnp.exp(k - jnp.max(k, axis=0, keepdims=True))
        k = ke * pl.reciprocal(jnp.sum(ke, axis=0, keepdims=True), approx=True)
        # context[d, e] = sum_n k[n, d] v[n, e]  (transposed-LHS contraction)
        context = lax.dot_general(k, v, (((0,), (0,)), ((), ())),
                                  preferred_element_type=jnp.float32)    # (d, e)
        out_h = jnp.dot(q, context, preferred_element_type=jnp.float32)  # (n, e)
        # to_out 1x1 conv, accumulated per head ( == concat(heads) @ Wo )
        att = att + jnp.dot(out_h, wo_ref[h], preferred_element_type=jnp.float32)
    y = gn1(att + bo_ref[...], og_ref[...], ob_ref[...])  # to_out GroupNorm(1, c)
    xo = x + y                                            # residual
    # Up's 1x1 conv fused here (before the nearest 2x upsample in the wrapper).
    o_ref[0] = (jnp.dot(xo, wu_ref[...], preferred_element_type=jnp.float32)
                + bu_ref[...]).astype(o_ref.dtype)


# ----------------------------------------------------------------------------
# Wrappers
# ----------------------------------------------------------------------------
def _im2col_rows(x, k):
    """NHWC (B, H, W, C) -> (B, (H+2p)*W, k*C).

    Only the column (dx) shifts are folded into the channel axis (3x data for a
    3x3 conv, instead of the 9x of a full im2col); rows are zero padded so the
    k row (dy) taps are contiguous static slices of length H*W inside the
    kernel, at sublane offsets dy*W.
    """
    B, H, W, C = x.shape
    p = k // 2
    xw = jnp.pad(x, ((0, 0), (0, 0), (p, p), (0, 0)))
    cols = jnp.concatenate([xw[:, :, dx:dx + W, :] for dx in range(k)], axis=-1)
    cols = jnp.pad(cols, ((0, 0), (p, p), (0, 0), (0, 0)))
    return cols.reshape(B, (H + 2 * p) * W, k * C)


def _group_onehot(co, groups):
    g = (jnp.arange(co)[:, None] // (co // groups)
         == jnp.arange(groups)[None, :]).astype(jnp.float32)     # (co, groups)
    return g, g.T


def weight_standardize(w, eps=1e-5):
    # Reproduces the reference verbatim: (w - mean) / (var + eps).rsqrt(),
    # per output channel, biased variance (torch unbiased=False).
    mean = jnp.mean(w, axis=(0, 1, 2), keepdims=True)
    var = jnp.var(w, axis=(0, 1, 2), keepdims=True)
    return (w - mean) / lax.rsqrt(var + eps)


def ws_conv_block_a(x, w3, b3, gamma, beta, wres, bres, *, groups, eps=1e-5):
    """y = SiLU(GN(WSConv3x3(x))), res = Conv1x1(x); x NHWC -> (B, n, co) each."""
    B, H, W, cin = x.shape
    k, co = w3.shape[0], w3.shape[-1]
    n, kcin, p = H * W, k * cin, k // 2
    npad = (H + 2 * p) * W
    w3f = w3.reshape(k * k * cin, co)
    wres_emb = jnp.zeros((kcin, co), jnp.float32)
    wres_emb = wres_emb.at[p * cin:(p + 1) * cin, :].set(wres.reshape(cin, co))
    xc = _im2col_rows(x, k)
    gmat, gmatT = _group_onehot(co, groups)
    kern = functools.partial(_ws_conv_gn_silu_res_kernel, k=k, W=W, n=n,
                             kcin=kcin, co=co, groups=groups, eps=eps)
    y, res = pl.pallas_call(
        kern,
        out_shape=(jax.ShapeDtypeStruct((B, n, co), jnp.float32),
                   jax.ShapeDtypeStruct((B, n, co), jnp.float32)),
        grid=(B,),
        in_specs=[
            pl.BlockSpec((1, npad, kcin), lambda b: (b, 0, 0)),
            pl.BlockSpec((k * k * cin, co), lambda b: (0, 0)),
            pl.BlockSpec((kcin, co), lambda b: (0, 0)),
            pl.BlockSpec((1, co), lambda b: (0, 0)),
            pl.BlockSpec((1, co), lambda b: (0, 0)),
            pl.BlockSpec((1, co), lambda b: (0, 0)),
            pl.BlockSpec((1, co), lambda b: (0, 0)),
            pl.BlockSpec((co, groups), lambda b: (0, 0)),
            pl.BlockSpec((groups, co), lambda b: (0, 0)),
        ],
        out_specs=(pl.BlockSpec((1, n, co), lambda b: (b, 0, 0)),
                   pl.BlockSpec((1, n, co), lambda b: (b, 0, 0))),
        compiler_params=pltpu.CompilerParams(dimension_semantics=("parallel",)),
    )(xc, w3f, wres_emb, b3.reshape(1, co), bres.reshape(1, co),
      gamma.reshape(1, co), beta.reshape(1, co), gmat, gmatT)
    return y, res


def ws_conv_block_b(y1, res, w3, b3, gamma, beta, *, H, W, groups, eps=1e-5):
    """out = SiLU(GN(WSConv3x3(y1))) + res; flattened (B, n, co) in and out."""
    B, n, cin = y1.shape
    k, co = w3.shape[0], w3.shape[-1]
    kcin, p = k * cin, k // 2
    npad = (H + 2 * p) * W
    xc = _im2col_rows(y1.reshape(B, H, W, cin), k)
    gmat, gmatT = _group_onehot(co, groups)
    kern = functools.partial(_ws_conv_gn_silu_add_kernel, k=k, W=W, n=n,
                             kcin=kcin, co=co, groups=groups, eps=eps)
    return pl.pallas_call(
        kern,
        out_shape=jax.ShapeDtypeStruct((B, n, co), jnp.float32),
        grid=(B,),
        in_specs=[
            pl.BlockSpec((1, npad, kcin), lambda b: (b, 0, 0)),
            pl.BlockSpec((1, n, co), lambda b: (b, 0, 0)),
            pl.BlockSpec((k * k * cin, co), lambda b: (0, 0)),
            pl.BlockSpec((1, co), lambda b: (0, 0)),
            pl.BlockSpec((1, co), lambda b: (0, 0)),
            pl.BlockSpec((1, co), lambda b: (0, 0)),
            pl.BlockSpec((co, groups), lambda b: (0, 0)),
            pl.BlockSpec((groups, co), lambda b: (0, 0)),
        ],
        out_specs=pl.BlockSpec((1, n, co), lambda b: (b, 0, 0)),
        compiler_params=pltpu.CompilerParams(dimension_semantics=("parallel",)),
    )(xc, res, w3.reshape(k * k * cin, co), b3.reshape(1, co),
      gamma.reshape(1, co), beta.reshape(1, co), gmat, gmatT)


def attn_up_residual_block(x_flat, params, *, heads, c_head, eps=1e-5):
    """UpConv1x1(x + to_out(LinearAttention(GN1(x)))); x_flat (B, n, c)."""
    B, n, c = x_flat.shape
    c_hid = heads * c_head
    c_up = params['u_w'].shape[-1]
    scale = c_head ** (-0.5)
    w_qkv = params['qkv_w'].reshape(c, 3 * c_hid)
    wq = w_qkv[:, 0 * c_hid:1 * c_hid].reshape(c, heads, c_head).transpose(1, 0, 2)
    wk = w_qkv[:, 1 * c_hid:2 * c_hid].reshape(c, heads, c_head).transpose(1, 0, 2)
    wv = w_qkv[:, 2 * c_hid:3 * c_hid].reshape(c, heads, c_head).transpose(1, 0, 2)
    wo = params['ao_w'].reshape(heads, c_head, c)
    kern = functools.partial(_attn_up_residual_kernel, n=n, c=c, heads=heads,
                             scale=scale, eps=eps)
    return pl.pallas_call(
        kern,
        out_shape=jax.ShapeDtypeStruct((B, n, c_up), jnp.float32),
        grid=(B,),
        in_specs=[
            pl.BlockSpec((1, n, c), lambda b: (b, 0, 0)),
            pl.BlockSpec((1, c), lambda b: (0, 0)),
            pl.BlockSpec((1, c), lambda b: (0, 0)),
            pl.BlockSpec((heads, c, c_head), lambda b: (0, 0, 0)),
            pl.BlockSpec((heads, c, c_head), lambda b: (0, 0, 0)),
            pl.BlockSpec((heads, c, c_head), lambda b: (0, 0, 0)),
            pl.BlockSpec((heads, c_head, c), lambda b: (0, 0, 0)),
            pl.BlockSpec((1, c), lambda b: (0, 0)),
            pl.BlockSpec((1, c), lambda b: (0, 0)),
            pl.BlockSpec((1, c), lambda b: (0, 0)),
            pl.BlockSpec((c, c_up), lambda b: (0, 0)),
            pl.BlockSpec((1, c_up), lambda b: (0, 0)),
        ],
        out_specs=pl.BlockSpec((1, n, c_up), lambda b: (b, 0, 0)),
        compiler_params=pltpu.CompilerParams(dimension_semantics=("parallel",)),
    )(x_flat, params['pre_g'].reshape(1, c), params['pre_bt'].reshape(1, c),
      wq, wk, wv, wo, params['ao_b'].reshape(1, c),
      params['ao_g'].reshape(1, c), params['ao_bt'].reshape(1, c),
      params['u_w'].reshape(c, c_up), params['u_b'].reshape(1, c_up))


# ----------------------------------------------------------------------------
# Parameter init (deterministic, synthetic)
# ----------------------------------------------------------------------------
def _init_conv(key, k, cin, cout, bias=True, scale=0.1):
    kw, kb = jax.random.split(key)
    w = scale * jax.random.normal(kw, (k, k, cin, cout), jnp.float32)
    b = scale * jax.random.normal(kb, (cout,), jnp.float32) if bias else None
    return w, b


def _init_gn(key, c):
    kg, kb = jax.random.split(key)
    gamma = 1.0 + 0.1 * jax.random.normal(kg, (c,), jnp.float32)
    beta = 0.1 * jax.random.normal(kb, (c,), jnp.float32)
    return gamma, beta


def init_dec_block(key, c_in, c_out, heads=4, c_head=32):
    ks = jax.random.split(key, 16)
    cio = c_in + c_out
    c_hid = heads * c_head
    p = {}
    p['c1_res_w'], p['c1_res_b'] = _init_conv(ks[0], 1, cio, c_out)
    p['c1_b1_w'], p['c1_b1_b'] = _init_conv(ks[1], 3, cio, c_out)
    p['c1_b1_g'], p['c1_b1_bt'] = _init_gn(ks[2], c_out)
    p['c1_b2_w'], p['c1_b2_b'] = _init_conv(ks[3], 3, c_out, c_out)
    p['c1_b2_g'], p['c1_b2_bt'] = _init_gn(ks[4], c_out)
    p['c2_res_w'], p['c2_res_b'] = _init_conv(ks[5], 1, cio, c_out)
    p['c2_b1_w'], p['c2_b1_b'] = _init_conv(ks[6], 3, cio, c_out)
    p['c2_b1_g'], p['c2_b1_bt'] = _init_gn(ks[7], c_out)
    p['c2_b2_w'], p['c2_b2_b'] = _init_conv(ks[8], 3, c_out, c_out)
    p['c2_b2_g'], p['c2_b2_bt'] = _init_gn(ks[9], c_out)
    p['pre_g'], p['pre_bt'] = _init_gn(ks[10], c_out)
    p['qkv_w'], _ = _init_conv(ks[11], 1, c_out, 3 * c_hid, bias=False)
    p['ao_w'], p['ao_b'] = _init_conv(ks[12], 1, c_hid, c_out)
    p['ao_g'], p['ao_bt'] = _init_gn(ks[13], c_out)
    p['u_w'], p['u_b'] = _init_conv(ks[14], 1, c_out, c_in)
    return p


# ----------------------------------------------------------------------------
# DecBlock forward (NHWC internally)
# ----------------------------------------------------------------------------
def res_conv_block(x, params, pre, groups):
    """x: (B, H, W, cin) -> (B, n, co) flattened."""
    B, H, W, _ = x.shape
    y1, res = ws_conv_block_a(
        x,
        weight_standardize(params[pre + '_b1_w']), params[pre + '_b1_b'],
        params[pre + '_b1_g'], params[pre + '_b1_bt'],
        params[pre + '_res_w'], params[pre + '_res_b'], groups=groups)
    return ws_conv_block_b(
        y1, res,
        weight_standardize(params[pre + '_b2_w']), params[pre + '_b2_b'],
        params[pre + '_b2_g'], params[pre + '_b2_bt'],
        H=H, W=W, groups=groups)


def dec_block_forward(x, skips, params, *, groups=8, heads=4, c_head=32):
    """x: (B, H, W, c_in) NHWC; skips popped from the back like PyTorch."""
    skips = list(skips)
    B, H, W, _ = x.shape
    x = res_conv_block(jnp.concatenate([x, skips.pop()], axis=-1),
                       params, 'c1', groups)                       # (B, n, co)
    co = x.shape[-1]
    x = res_conv_block(jnp.concatenate([x.reshape(B, H, W, co), skips.pop()],
                                       axis=-1), params, 'c2', groups)
    # Residual(PreNorm(LinearAttention)) with the Up 1x1 conv fused in: a 1x1
    # conv exactly commutes with nearest 2x upsampling, so the conv runs on
    # HxW and only (B, n, c_in) leaves the kernel.
    x = attn_up_residual_block(x, params, heads=heads, c_head=c_head)  # (B,n,ci)
    c_up = x.shape[-1]
    # Nearest 2x upsample: single broadcast + free reshape in XLA.
    x = x.reshape(B, H, 1, W, 1, c_up)
    x = jnp.broadcast_to(x, (B, H, 2, W, 2, c_up)).reshape(B, 2 * H, 2 * W, c_up)
    return x


# ----------------------------------------------------------------------------
if __name__ == "__main__":
    B, C_IN, C_OUT, H, W = 2, 8, 16, 8, 8
    key = jax.random.PRNGKey(0)
    kx, kh0, kh1, kp = jax.random.split(key, 4)

    # PyTorch-style NCHW inputs.
    x_nchw = jax.random.normal(kx, (B, C_IN, H, W), jnp.float32)
    h0_nchw = jax.random.normal(kh0, (B, C_IN, H, W), jnp.float32)   # popped second
    h1_nchw = jax.random.normal(kh1, (B, C_OUT, H, W), jnp.float32)  # popped first
    params = init_dec_block(kp, C_IN, C_OUT)

    to_nhwc = lambda t: jnp.transpose(t, (0, 2, 3, 1))
    fwd = jax.jit(functools.partial(dec_block_forward,
                                    groups=8, heads=4, c_head=32))
    out_nhwc = fwd(to_nhwc(x_nchw), [to_nhwc(h0_nchw), to_nhwc(h1_nchw)], params)
    out = jnp.transpose(out_nhwc, (0, 3, 1, 2))                      # back to NCHW
    jax.block_until_ready(out)
    assert out.shape == (B, C_IN, 2 * H, 2 * W), out.shape
    print("KERNEL_OK")
</pallas_src>

<mosaic_0001>
module attributes {stable_mosaic.version = 11 : i64} {
  func.func @_ws_conv_gn_silu_res_kernel(%arg0: i32, %arg1: memref<1x80x72xf32, #tpu.memory_space<vmem>>, %arg2: memref<216x16xf32, #tpu.memory_space<vmem>>, %arg3: memref<72x16xf32, #tpu.memory_space<vmem>>, %arg4: memref<1x16xf32, #tpu.memory_space<vmem>>, %arg5: memref<1x16xf32, #tpu.memory_space<vmem>>, %arg6: memref<1x16xf32, #tpu.memory_space<vmem>>, %arg7: memref<1x16xf32, #tpu.memory_space<vmem>>, %arg8: memref<16x8xf32, #tpu.memory_space<vmem>>, %arg9: memref<8x16xf32, #tpu.memory_space<vmem>>, %arg10: memref<1x64x16xf32, #tpu.memory_space<vmem>>, %arg11: memref<1x64x16xf32, #tpu.memory_space<vmem>>) attributes {dimension_semantics = [#tpu.dimension_semantics<parallel>], iteration_bounds = array<i64: 2>, scalar_prefetch = 0 : i64, scratch_operands = 0 : i64, tpu.core_type = #tpu.core_type<tc>, window_params = [{transform_indices = @transform_0, window_bounds = array<i64: 1, 80, 72>}, {pipeline_mode = #tpu.pipeline_mode<synchronous>, transform_indices = @transform_1, window_bounds = array<i64: 216, 16>}, {pipeline_mode = #tpu.pipeline_mode<synchronous>, transform_indices = @transform_2, window_bounds = array<i64: 72, 16>}, {pipeline_mode = #tpu.pipeline_mode<synchronous>, transform_indices = @transform_3, window_bounds = array<i64: 1, 16>}, {pipeline_mode = #tpu.pipeline_mode<synchronous>, transform_indices = @transform_4, window_bounds = array<i64: 1, 16>}, {pipeline_mode = #tpu.pipeline_mode<synchronous>, transform_indices = @transform_5, window_bounds = array<i64: 1, 16>}, {pipeline_mode = #tpu.pipeline_mode<synchronous>, transform_indices = @transform_6, window_bounds = array<i64: 1, 16>}, {pipeline_mode = #tpu.pipeline_mode<synchronous>, transform_indices = @transform_7, window_bounds = array<i64: 16, 8>}, {pipeline_mode = #tpu.pipeline_mode<synchronous>, transform_indices = @transform_8, window_bounds = array<i64: 8, 16>}, {transform_indices = @transform_9, window_bounds = array<i64: 1, 64, 16>}, {transform_indices = @transform_10, window_bounds = array<i64: 1, 64, 16>}]} {
    %cst = arith.constant 0.000000e+00 : f32
    %0 = vector.broadcast %cst : f32 to vector<64x16xf32>
    %c0 = arith.constant 0 : index
    %c0_0 = arith.constant 0 : index
    %c0_1 = arith.constant 0 : index
    %1 = vector.load %arg1[%c0, %c0_0, %c0_1] : memref<1x80x72xf32, #tpu.memory_space<vmem>>, vector<1x64x72xf32>
    %2 = vector.shape_cast %1 : vector<1x64x72xf32> to vector<64x72xf32>
    %c0_2 = arith.constant 0 : index
    %c0_3 = arith.constant 0 : index
    %3 = vector.load %arg2[%c0_2, %c0_3] : memref<216x16xf32, #tpu.memory_space<vmem>>, vector<72x16xf32>
    %cst_4 = arith.constant dense<0.000000e+00> : vector<64x16xf32>
    %4 = tpu.matmul %2, %3, %cst_4 {dimension_numbers = #tpu.dot_dimension_numbers<[1], [0], [0], [1], [0, 0, 1, 1], [], []>} : vector<64x72xf32>, vector<72x16xf32>, vector<64x16xf32> -> vector<64x16xf32>
    %5 = arith.addf %0, %4 : vector<64x16xf32>
    %c0_5 = arith.constant 0 : index
    %c8 = arith.constant 8 : index
    %c0_6 = arith.constant 0 : index
    %6 = vector.load %arg1[%c0_5, %c8, %c0_6] : memref<1x80x72xf32, #tpu.memory_space<vmem>>, vector<1x64x72xf32>
    %7 = vector.shape_cast %6 : vector<1x64x72xf32> to vector<64x72xf32>
    %c72 = arith.constant 72 : index
    %c0_7 = arith.constant 0 : index
    %8 = vector.load %arg2[%c72, %c0_7] : memref<216x16xf32, #tpu.memory_space<vmem>>, vector<72x16xf32>
    %cst_8 = arith.constant dense<0.000000e+00> : vector<64x16xf32>
    %9 = tpu.matmul %7, %8, %cst_8 {dimension_numbers = #tpu.dot_dimension_numbers<[1], [0], [0], [1], [0, 0, 1, 1], [], []>} : vector<64x72xf32>, vector<72x16xf32>, vector<64x16xf32> -> vector<64x16xf32>
    %10 = arith.addf %5, %9 : vector<64x16xf32>
    %c0_9 = arith.constant 0 : index
    %c0_10 = arith.constant 0 : index
    %11 = vector.load %arg3[%c0_9, %c0_10] : memref<72x16xf32, #tpu.memory_space<vmem>>, vector<72x16xf32>
    %cst_11 = arith.constant dense<0.000000e+00> : vector<64x16xf32>
    %12 = tpu.matmul %7, %11, %cst_11 {dimension_numbers = #tpu.dot_dimension_numbers<[1], [0], [0], [1], [0, 0, 1, 1], [], []>} : vector<64x72xf32>, vector<72x16xf32>, vector<64x16xf32> -> vector<64x16xf32>
    %c0_12 = arith.constant 0 : index
    %c0_13 = arith.constant 0 : index
    %13 = vector.load %arg5[%c0_12, %c0_13] : memref<1x16xf32, #tpu.memory_space<vmem>>, vector<1x16xf32>
    %14 = vector.broadcast %13 : vector<1x16xf32> to vector<64x16xf32>
    %15 = arith.addf %12, %14 : vector<64x16xf32>
    %c0_14 = arith.constant 0 : index
    %c16 = arith.constant 16 : index
    %c0_15 = arith.constant 0 : index
    %16 = vector.load %arg1[%c0_14, %c16, %c0_15] : memref<1x80x72xf32, #tpu.memory_space<vmem>>, vector<1x64x72xf32>
    %17 = vector.shape_cast %16 : vector<1x64x72xf32> to vector<64x72xf32>
    %c144 = arith.constant 144 : index
    %c0_16 = arith.constant 0 : index
    %18 = vector.load %arg2[%c144, %c0_16] : memref<216x16xf32, #tpu.memory_space<vmem>>, vector<72x16xf32>
    %cst_17 = arith.constant dense<0.000000e+00> : vector<64x16xf32>
    %19 = tpu.matmul %17, %18, %cst_17 {dimension_numbers = #tpu.dot_dimension_numbers<[1], [0], [0], [1], [0, 0, 1, 1], [], []>} : vector<64x72xf32>, vector<72x16xf32>, vector<64x16xf32> -> vector<64x16xf32>
    %20 = arith.addf %10, %19 : vector<64x16xf32>
    %c0_18 = arith.constant 0 : index
    %c0_19 = arith.constant 0 : index
    %21 = vector.load %arg4[%c0_18, %c0_19] : memref<1x16xf32, #tpu.memory_space<vmem>>, vector<1x16xf32>
    %22 = vector.broadcast %21 : vector<1x16xf32> to vector<64x16xf32>
    %23 = arith.addf %20, %22 : vector<64x16xf32>
    %cst_20 = arith.constant dense<0.000000e+00> : vector<16xf32>
    %24 = vector.multi_reduction <add>, %23, %cst_20 [0] : vector<64x16xf32> to vector<16xf32>
    %25 = vector.shape_cast %24 : vector<16xf32> to vector<1x16xf32>
    %c0_21 = arith.constant 0 : index
    %c0_22 = arith.constant 0 : index
    %26 = vector.load %arg8[%c0_21, %c0_22] : memref<16x8xf32, #tpu.memory_space<vmem>>, vector<16x8xf32>
    %cst_23 = arith.constant dense<0.000000e+00> : vector<1x8xf32>
    %27 = tpu.matmul %25, %26, %cst_23 {dimension_numbers = #tpu.dot_dimension_numbers<[1], [0], [0], [1], [0, 0, 1, 1], [], []>} : vector<1x16xf32>, vector<16x8xf32>, vector<1x8xf32> -> vector<1x8xf32>
    %28 = arith.mulf %23, %23 : vector<64x16xf32>
    %cst_24 = arith.constant dense<0.000000e+00> : vector<16xf32>
    %29 = vector.multi_reduction <add>, %28, %cst_24 [0] : vector<64x16xf32> to vector<16xf32>
    %30 = vector.shape_cast %29 : vector<16xf32> to vector<1x16xf32>
    %c0_25 = arith.constant 0 : index
    %c0_26 = arith.constant 0 : index
    %31 = vector.load %arg8[%c0_25, %c0_26] : memref<16x8xf32, #tpu.memory_space<vmem>>, vector<16x8xf32>
    %cst_27 = arith.constant dense<0.000000e+00> : vector<1x8xf32>
    %32 = tpu.matmul %30, %31, %cst_27 {dimension_numbers = #tpu.dot_dimension_numbers<[1], [0], [0], [1], [0, 0, 1, 1], [], []>} : vector<1x16xf32>, vector<16x8xf32>, vector<1x8xf32> -> vector<1x8xf32>
    %cst_28 = arith.constant 1.280000e+02 : f32
    %33 = vector.broadcast %cst_28 : f32 to vector<1x8xf32>
    %34 = arith.divf %27, %33 : vector<1x8xf32>
    %cst_29 = arith.constant 1.280000e+02 : f32
    %35 = vector.broadcast %cst_29 : f32 to vector<1x8xf32>
    %36 = arith.divf %32, %35 : vector<1x8xf32>
    %37 = arith.mulf %34, %34 : vector<1x8xf32>
    %38 = arith.subf %36, %37 : vector<1x8xf32>
    %cst_30 = arith.constant 9.99999974E-6 : f32
    %39 = vector.broadcast %cst_30 : f32 to vector<1x8xf32>
    %40 = arith.addf %38, %39 : vector<1x8xf32>
    %41 = math.rsqrt %40 : vector<1x8xf32>
    %c0_31 = arith.constant 0 : index
    %c0_32 = arith.constant 0 : index
    %42 = vector.load %arg9[%c0_31, %c0_32] : memref<8x16xf32, #tpu.memory_space<vmem>>, vector<8x16xf32>
    %cst_33 = arith.constant dense<0.000000e+00> : vector<1x16xf32>
    %43 = tpu.matmul %34, %42, %cst_33 {dimension_numbers = #tpu.dot_dimension_numbers<[1], [0], [0], [1], [0, 0, 1, 1], [], []>} : vector<1x8xf32>, vector<8x16xf32>, vector<1x16xf32> -> vector<1x16xf32>
    %c0_34 = arith.constant 0 : index
    %c0_35 = arith.constant 0 : index
    %44 = vector.load %arg9[%c0_34, %c0_35] : memref<8x16xf32, #tpu.memory_space<vmem>>, vector<8x16xf32>
    %cst_36 = arith.constant dense<0.000000e+00> : vector<1x16xf32>
    %45 = tpu.matmul %41, %44, %cst_36 {dimension_numbers = #tpu.dot_dimension_numbers<[1], [0], [0], [1], [0, 0, 1, 1], [], []>} : vector<1x8xf32>, vector<8x16xf32>, vector<1x16xf32> -> vector<1x16xf32>
    %46 = vector.broadcast %43 : vector<1x16xf32> to vector<64x16xf32>
    %47 = arith.subf %23, %46 : vector<64x16xf32>
    %48 = vector.broadcast %45 : vector<1x16xf32> to vector<64x16xf32>
    %49 = arith.mulf %47, %48 : vector<64x16xf32>
    %c0_37 = arith.constant 0 : index
    %c0_38 = arith.constant 0 : index
    %50 = vector.load %arg6[%c0_37, %c0_38] : memref<1x16xf32, #tpu.memory_space<vmem>>, vector<1x16xf32>
    %51 = vector.broadcast %50 : vector<1x16xf32> to vector<64x16xf32>
    %52 = arith.mulf %49, %51 : vector<64x16xf32>
    %c0_39 = arith.constant 0 : index
    %c0_40 = arith.constant 0 : index
    %53 = vector.load %arg7[%c0_39, %c0_40] : memref<1x16xf32, #tpu.memory_space<vmem>>, vector<1x16xf32>
    %54 = vector.broadcast %53 : vector<1x16xf32> to vector<64x16xf32>
    %55 = arith.addf %52, %54 : vector<64x16xf32>
    %cst_41 = arith.constant 0.000000e+00 : f32
    %56 = vector.broadcast %cst_41 : f32 to vector<64x16xf32>
    %57 = arith.subf %56, %55 : vector<64x16xf32>
    %58 = math.exp %57 : vector<64x16xf32>
    %cst_42 = arith.constant 1.000000e+00 : f32
    %59 = vector.broadcast %cst_42 : f32 to vector<64x16xf32>
    %60 = arith.addf %59, %58 : vector<64x16xf32>
    %61 = tpu.reciprocal %60 {approx = true} : vector<64x16xf32> -> vector<64x16xf32>
    %62 = arith.mulf %55, %61 : vector<64x16xf32>
    %c0_43 = arith.constant 0 : index
    %c0_44 = arith.constant 0 : index
    %c0_45 = arith.constant 0 : index
    %63 = vector.load %arg10[%c0_43, %c0_44, %c0_45] : memref<1x64x16xf32, #tpu.memory_space<vmem>>, vector<1x64x16xf32>
    %64 = vector.shape_cast %63 : vector<1x64x16xf32> to vector<64x16xf32>
    %65 = vector.shape_cast %62 : vector<64x16xf32> to vector<1x64x16xf32>
    tpu.vector_store %arg10[%c0_43, %c0_44, %c0_45], %65 {strides = array<i32>} : memref<1x64x16xf32, #tpu.memory_space<vmem>>, vector<1x64x16xf32>,
    %c0_46 = arith.constant 0 : index
    %c0_47 = arith.constant 0 : index
    %c0_48 = arith.constant 0 : index
    %66 = vector.load %arg11[%c0_46, %c0_47, %c0_48] : memref<1x64x16xf32, #tpu.memory_space<vmem>>, vector<1x64x16xf32>
    %67 = vector.shape_cast %66 : vector<1x64x16xf32> to vector<64x16xf32>
    %68 = vector.shape_cast %15 : vector<64x16xf32> to vector<1x64x16xf32>
    tpu.vector_store %arg11[%c0_46, %c0_47, %c0_48], %68 {strides = array<i32>} : memref<1x64x16xf32, #tpu.memory_space<vmem>>, vector<1x64x16xf32>,
    return
  }
  func.func @transform_0(%arg0: i32) -> (i32, i32, i32) {
    %c0_i32 = arith.constant 0 : i32
    %c0_i32_0 = arith.constant 0 : i32
    %c0_i32_1 = arith.constant 0 : i32
    return %arg0, %c0_i32, %c0_i32_0 : i32, i32, i32
  }
  func.func @transform_1(%arg0: i32) -> (i32, i32) {
    %c0_i32 = arith.constant 0 : i32
    %c0_i32_0 = arith.constant 0 : i32
    %c0_i32_1 = arith.constant 0 : i32
    return %c0_i32, %c0_i32_0 : i32, i32
  }
  func.func @transform_2(%arg0: i32) -> (i32, i32) {
    %c0_i32 = arith.constant 0 : i32
    %c0_i32_0 = arith.constant 0 : i32
    %c0_i32_1 = arith.constant 0 : i32
    return %c0_i32, %c0_i32_0 : i32, i32
  }
  func.func @transform_3(%arg0: i32) -> (i32, i32) {
    %c0_i32 = arith.constant 0 : i32
    %c0_i32_0 = arith.constant 0 : i32
    %c0_i32_1 = arith.constant 0 : i32
    return %c0_i32, %c0_i32_0 : i32, i32
  }
  func.func @transform_4(%arg0: i32) -> (i32, i32) {
    %c0_i32 = arith.constant 0 : i32
    %c0_i32_0 = arith.constant 0 : i32
    %c0_i32_1 = arith.constant 0 : i32
    return %c0_i32, %c0_i32_0 : i32, i32
  }
  func.func @transform_5(%arg0: i32) -> (i32, i32) {
    %c0_i32 = arith.constant 0 : i32
    %c0_i32_0 = arith.constant 0 : i32
    %c0_i32_1 = arith.constant 0 : i32
    return %c0_i32, %c0_i32_0 : i32, i32
  }
  func.func @transform_6(%arg0: i32) -> (i32, i32) {
    %c0_i32 = arith.constant 0 : i32
    %c0_i32_0 = arith.constant 0 : i32
    %c0_i32_1 = arith.constant 0 : i32
    return %c0_i32, %c0_i32_0 : i32, i32
  }
  func.func @transform_7(%arg0: i32) -> (i32, i32) {
    %c0_i32 = arith.constant 0 : i32
    %c0_i32_0 = arith.constant 0 : i32
    %c0_i32_1 = arith.constant 0 : i32
    return %c0_i32, %c0_i32_0 : i32, i32
  }
  func.func @transform_8(%arg0: i32) -> (i32, i32) {
    %c0_i32 = arith.constant 0 : i32
    %c0_i32_0 = arith.constant 0 : i32
    %c0_i32_1 = arith.constant 0 : i32
    return %c0_i32, %c0_i32_0 : i32, i32
  }
  func.func @transform_9(%arg0: i32) -> (i32, i32, i32) {
    %c0_i32 = arith.constant 0 : i32
    %c0_i32_0 = arith.constant 0 : i32
    %c0_i32_1 = arith.constant 0 : i32
    return %arg0, %c0_i32, %c0_i32_0 : i32, i32, i32
  }
  func.func @transform_10(%arg0: i32) -> (i32, i32, i32) {
    %c0_i32 = arith.constant 0 : i32
    %c0_i32_0 = arith.constant 0 : i32
    %c0_i32_1 = arith.constant 0 : i32
    return %arg0, %c0_i32, %c0_i32_0 : i32, i32, i32
  }
}

module attributes {stable_mosaic.version = 11 : i64} {
  func.func @_ws_conv_gn_silu_add_kernel(%arg0: i32, %arg1: memref<1x80x48xf32, #tpu.memory_space<vmem>>, %arg2: memref<1x64x16xf32, #tpu.memory_space<vmem>>, %arg3: memref<144x16xf32, #tpu.memory_space<vmem>>, %arg4: memref<1x16xf32, #tpu.memory_space<vmem>>, %arg5: memref<1x16xf32, #tpu.memory_space<vmem>>, %arg6: memref<1x16xf32, #tpu.memory_space<vmem>>, %arg7: memref<16x8xf32, #tpu.memory_space<vmem>>, %arg8: memref<8x16xf32, #tpu.memory_space<vmem>>, %arg9: memref<1x64x16xf32, #tpu.memory_space<vmem>>) attributes {dimension_semantics = [#tpu.dimension_semantics<parallel>], iteration_bounds = array<i64: 2>, scalar_prefetch = 0 : i64, scratch_operands = 0 : i64, tpu.core_type = #tpu.core_type<tc>, window_params = [{transform_indices = @transform_0, window_bounds = array<i64: 1, 80, 48>}, {transform_indices = @transform_1, window_bounds = array<i64: 1, 64, 16>}, {pipeline_mode = #tpu.pipeline_mode<synchronous>, transform_indices = @transform_2, window_bounds = array<i64: 144, 16>}, {pipeline_mode = #tpu.pipeline_mode<synchronous>, transform_indices = @transform_3, window_bounds = array<i64: 1, 16>}, {pipeline_mode = #tpu.pipeline_mode<synchronous>, transform_indices = @transform_4, window_bounds = array<i64: 1, 16>}, {pipeline_mode = #tpu.pipeline_mode<synchronous>, transform_indices = @transform_5, window_bounds = array<i64: 1, 16>}, {pipeline_mode = #tpu.pipeline_mode<synchronous>, transform_indices = @transform_6, window_bounds = array<i64: 16, 8>}, {pipeline_mode = #tpu.pipeline_mode<synchronous>, transform_indices = @transform_7, window_bounds = array<i64: 8, 16>}, {transform_indices = @transform_8, window_bounds = array<i64: 1, 64, 16>}]} {
    %cst = arith.constant 0.000000e+00 : f32
    %0 = vector.broadcast %cst : f32 to vector<64x16xf32>
    %c0 = arith.constant 0 : index
    %c0_0 = arith.constant 0 : index
    %c0_1 = arith.constant 0 : index
    %1 = vector.load %arg1[%c0, %c0_0, %c0_1] : memref<1x80x48xf32, #tpu.memory_space<vmem>>, vector<1x64x48xf32>
    %2 = vector.shape_cast %1 : vector<1x64x48xf32> to vector<64x48xf32>
    %c0_2 = arith.constant 0 : index
    %c0_3 = arith.constant 0 : index
    %3 = vector.load %arg3[%c0_2, %c0_3] : memref<144x16xf32, #tpu.memory_space<vmem>>, vector<48x16xf32>
    %cst_4 = arith.constant dense<0.000000e+00> : vector<64x16xf32>
    %4 = tpu.matmul %2, %3, %cst_4 {dimension_numbers = #tpu.dot_dimension_numbers<[1], [0], [0], [1], [0, 0, 1, 1], [], []>} : vector<64x48xf32>, vector<48x16xf32>, vector<64x16xf32> -> vector<64x16xf32>
    %5 = arith.addf %0, %4 : vector<64x16xf32>
    %c0_5 = arith.constant 0 : index
    %c8 = arith.constant 8 : index
    %c0_6 = arith.constant 0 : index
    %6 = vector.load %arg1[%c0_5, %c8, %c0_6] : memref<1x80x48xf32, #tpu.memory_space<vmem>>, vector<1x64x48xf32>
    %7 = vector.shape_cast %6 : vector<1x64x48xf32> to vector<64x48xf32>
    %c48 = arith.constant 48 : index
    %c0_7 = arith.constant 0 : index
    %8 = vector.load %arg3[%c48, %c0_7] : memref<144x16xf32, #tpu.memory_space<vmem>>, vector<48x16xf32>
    %cst_8 = arith.constant dense<0.000000e+00> : vector<64x16xf32>
    %9 = tpu.matmul %7, %8, %cst_8 {dimension_numbers = #tpu.dot_dimension_numbers<[1], [0], [0], [1], [0, 0, 1, 1], [], []>} : vector<64x48xf32>, vector<48x16xf32>, vector<64x16xf32> -> vector<64x16xf32>
    %10 = arith.addf %5, %9 : vector<64x16xf32>
    %c0_9 = arith.constant 0 : index
    %c16 = arith.constant 16 : index
    %c0_10 = arith.constant 0 : index
    %11 = vector.load %arg1[%c0_9, %c16, %c0_10] : memref<1x80x48xf32, #tpu.memory_space<vmem>>, vector<1x64x48xf32>
    %12 = vector.shape_cast %11 : vector<1x64x48xf32> to vector<64x48xf32>
    %c96 = arith.constant 96 : index
    %c0_11 = arith.constant 0 : index
    %13 = vector.load %arg3[%c96, %c0_11] : memref<144x16xf32, #tpu.memory_space<vmem>>, vector<48x16xf32>
    %cst_12 = arith.constant dense<0.000000e+00> : vector<64x16xf32>
    %14 = tpu.matmul %12, %13, %cst_12 {dimension_numbers = #tpu.dot_dimension_numbers<[1], [0], [0], [1], [0, 0, 1, 1], [], []>} : vector<64x48xf32>, vector<48x16xf32>, vector<64x16xf32> -> vector<64x16xf32>
    %15 = arith.addf %10, %14 : vector<64x16xf32>
    %c0_13 = arith.constant 0 : index
    %c0_14 = arith.constant 0 : index
    %16 = vector.load %arg4[%c0_13, %c0_14] : memref<1x16xf32, #tpu.memory_space<vmem>>, vector<1x16xf32>
    %17 = vector.broadcast %16 : vector<1x16xf32> to vector<64x16xf32>
    %18 = arith.addf %15, %17 : vector<64x16xf32>
    %cst_15 = arith.constant dense<0.000000e+00> : vector<16xf32>
    %19 = vector.multi_reduction <add>, %18, %cst_15 [0] : vector<64x16xf32> to vector<16xf32>
    %20 = vector.shape_cast %19 : vector<16xf32> to vector<1x16xf32>
    %c0_16 = arith.constant 0 : index
    %c0_17 = arith.constant 0 : index
    %21 = vector.load %arg7[%c0_16, %c0_17] : memref<16x8xf32, #tpu.memory_space<vmem>>, vector<16x8xf32>
    %cst_18 = arith.constant dense<0.000000e+00> : vector<1x8xf32>
    %22 = tpu.matmul %20, %21, %cst_18 {dimension_numbers = #tpu.dot_dimension_numbers<[1], [0], [0], [1], [0, 0, 1, 1], [], []>} : vector<1x16xf32>, vector<16x8xf32>, vector<1x8xf32> -> vector<1x8xf32>
    %23 = arith.mulf %18, %18 : vector<64x16xf32>
    %cst_19 = arith.constant dense<0.000000e+00> : vector<16xf32>
    %24 = vector.multi_reduction <add>, %23, %cst_19 [0] : vector<64x16xf32> to vector<16xf32>
    %25 = vector.shape_cast %24 : vector<16xf32> to vector<1x16xf32>
    %c0_20 = arith.constant 0 : index
    %c0_21 = arith.constant 0 : index
    %26 = vector.load %arg7[%c0_20, %c0_21] : memref<16x8xf32, #tpu.memory_space<vmem>>, vector<16x8xf32>
    %cst_22 = arith.constant dense<0.000000e+00> : vector<1x8xf32>
    %27 = tpu.matmul %25, %26, %cst_22 {dimension_numbers = #tpu.dot_dimension_numbers<[1], [0], [0], [1], [0, 0, 1, 1], [], []>} : vector<1x16xf32>, vector<16x8xf32>, vector<1x8xf32> -> vector<1x8xf32>
    %cst_23 = arith.constant 1.280000e+02 : f32
    %28 = vector.broadcast %cst_23 : f32 to vector<1x8xf32>
    %29 = arith.divf %22, %28 : vector<1x8xf32>
    %cst_24 = arith.constant 1.280000e+02 : f32
    %30 = vector.broadcast %cst_24 : f32 to vector<1x8xf32>
    %31 = arith.divf %27, %30 : vector<1x8xf32>
    %32 = arith.mulf %29, %29 : vector<1x8xf32>
    %33 = arith.subf %31, %32 : vector<1x8xf32>
    %cst_25 = arith.constant 9.99999974E-6 : f32
    %34 = vector.broadcast %cst_25 : f32 to vector<1x8xf32>
    %35 = arith.addf %33, %34 : vector<1x8xf32>
    %36 = math.rsqrt %35 : vector<1x8xf32>
    %c0_26 = arith.constant 0 : index
    %c0_27 = arith.constant 0 : index
    %37 = vector.load %arg8[%c0_26, %c0_27] : memref<8x16xf32, #tpu.memory_space<vmem>>, vector<8x16xf32>
    %cst_28 = arith.constant dense<0.000000e+00> : vector<1x16xf32>
    %38 = tpu.matmul %29, %37, %cst_28 {dimension_numbers = #tpu.dot_dimension_numbers<[1], [0], [0], [1], [0, 0, 1, 1], [], []>} : vector<1x8xf32>, vector<8x16xf32>, vector<1x16xf32> -> vector<1x16xf32>
    %c0_29 = arith.constant 0 : index
    %c0_30 = arith.constant 0 : index
    %39 = vector.load %arg8[%c0_29, %c0_30] : memref<8x16xf32, #tpu.memory_space<vmem>>, vector<8x16xf32>
    %cst_31 = arith.constant dense<0.000000e+00> : vector<1x16xf32>
    %40 = tpu.matmul %36, %39, %cst_31 {dimension_numbers = #tpu.dot_dimension_numbers<[1], [0], [0], [1], [0, 0, 1, 1], [], []>} : vector<1x8xf32>, vector<8x16xf32>, vector<1x16xf32> -> vector<1x16xf32>
    %41 = vector.broadcast %38 : vector<1x16xf32> to vector<64x16xf32>
    %42 = arith.subf %18, %41 : vector<64x16xf32>
    %43 = vector.broadcast %40 : vector<1x16xf32> to vector<64x16xf32>
    %44 = arith.mulf %42, %43 : vector<64x16xf32>
    %c0_32 = arith.constant 0 : index
    %c0_33 = arith.constant 0 : index
    %45 = vector.load %arg5[%c0_32, %c0_33] : memref<1x16xf32, #tpu.memory_space<vmem>>, vector<1x16xf32>
    %46 = vector.broadcast %45 : vector<1x16xf32> to vector<64x16xf32>
    %47 = arith.mulf %44, %46 : vector<64x16xf32>
    %c0_34 = arith.constant 0 : index
    %c0_35 = arith.constant 0 : index
    %48 = vector.load %arg6[%c0_34, %c0_35] : memref<1x16xf32, #tpu.memory_space<vmem>>, vector<1x16xf32>
    %49 = vector.broadcast %48 : vector<1x16xf32> to vector<64x16xf32>
    %50 = arith.addf %47, %49 : vector<64x16xf32>
    %cst_36 = arith.constant 0.000000e+00 : f32
    %51 = vector.broadcast %cst_36 : f32 to vector<64x16xf32>
    %52 = arith.subf %51, %50 : vector<64x16xf32>
    %53 = math.exp %52 : vector<64x16xf32>
    %cst_37 = arith.constant 1.000000e+00 : f32
    %54 = vector.broadcast %cst_37 : f32 to vector<64x16xf32>
    %55 = arith.addf %54, %53 : vector<64x16xf32>
    %56 = tpu.reciprocal %55 {approx = true} : vector<64x16xf32> -> vector<64x16xf32>
    %57 = arith.mulf %50, %56 : vector<64x16xf32>
    %c0_38 = arith.constant 0 : index
    %c0_39 = arith.constant 0 : index
    %c0_40 = arith.constant 0 : index
    %58 = vector.load %arg2[%c0_38, %c0_39, %c0_40] : memref<1x64x16xf32, #tpu.memory_space<vmem>>, vector<1x64x16xf32>
    %59 = vector.shape_cast %58 : vector<1x64x16xf32> to vector<64x16xf32>
    %60 = arith.addf %57, %59 : vector<64x16xf32>
    %c0_41 = arith.constant 0 : index
    %c0_42 = arith.constant 0 : index
    %c0_43 = arith.constant 0 : index
    %61 = vector.load %arg9[%c0_41, %c0_42, %c0_43] : memref<1x64x16xf32, #tpu.memory_space<vmem>>, vector<1x64x16xf32>
    %62 = vector.shape_cast %61 : vector<1x64x16xf32> to vector<64x16xf32>
    %63 = vector.shape_cast %60 : vector<64x16xf32> to vector<1x64x16xf32>
    tpu.vector_store %arg9[%c0_41, %c0_42, %c0_43], %63 {strides = array<i32>} : memref<1x64x16xf32, #tpu.memory_space<vmem>>, vector<1x64x16xf32>,
    return
  }
  func.func @transform_0(%arg0: i32) -> (i32, i32, i32) {
    %c0_i32 = arith.constant 0 : i32
    %c0_i32_0 = arith.constant 0 : i32
    %c0_i32_1 = arith.constant 0 : i32
    return %arg0, %c0_i32, %c0_i32_0 : i32, i32, i32
  }
  func.func @transform_1(%arg0: i32) -> (i32, i32, i32) {
    %c0_i32 = arith.constant 0 : i32
    %c0_i32_0 = arith.constant 0 : i32
    %c0_i32_1 = arith.constant 0 : i32
    return %arg0, %c0_i32, %c0_i32_0 : i32, i32, i32
  }
  func.func @transform_2(%arg0: i32) -> (i32, i32) {
    %c0_i32 = arith.constant 0 : i32
    %c0_i32_0 = arith.constant 0 : i32
    %c0_i32_1 = arith.constant 0 : i32
    return %c0_i32, %c0_i32_0 : i32, i32
  }
  func.func @transform_3(%arg0: i32) -> (i32, i32) {
    %c0_i32 = arith.constant 0 : i32
    %c0_i32_0 = arith.constant 0 : i32
    %c0_i32_1 = arith.constant 0 : i32
    return %c0_i32, %c0_i32_0 : i32, i32
  }
  func.func @transform_4(%arg0: i32) -> (i32, i32) {
    %c0_i32 = arith.constant 0 : i32
    %c0_i32_0 = arith.constant 0 : i32
    %c0_i32_1 = arith.constant 0 : i32
    return %c0_i32, %c0_i32_0 : i32, i32
  }
  func.func @transform_5(%arg0: i32) -> (i32, i32) {
    %c0_i32 = arith.constant 0 : i32
    %c0_i32_0 = arith.constant 0 : i32
    %c0_i32_1 = arith.constant 0 : i32
    return %c0_i32, %c0_i32_0 : i32, i32
  }
  func.func @transform_6(%arg0: i32) -> (i32, i32) {
    %c0_i32 = arith.constant 0 : i32
    %c0_i32_0 = arith.constant 0 : i32
    %c0_i32_1 = arith.constant 0 : i32
    return %c0_i32, %c0_i32_0 : i32, i32
  }
  func.func @transform_7(%arg0: i32) -> (i32, i32) {
    %c0_i32 = arith.constant 0 : i32
    %c0_i32_0 = arith.constant 0 : i32
    %c0_i32_1 = arith.constant 0 : i32
    return %c0_i32, %c0_i32_0 : i32, i32
  }
  func.func @transform_8(%arg0: i32) -> (i32, i32, i32) {
    %c0_i32 = arith.constant 0 : i32
    %c0_i32_0 = arith.constant 0 : i32
    %c0_i32_1 = arith.constant 0 : i32
    return %arg0, %c0_i32, %c0_i32_0 : i32, i32, i32
  }
}

module attributes {stable_mosaic.version = 11 : i64} {
  func.func @_attn_up_residual_kernel(%arg0: i32, %arg1: memref<1x64x16xf32, #tpu.memory_space<vmem>>, %arg2: memref<1x16xf32, #tpu.memory_space<vmem>>, %arg3: memref<1x16xf32, #tpu.memory_space<vmem>>, %arg4: memref<4x16x32xf32, #tpu.memory_space<vmem>>, %arg5: memref<4x16x32xf32, #tpu.memory_space<vmem>>, %arg6: memref<4x16x32xf32, #tpu.memory_space<vmem>>, %arg7: memref<4x32x16xf32, #tpu.memory_space<vmem>>, %arg8: memref<1x16xf32, #tpu.memory_space<vmem>>, %arg9: memref<1x16xf32, #tpu.memory_space<vmem>>, %arg10: memref<1x16xf32, #tpu.memory_space<vmem>>, %arg11: memref<16x8xf32, #tpu.memory_space<vmem>>, %arg12: memref<1x8xf32, #tpu.memory_space<vmem>>, %arg13: memref<1x64x8xf32, #tpu.memory_space<vmem>>) attributes {dimension_semantics = [#tpu.dimension_semantics<parallel>], iteration_bounds = array<i64: 2>, scalar_prefetch = 0 : i64, scratch_operands = 0 : i64, tpu.core_type = #tpu.core_type<tc>, window_params = [{transform_indices = @transform_0, window_bounds = array<i64: 1, 64, 16>}, {pipeline_mode = #tpu.pipeline_mode<synchronous>, transform_indices = @transform_1, window_bounds = array<i64: 1, 16>}, {pipeline_mode = #tpu.pipeline_mode<synchronous>, transform_indices = @transform_2, window_bounds = array<i64: 1, 16>}, {pipeline_mode = #tpu.pipeline_mode<synchronous>, transform_indices = @transform_3, window_bounds = array<i64: 4, 16, 32>}, {pipeline_mode = #tpu.pipeline_mode<synchronous>, transform_indices = @transform_4, window_bounds = array<i64: 4, 16, 32>}, {pipeline_mode = #tpu.pipeline_mode<synchronous>, transform_indices = @transform_5, window_bounds = array<i64: 4, 16, 32>}, {pipeline_mode = #tpu.pipeline_mode<synchronous>, transform_indices = @transform_6, window_bounds = array<i64: 4, 32, 16>}, {pipeline_mode = #tpu.pipeline_mode<synchronous>, transform_indices = @transform_7, window_bounds = array<i64: 1, 16>}, {pipeline_mode = #tpu.pipeline_mode<synchronous>, transform_indices = @transform_8, window_bounds = array<i64: 1, 16>}, {pipeline_mode = #tpu.pipeline_mode<synchronous>, transform_indices = @transform_9, window_bounds = array<i64: 1, 16>}, {pipeline_mode = #tpu.pipeline_mode<synchronous>, transform_indices = @transform_10, window_bounds = array<i64: 16, 8>}, {pipeline_mode = #tpu.pipeline_mode<synchronous>, transform_indices = @transform_11, window_bounds = array<i64: 1, 8>}, {transform_indices = @transform_12, window_bounds = array<i64: 1, 64, 8>}]} {
    %c0 = arith.constant 0 : index
    %c0_0 = arith.constant 0 : index
    %c0_1 = arith.constant 0 : index
    %0 = vector.load %arg1[%c0, %c0_0, %c0_1] : memref<1x64x16xf32, #tpu.memory_space<vmem>>, vector<1x64x16xf32>
    %1 = vector.shape_cast %0 : vector<1x64x16xf32> to vector<64x16xf32>
    %c0_2 = arith.constant 0 : index
    %c0_3 = arith.constant 0 : index
    %2 = vector.load %arg2[%c0_2, %c0_3] : memref<1x16xf32, #tpu.memory_space<vmem>>, vector<1x16xf32>
    %c0_4 = arith.constant 0 : index
    %c0_5 = arith.constant 0 : index
    %3 = vector.load %arg3[%c0_4, %c0_5] : memref<1x16xf32, #tpu.memory_space<vmem>>, vector<1x16xf32>
    %cst = arith.constant dense<0.000000e+00> : vector<16xf32>
    %4 = vector.multi_reduction <add>, %1, %cst [0] : vector<64x16xf32> to vector<16xf32>
    %5 = vector.shape_cast %4 : vector<16xf32> to vector<1x16xf32>
    %cst_6 = arith.constant dense<0.000000e+00> : vector<1xf32>
    %6 = vector.multi_reduction <add>, %5, %cst_6 [1] : vector<1x16xf32> to vector<1xf32>
    %7 = vector.shape_cast %6 : vector<1xf32> to vector<1x1xf32>
    %8 = arith.mulf %1, %1 : vector<64x16xf32>
    %cst_7 = arith.constant dense<0.000000e+00> : vector<16xf32>
    %9 = vector.multi_reduction <add>, %8, %cst_7 [0] : vector<64x16xf32> to vector<16xf32>
    %10 = vector.shape_cast %9 : vector<16xf32> to vector<1x16xf32>
    %cst_8 = arith.constant dense<0.000000e+00> : vector<1xf32>
    %11 = vector.multi_reduction <add>, %10, %cst_8 [1] : vector<1x16xf32> to vector<1xf32>
    %12 = vector.shape_cast %11 : vector<1xf32> to vector<1x1xf32>
    %cst_9 = arith.constant 1.024000e+03 : f32
    %13 = vector.broadcast %cst_9 : f32 to vector<1x1xf32>
    %14 = arith.divf %7, %13 : vector<1x1xf32>
    %cst_10 = arith.constant 1.024000e+03 : f32
    %15 = vector.broadcast %cst_10 : f32 to vector<1x1xf32>
    %16 = arith.divf %12, %15 : vector<1x1xf32>
    %17 = arith.mulf %14, %14 : vector<1x1xf32>
    %18 = arith.subf %16, %17 : vector<1x1xf32>
    %19 = vector.broadcast %14 : vector<1x1xf32> to vector<64x16xf32>
    %20 = arith.subf %1, %19 : vector<64x16xf32>
    %cst_11 = arith.constant 9.99999974E-6 : f32
    %21 = vector.broadcast %cst_11 : f32 to vector<1x1xf32>
    %22 = arith.addf %18, %21 : vector<1x1xf32>
    %23 = math.rsqrt %22 : vector<1x1xf32>
    %24 = vector.broadcast %23 : vector<1x1xf32> to vector<64x16xf32>
    %25 = arith.mulf %20, %24 : vector<64x16xf32>
    %26 = vector.broadcast %2 : vector<1x16xf32> to vector<64x16xf32>
    %27 = arith.mulf %25, %26 : vector<64x16xf32>
    %28 = vector.broadcast %3 : vector<1x16xf32> to vector<64x16xf32>
    %29 = arith.addf %27, %28 : vector<64x16xf32>
    %cst_12 = arith.constant 0.000000e+00 : f32
    %30 = vector.broadcast %cst_12 : f32 to vector<64x16xf32>
    %c0_13 = arith.constant 0 : index
    %c0_14 = arith.constant 0 : index
    %c0_15 = arith.constant 0 : index
    %31 = vector.load %arg4[%c0_13, %c0_14, %c0_15] : memref<4x16x32xf32, #tpu.memory_space<vmem>>, vector<1x16x32xf32>
    %32 = vector.shape_cast %31 : vector<1x16x32xf32> to vector<16x32xf32>
    %cst_16 = arith.constant dense<0.000000e+00> : vector<64x32xf32>
    %33 = tpu.matmul %29, %32, %cst_16 {dimension_numbers = #tpu.dot_dimension_numbers<[1], [0], [0], [1], [0, 0, 1, 1], [], []>} : vector<64x16xf32>, vector<16x32xf32>, vector<64x32xf32> -> vector<64x32xf32>
    %c0_17 = arith.constant 0 : index
    %c0_18 = arith.constant 0 : index
    %c0_19 = arith.constant 0 : index
    %34 = vector.load %arg5[%c0_17, %c0_18, %c0_19] : memref<4x16x32xf32, #tpu.memory_space<vmem>>, vector<1x16x32xf32>
    %35 = vector.shape_cast %34 : vector<1x16x32xf32> to vector<16x32xf32>
    %cst_20 = arith.constant dense<0.000000e+00> : vector<64x32xf32>
    %36 = tpu.matmul %29, %35, %cst_20 {dimension_numbers = #tpu.dot_dimension_numbers<[1], [0], [0], [1], [0, 0, 1, 1], [], []>} : vector<64x16xf32>, vector<16x32xf32>, vector<64x32xf32> -> vector<64x32xf32>
    %c0_21 = arith.constant 0 : index
    %c0_22 = arith.constant 0 : index
    %c0_23 = arith.constant 0 : index
    %37 = vector.load %arg6[%c0_21, %c0_22, %c0_23] : memref<4x16x32xf32, #tpu.memory_space<vmem>>, vector<1x16x32xf32>
    %38 = vector.shape_cast %37 : vector<1x16x32xf32> to vector<16x32xf32>
    %cst_24 = arith.constant dense<0.000000e+00> : vector<64x32xf32>
    %39 = tpu.matmul %29, %38, %cst_24 {dimension_numbers = #tpu.dot_dimension_numbers<[1], [0], [0], [1], [0, 0, 1, 1], [], []>} : vector<64x16xf32>, vector<16x32xf32>, vector<64x32xf32> -> vector<64x32xf32>
    %cst_25 = arith.constant dense<0xFF800000> : vector<64xf32>
    %40 = vector.multi_reduction <maximumf>, %33, %cst_25 [1] : vector<64x32xf32> to vector<64xf32>
    %41 = vector.shape_cast %40 : vector<64xf32> to vector<64x1xf32>
    %42 = vector.broadcast %41 : vector<64x1xf32> to vector<64x32xf32>
    %43 = arith.subf %33, %42 : vector<64x32xf32>
    %44 = math.exp %43 : vector<64x32xf32>
    %cst_26 = arith.constant dense<0.000000e+00> : vector<64xf32>
    %45 = vector.multi_reduction <add>, %44, %cst_26 [1] : vector<64x32xf32> to vector<64xf32>
    %46 = vector.shape_cast %45 : vector<64xf32> to vector<64x1xf32>
    %47 = tpu.reciprocal %46 {approx = true} : vector<64x1xf32> -> vector<64x1xf32>
    %48 = vector.broadcast %47 : vector<64x1xf32> to vector<64x32xf32>
    %49 = arith.mulf %44, %48 : vector<64x32xf32>
    %cst_27 = arith.constant 0.176776692 : f32
    %50 = vector.broadcast %cst_27 : f32 to vector<64x32xf32>
    %51 = arith.mulf %49, %50 : vector<64x32xf32>
    %cst_28 = arith.constant dense<0xFF800000> : vector<32xf32>
    %52 = vector.multi_reduction <maximumf>, %36, %cst_28 [0] : vector<64x32xf32> to vector<32xf32>
    %53 = vector.shape_cast %52 : vector<32xf32> to vector<1x32xf32>
    %54 = vector.broadcast %53 : vector<1x32xf32> to vector<64x32xf32>
    %55 = arith.subf %36, %54 : vector<64x32xf32>
    %56 = math.exp %55 : vector<64x32xf32>
    %cst_29 = arith.constant dense<0.000000e+00> : vector<32xf32>
    %57 = vector.multi_reduction <add>, %56, %cst_29 [0] : vector<64x32xf32> to vector<32xf32>
    %58 = vector.shape_cast %57 : vector<32xf32> to vector<1x32xf32>
    %59 = tpu.reciprocal %58 {approx = true} : vector<1x32xf32> -> vector<1x32xf32>
    %60 = vector.broadcast %59 : vector<1x32xf32> to vector<64x32xf32>
    %61 = arith.mulf %56, %60 : vector<64x32xf32>
    %cst_30 = arith.constant dense<0.000000e+00> : vector<32x32xf32>
    %62 = tpu.matmul %61, %39, %cst_30 {dimension_numbers = #tpu.dot_dimension_numbers<[0], [0], [1], [1], [0, 1, 1, 1], [], []>} : vector<64x32xf32>, vector<64x32xf32>, vector<32x32xf32> -> vector<32x32xf32>
    %cst_31 = arith.constant dense<0.000000e+00> : vector<64x32xf32>
    %63 = tpu.matmul %51, %62, %cst_31 {dimension_numbers = #tpu.dot_dimension_numbers<[1], [0], [0], [1], [0, 0, 1, 1], [], []>} : vector<64x32xf32>, vector<32x32xf32>, vector<64x32xf32> -> vector<64x32xf32>
    %c0_32 = arith.constant 0 : index
    %c0_33 = arith.constant 0 : index
    %c0_34 = arith.constant 0 : index
    %64 = vector.load %arg7[%c0_32, %c0_33, %c0_34] : memref<4x32x16xf32, #tpu.memory_space<vmem>>, vector<1x32x16xf32>
    %65 = vector.shape_cast %64 : vector<1x32x16xf32> to vector<32x16xf32>
    %cst_35 = arith.constant dense<0.000000e+00> : vector<64x16xf32>
    %66 = tpu.matmul %63, %65, %cst_35 {dimension_numbers = #tpu.dot_dimension_numbers<[1], [0], [0], [1], [0, 0, 1, 1], [], []>} : vector<64x32xf32>, vector<32x16xf32>, vector<64x16xf32> -> vector<64x16xf32>
    %67 = arith.addf %30, %66 : vector<64x16xf32>
    %c1 = arith.constant 1 : index
    %c0_36 = arith.constant 0 : index
    %c0_37 = arith.constant 0 : index
    %68 = vector.load %arg4[%c1, %c0_36, %c0_37] : memref<4x16x32xf32, #tpu.memory_space<vmem>>, vector<1x16x32xf32>
    %69 = vector.shape_cast %68 : vector<1x16x32xf32> to vector<16x32xf32>
    %cst_38 = arith.constant dense<0.000000e+00> : vector<64x32xf32>
    %70 = tpu.matmul %29, %69, %cst_38 {dimension_numbers = #tpu.dot_dimension_numbers<[1], [0], [0], [1], [0, 0, 1, 1], [], []>} : vector<64x16xf32>, vector<16x32xf32>, vector<64x32xf32> -> vector<64x32xf32>
    %c1_39 = arith.constant 1 : index
    %c0_40 = arith.constant 0 : index
    %c0_41 = arith.constant 0 : index
    %71 = vector.load %arg5[%c1_39, %c0_40, %c0_41] : memref<4x16x32xf32, #tpu.memory_space<vmem>>, vector<1x16x32xf32>
    %72 = vector.shape_cast %71 : vector<1x16x32xf32> to vector<16x32xf32>
    %cst_42 = arith.constant dense<0.000000e+00> : vector<64x32xf32>
    %73 = tpu.matmul %29, %72, %cst_42 {dimension_numbers = #tpu.dot_dimension_numbers<[1], [0], [0], [1], [0, 0, 1, 1], [], []>} : vector<64x16xf32>, vector<16x32xf32>, vector<64x32xf32> -> vector<64x32xf32>
    %c1_43 = arith.constant 1 : index
    %c0_44 = arith.constant 0 : index
    %c0_45 = arith.constant 0 : index
    %74 = vector.load %arg6[%c1_43, %c0_44, %c0_45] : memref<4x16x32xf32, #tpu.memory_space<vmem>>, vector<1x16x32xf32>
    %75 = vector.shape_cast %74 : vector<1x16x32xf32> to vector<16x32xf32>
    %cst_46 = arith.constant dense<0.000000e+00> : vector<64x32xf32>
    %76 = tpu.matmul %29, %75, %cst_46 {dimension_numbers = #tpu.dot_dimension_numbers<[1], [0], [0], [1], [0, 0, 1, 1], [], []>} : vector<64x16xf32>, vector<16x32xf32>, vector<64x32xf32> -> vector<64x32xf32>
    %cst_47 = arith.constant dense<0xFF800000> : vector<64xf32>
    %77 = vector.multi_reduction <maximumf>, %70, %cst_47 [1] : vector<64x32xf32> to vector<64xf32>
    %78 = vector.shape_cast %77 : vector<64xf32> to vector<64x1xf32>
    %79 = vector.broadcast %78 : vector<64x1xf32> to vector<64x32xf32>
    %80 = arith.subf %70, %79 : vector<64x32xf32>
    %81 = math.exp %80 : vector<64x32xf32>
    %cst_48 = arith.constant dense<0.000000e+00> : vector<64xf32>
    %82 = vector.multi_reduction <add>, %81, %cst_48 [1] : vector<64x32xf32> to vector<64xf32>
    %83 = vector.shape_cast %82 : vector<64xf32> to vector<64x1xf32>
    %84 = tpu.reciprocal %83 {approx = true} : vector<64x1xf32> -> vector<64x1xf32>
    %85 = vector.broadcast %84 : vector<64x1xf32> to vector<64x32xf32>
    %86 = arith.mulf %81, %85 : vector<64x32xf32>
    %cst_49 = arith.constant 0.176776692 : f32
    %87 = vector.broadcast %cst_49 : f32 to vector<64x32xf32>
    %88 = arith.mulf %86, %87 : vector<64x32xf32>
    %cst_50 = arith.constant dense<0xFF800000> : vector<32xf32>
    %89 = vector.multi_reduction <maximumf>, %73, %cst_50 [0] : vector<64x32xf32> to vector<32xf32>
    %90 = vector.shape_cast %89 : vector<32xf32> to vector<1x32xf32>
    %91 = vector.broadcast %90 : vector<1x32xf32> to vector<64x32xf32>
    %92 = arith.subf %73, %91 : vector<64x32xf32>
    %93 = math.exp %92 : vector<64x32xf32>
    %cst_51 = arith.constant dense<0.000000e+00> : vector<32xf32>
    %94 = vector.multi_reduction <add>, %93, %cst_51 [0] : vector<64x32xf32> to vector<32xf32>
    %95 = vector.shape_cast %94 : vector<32xf32> to vector<1x32xf32>
    %96 = tpu.reciprocal %95 {approx = true} : vector<1x32xf32> -> vector<1x32xf32>
    %97 = vector.broadcast %96 : vector<1x32xf32> to vector<64x32xf32>
    %98 = arith.mulf %93, %97 : vector<64x32xf32>
    %cst_52 = arith.constant dense<0.000000e+00> : vector<32x32xf32>
    %99 = tpu.matmul %98, %76, %cst_52 {dimension_numbers = #tpu.dot_dimension_numbers<[0], [0], [1], [1], [0, 1, 1, 1], [], []>} : vector<64x32xf32>, vector<64x32xf32>, vector<32x32xf32> -> vector<32x32xf32>
    %cst_53 = arith.constant dense<0.000000e+00> : vector<64x32xf32>
    %100 = tpu.matmul %88, %99, %cst_53 {dimension_numbers = #tpu.dot_dimension_numbers<[1], [0], [0], [1], [0, 0, 1, 1], [], []>} : vector<64x32xf32>, vector<32x32xf32>, vector<64x32xf32> -> vector<64x32xf32>
    %c1_54 = arith.constant 1 : index
    %c0_55 = arith.constant 0 : index
    %c0_56 = arith.constant 0 : index
    %101 = vector.load %arg7[%c1_54, %c0_55, %c0_56] : memref<4x32x16xf32, #tpu.memory_space<vmem>>, vector<1x32x16xf32>
    %102 = vector.shape_cast %101 : vector<1x32x16xf32> to vector<32x16xf32>
    %cst_57 = arith.constant dense<0.000000e+00> : vector<64x16xf32>
    %103 = tpu.matmul %100, %102, %cst_57 {dimension_numbers = #tpu.dot_dimension_numbers<[1], [0], [0], [1], [0, 0, 1, 1], [], []>} : vector<64x32xf32>, vector<32x16xf32>, vector<64x16xf32> -> vector<64x16xf32>
    %104 = arith.addf %67, %103 : vector<64x16xf32>
    %c2 = arith.constant 2 : index
    %c0_58 = arith.constant 0 : index
    %c0_59 = arith.constant 0 : index
    %105 = vector.load %arg4[%c2, %c0_58, %c0_59] : memref<4x16x32xf32, #tpu.memory_space<vmem>>, vector<1x16x32xf32>
    %106 = vector.shape_cast %105 : vector<1x16x32xf32> to vector<16x32xf32>
    %cst_60 = arith.constant dense<0.000000e+00> : vector<64x32xf32>
    %107 = tpu.matmul %29, %106, %cst_60 {dimension_numbers = #tpu.dot_dimension_numbers<[1], [0], [0], [1], [0, 0, 1, 1], [], []>} : vector<64x16xf32>, vector<16x32xf32>, vector<64x32xf32> -> vector<64x32xf32>
    %c2_61 = arith.constant 2 : index
    %c0_62 = arith.constant 0 : index
    %c0_63 = arith.constant 0 : index
    %108 = vector.load %arg5[%c2_61, %c0_62, %c0_63] : memref<4x16x32xf32, #tpu.memory_space<vmem>>, vector<1x16x32xf32>
    %109 = vector.shape_cast %108 : vector<1x16x32xf32> to vector<16x32xf32>
    %cst_64 = arith.constant dense<0.000000e+00> : vector<64x32xf32>
    %110 = tpu.matmul %29, %109, %cst_64 {dimension_numbers = #tpu.dot_dimension_numbers<[1], [0], [0], [1], [0, 0, 1, 1], [], []>} : vector<64x16xf32>, vector<16x32xf32>, vector<64x32xf32> -> vector<64x32xf32>
    %c2_65 = arith.constant 2 : index
    %c0_66 = arith.constant 0 : index
    %c0_67 = arith.constant 0 : index
    %111 = vector.load %arg6[%c2_65, %c0_66, %c0_67] : memref<4x16x32xf32, #tpu.memory_space<vmem>>, vector<1x16x32xf32>
    %112 = vector.shape_cast %111 : vector<1x16x32xf32> to vector<16x32xf32>
    %cst_68 = arith.constant dense<0.000000e+00> : vector<64x32xf32>
    %113 = tpu.matmul %29, %112, %cst_68 {dimension_numbers = #tpu.dot_dimension_numbers<[1], [0], [0], [1], [0, 0, 1, 1], [], []>} : vector<64x16xf32>, vector<16x32xf32>, vector<64x32xf32> -> vector<64x32xf32>
    %cst_69 = arith.constant dense<0xFF800000> : vector<64xf32>
    %114 = vector.multi_reduction <maximumf>, %107, %cst_69 [1] : vector<64x32xf32> to vector<64xf32>
    %115 = vector.shape_cast %114 : vector<64xf32> to vector<64x1xf32>
    %116 = vector.broadcast %115 : vector<64x1xf32> to vector<64x32xf32>
    %117 = arith.subf %107, %116 : vector<64x32xf32>
    %118 = math.exp %117 : vector<64x32xf32>
    %cst_70 = arith.constant dense<0.000000e+00> : vector<64xf32>
    %119 = vector.multi_reduction <add>, %118, %cst_70 [1] : vector<64x32xf32> to vector<64xf32>
    %120 = vector.shape_cast %119 : vector<64xf32> to vector<64x1xf32>
    %121 = tpu.reciprocal %120 {approx = true} : vector<64x1xf32> -> vector<64x1xf32>
    %122 = vector.broadcast %121 : vector<64x1xf32> to vector<64x32xf32>
    %123 = arith.mulf %118, %122 : vector<64x32xf32>
    %cst_71 = arith.constant 0.176776692 : f32
    %124 = vector.broadcast %cst_71 : f32 to vector<64x32xf32>
    %125 = arith.mulf %123, %124 : vector<64x32xf32>
    %cst_72 = arith.constant dense<0xFF800000> : vector<32xf32>
    %126 = vector.multi_reduction <maximumf>, %110, %cst_72 [0] : vector<64x32xf32> to vector<32xf32>
    %127 = vector.shape_cast %126 : vector<32xf32> to vector<1x32xf32>
    %128 = vector.broadcast %127 : vector<1x32xf32> to vector<64x32xf32>
    %129 = arith.subf %110, %128 : vector<64x32xf32>
    %130 = math.exp %129 : vector<64x32xf32>
    %cst_73 = arith.constant dense<0.000000e+00> : vector<32xf32>
    %131 = vector.multi_reduction <add>, %130, %cst_73 [0] : vector<64x32xf32> to vector<32xf32>
    %132 = vector.shape_cast %131 : vector<32xf32> to vector<1x32xf32>
    %133 = tpu.reciprocal %132 {approx = true} : vector<1x32xf32> -> vector<1x32xf32>
    %134 = vector.broadcast %133 : vector<1x32xf32> to vector<64x32xf32>
    %135 = arith.mulf %130, %134 : vector<64x32xf32>
    %cst_74 = arith.constant dense<0.000000e+00> : vector<32x32xf32>
    %136 = tpu.matmul %135, %113, %cst_74 {dimension_numbers = #tpu.dot_dimension_numbers<[0], [0], [1], [1], [0, 1, 1, 1], [], []>} : vector<64x32xf32>, vector<64x32xf32>, vector<32x32xf32> -> vector<32x32xf32>
    %cst_75 = arith.constant dense<0.000000e+00> : vector<64x32xf32>
    %137 = tpu.matmul %125, %136, %cst_75 {dimension_numbers = #tpu.dot_dimension_numbers<[1], [0], [0], [1], [0, 0, 1, 1], [], []>} : vector<64x32xf32>, vector<32x32xf32>, vector<64x32xf32> -> vector<64x32xf32>
    %c2_76 = arith.constant 2 : index
    %c0_77 = arith.constant 0 : index
    %c0_78 = arith.constant 0 : index
    %138 = vector.load %arg7[%c2_76, %c0_77, %c0_78] : memref<4x32x16xf32, #tpu.memory_space<vmem>>, vector<1x32x16xf32>
    %139 = vector.shape_cast %138 : vector<1x32x16xf32> to vector<32x16xf32>
    %cst_79 = arith.constant dense<0.000000e+00> : vector<64x16xf32>
    %140 = tpu.matmul %137, %139, %cst_79 {dimension_numbers = #tpu.dot_dimension_numbers<[1], [0], [0], [1], [0, 0, 1, 1], [], []>} : vector<64x32xf32>, vector<32x16xf32>, vector<64x16xf32> -> vector<64x16xf32>
    %141 = arith.addf %104, %140 : vector<64x16xf32>
    %c3 = arith.constant 3 : index
    %c0_80 = arith.constant 0 : index
    %c0_81 = arith.constant 0 : index
    %142 = vector.load %arg4[%c3, %c0_80, %c0_81] : memref<4x16x32xf32, #tpu.memory_space<vmem>>, vector<1x16x32xf32>
    %143 = vector.shape_cast %142 : vector<1x16x32xf32> to vector<16x32xf32>
    %cst_82 = arith.constant dense<0.000000e+00> : vector<64x32xf32>
    %144 = tpu.matmul %29, %143, %cst_82 {dimension_numbers = #tpu.dot_dimension_numbers<[1], [0], [0], [1], [0, 0, 1, 1], [], []>} : vector<64x16xf32>, vector<16x32xf32>, vector<64x32xf32> -> vector<64x32xf32>
    %c3_83 = arith.constant 3 : index
    %c0_84 = arith.constant 0 : index
    %c0_85 = arith.constant 0 : index
    %145 = vector.load %arg5[%c3_83, %c0_84, %c0_85] : memref<4x16x32xf32, #tpu.memory_space<vmem>>, vector<1x16x32xf32>
    %146 = vector.shape_cast %145 : vector<1x16x32xf32> to vector<16x32xf32>
    %cst_86 = arith.constant dense<0.000000e+00> : vector<64x32xf32>
    %147 = tpu.matmul %29, %146, %cst_86 {dimension_numbers = #tpu.dot_dimension_numbers<[1], [0], [0], [1], [0, 0, 1, 1], [], []>} : vector<64x16xf32>, vector<16x32xf32>, vector<64x32xf32> -> vector<64x32xf32>
    %c3_87 = arith.constant 3 : index
    %c0_88 = arith.constant 0 : index
    %c0_89 = arith.constant 0 : index
    %148 = vector.load %arg6[%c3_87, %c0_88, %c0_89] : memref<4x16x32xf32, #tpu.memory_space<vmem>>, vector<1x16x32xf32>
    %149 = vector.shape_cast %148 : vector<1x16x32xf32> to vector<16x32xf32>
    %cst_90 = arith.constant dense<0.000000e+00> : vector<64x32xf32>
    %150 = tpu.matmul %29, %149, %cst_90 {dimension_numbers = #tpu.dot_dimension_numbers<[1], [0], [0], [1], [0, 0, 1, 1], [], []>} : vector<64x16xf32>, vector<16x32xf32>, vector<64x32xf32> -> vector<64x32xf32>
    %cst_91 = arith.constant dense<0xFF800000> : vector<64xf32>
    %151 = vector.multi_reduction <maximumf>, %144, %cst_91 [1] : vector<64x32xf32> to vector<64xf32>
    %152 = vector.shape_cast %151 : vector<64xf32> to vector<64x1xf32>
    %153 = vector.broadcast %152 : vector<64x1xf32> to vector<64x32xf32>
    %154 = arith.subf %144, %153 : vector<64x32xf32>
    %155 = math.exp %154 : vector<64x32xf32>
    %cst_92 = arith.constant dense<0.000000e+00> : vector<64xf32>
    %156 = vector.multi_reduction <add>, %155, %cst_92 [1] : vector<64x32xf32> to vector<64xf32>
    %157 = vector.shape_cast %156 : vector<64xf32> to vector<64x1xf32>
    %158 = tpu.reciprocal %157 {approx = true} : vector<64x1xf32> -> vector<64x1xf32>
    %159 = vector.broadcast %158 : vector<64x1xf32> to vector<64x32xf32>
    %160 = arith.mulf %155, %159 : vector<64x32xf32>
    %cst_93 = arith.constant 0.176776692 : f32
    %161 = vector.broadcast %cst_93 : f32 to vector<64x32xf32>
    %162 = arith.mulf %160, %161 : vector<64x32xf32>
    %cst_94 = arith.constant dense<0xFF800000> : vector<32xf32>
    %163 = vector.multi_reduction <maximumf>, %147, %cst_94 [0] : vector<64x32xf32> to vector<32xf32>
    %164 = vector.shape_cast %163 : vector<32xf32> to vector<1x32xf32>
    %165 = vector.broadcast %164 : vector<1x32xf32> to vector<64x32xf32>
    %166 = arith.subf %147, %165 : vector<64x32xf32>
    %167 = math.exp %166 : vector<64x32xf32>
    %cst_95 = arith.constant dense<0.000000e+00> : vector<32xf32>
    %168 = vector.multi_reduction <add>, %167, %cst_95 [0] : vector<64x32xf32> to vector<32xf32>
    %169 = vector.shape_cast %168 : vector<32xf32> to vector<1x32xf32>
    %170 = tpu.reciprocal %169 {approx = true} : vector<1x32xf32> -> vector<1x32xf32>
    %171 = vector.broadcast %170 : vector<1x32xf32> to vector<64x32xf32>
    %172 = arith.mulf %167, %171 : vector<64x32xf32>
    %cst_96 = arith.constant dense<0.000000e+00> : vector<32x32xf32>
    %173 = tpu.matmul %172, %150, %cst_96 {dimension_numbers = #tpu.dot_dimension_numbers<[0], [0], [1], [1], [0, 1, 1, 1], [], []>} : vector<64x32xf32>, vector<64x32xf32>, vector<32x32xf32> -> vector<32x32xf32>
    %cst_97 = arith.constant dense<0.000000e+00> : vector<64x32xf32>
    %174 = tpu.matmul %162, %173, %cst_97 {dimension_numbers = #tpu.dot_dimension_numbers<[1], [0], [0], [1], [0, 0, 1, 1], [], []>} : vector<64x32xf32>, vector<32x32xf32>, vector<64x32xf32> -> vector<64x32xf32>
    %c3_98 = arith.constant 3 : index
    %c0_99 = arith.constant 0 : index
    %c0_100 = arith.constant 0 : index
    %175 = vector.load %arg7[%c3_98, %c0_99, %c0_100] : memref<4x32x16xf32, #tpu.memory_space<vmem>>, vector<1x32x16xf32>
    %176 = vector.shape_cast %175 : vector<1x32x16xf32> to vector<32x16xf32>
    %cst_101 = arith.constant dense<0.000000e+00> : vector<64x16xf32>
    %177 = tpu.matmul %174, %176, %cst_101 {dimension_numbers = #tpu.dot_dimension_numbers<[1], [0], [0], [1], [0, 0, 1, 1], [], []>} : vector<64x32xf32>, vector<32x16xf32>, vector<64x16xf32> -> vector<64x16xf32>
    %178 = arith.addf %141, %177 : vector<64x16xf32>
    %c0_102 = arith.constant 0 : index
    %c0_103 = arith.constant 0 : index
    %179 = vector.load %arg8[%c0_102, %c0_103] : memref<1x16xf32, #tpu.memory_space<vmem>>, vector<1x16xf32>
    %180 = vector.broadcast %179 : vector<1x16xf32> to vector<64x16xf32>
    %181 = arith.addf %178, %180 : vector<64x16xf32>
    %c0_104 = arith.constant 0 : index
    %c0_105 = arith.constant 0 : index
    %182 = vector.load %arg9[%c0_104, %c0_105] : memref<1x16xf32, #tpu.memory_space<vmem>>, vector<1x16xf32>
    %c0_106 = arith.constant 0 : index
    %c0_107 = arith.constant 0 : index
    %183 = vector.load %arg10[%c0_106, %c0_107] : memref<1x16xf32, #tpu.memory_space<vmem>>, vector<1x16xf32>
    %cst_108 = arith.constant dense<0.000000e+00> : vector<16xf32>
    %184 = vector.multi_reduction <add>, %181, %cst_108 [0] : vector<64x16xf32> to vector<16xf32>
    %185 = vector.shape_cast %184 : vector<16xf32> to vector<1x16xf32>
    %cst_109 = arith.constant dense<0.000000e+00> : vector<1xf32>
    %186 = vector.multi_reduction <add>, %185, %cst_109 [1] : vector<1x16xf32> to vector<1xf32>
    %187 = vector.shape_cast %186 : vector<1xf32> to vector<1x1xf32>
    %188 = arith.mulf %181, %181 : vector<64x16xf32>
    %cst_110 = arith.constant dense<0.000000e+00> : vector<16xf32>
    %189 = vector.multi_reduction <add>, %188, %cst_110 [0] : vector<64x16xf32> to vector<16xf32>
    %190 = vector.shape_cast %189 : vector<16xf32> to vector<1x16xf32>
    %cst_111 = arith.constant dense<0.000000e+00> : vector<1xf32>
    %191 = vector.multi_reduction <add>, %190, %cst_111 [1] : vector<1x16xf32> to vector<1xf32>
    %192 = vector.shape_cast %191 : vector<1xf32> to vector<1x1xf32>
    %cst_112 = arith.constant 1.024000e+03 : f32
    %193 = vector.broadcast %cst_112 : f32 to vector<1x1xf32>
    %194 = arith.divf %187, %193 : vector<1x1xf32>
    %cst_113 = arith.constant 1.024000e+03 : f32
    %195 = vector.broadcast %cst_113 : f32 to vector<1x1xf32>
    %196 = arith.divf %192, %195 : vector<1x1xf32>
    %197 = arith.mulf %194, %194 : vector<1x1xf32>
    %198 = arith.subf %196, %197 : vector<1x1xf32>
    %199 = vector.broadcast %194 : vector<1x1xf32> to vector<64x16xf32>
    %200 = arith.subf %181, %199 : vector<64x16xf32>
    %cst_114 = arith.constant 9.99999974E-6 : f32
    %201 = vector.broadcast %cst_114 : f32 to vector<1x1xf32>
    %202 = arith.addf %198, %201 : vector<1x1xf32>
    %203 = math.rsqrt %202 : vector<1x1xf32>
    %204 = vector.broadcast %203 : vector<1x1xf32> to vector<64x16xf32>
    %205 = arith.mulf %200, %204 : vector<64x16xf32>
    %206 = vector.broadcast %182 : vector<1x16xf32> to vector<64x16xf32>
    %207 = arith.mulf %205, %206 : vector<64x16xf32>
    %208 = vector.broadcast %183 : vector<1x16xf32> to vector<64x16xf32>
    %209 = arith.addf %207, %208 : vector<64x16xf32>
    %210 = arith.addf %1, %209 : vector<64x16xf32>
    %c0_115 = arith.constant 0 : index
    %c0_116 = arith.constant 0 : index
    %211 = vector.load %arg11[%c0_115, %c0_116] : memref<16x8xf32, #tpu.memory_space<vmem>>, vector<16x8xf32>
    %cst_117 = arith.constant dense<0.000000e+00> : vector<64x8xf32>
    %212 = tpu.matmul %210, %211, %cst_117 {dimension_numbers = #tpu.dot_dimension_numbers<[1], [0], [0], [1], [0, 0, 1, 1], [], []>} : vector<64x16xf32>, vector<16x8xf32>, vector<64x8xf32> -> vector<64x8xf32>
    %c0_118 = arith.constant 0 : index
    %c0_119 = arith.constant 0 : index
    %213 = vector.load %arg12[%c0_118, %c0_119] : memref<1x8xf32, #tpu.memory_space<vmem>>, vector<1x8xf32>
    %214 = vector.broadcast %213 : vector<1x8xf32> to vector<64x8xf32>
    %215 = arith.addf %212, %214 : vector<64x8xf32>
    %c0_120 = arith.constant 0 : index
    %c0_121 = arith.constant 0 : index
    %c0_122 = arith.constant 0 : index
    %216 = vector.load %arg13[%c0_120, %c0_121, %c0_122] : memref<1x64x8xf32, #tpu.memory_space<vmem>>, vector<1x64x8xf32>
    %217 = vector.shape_cast %216 : vector<1x64x8xf32> to vector<64x8xf32>
    %218 = vector.shape_cast %215 : vector<64x8xf32> to vector<1x64x8xf32>
    tpu.vector_store %arg13[%c0_120, %c0_121, %c0_122], %218 {strides = array<i32>} : memref<1x64x8xf32, #tpu.memory_space<vmem>>, vector<1x64x8xf32>,
    return
  }
  func.func @transform_0(%arg0: i32) -> (i32, i32, i32) {
    %c0_i32 = arith.constant 0 : i32
    %c0_i32_0 = arith.constant 0 : i32
    %c0_i32_1 = arith.constant 0 : i32
    return %arg0, %c0_i32, %c0_i32_0 : i32, i32, i32
  }
  func.func @transform_1(%arg0: i32) -> (i32, i32) {
    %c0_i32 = arith.constant 0 : i32
    %c0_i32_0 = arith.constant 0 : i32
    %c0_i32_1 = arith.constant 0 : i32
    return %c0_i32, %c0_i32_0 : i32, i32
  }
  func.func @transform_2(%arg0: i32) -> (i32, i32) {
    %c0_i32 = arith.constant 0 : i32
    %c0_i32_0 = arith.constant 0 : i32
    %c0_i32_1 = arith.constant 0 : i32
    return %c0_i32, %c0_i32_0 : i32, i32
  }
  func.func @transform_3(%arg0: i32) -> (i32, i32, i32) {
    %c0_i32 = arith.constant 0 : i32
    %c0_i32_0 = arith.constant 0 : i32
    %c0_i32_1 = arith.constant 0 : i32
    %c0_i32_2 = arith.constant 0 : i32
    return %c0_i32, %c0_i32_0, %c0_i32_1 : i32, i32, i32
  }
  func.func @transform_4(%arg0: i32) -> (i32, i32, i32) {
    %c0_i32 = arith.constant 0 : i32
    %c0_i32_0 = arith.constant 0 : i32
    %c0_i32_1 = arith.constant 0 : i32
    %c0_i32_2 = arith.constant 0 : i32
    return %c0_i32, %c0_i32_0, %c0_i32_1 : i32, i32, i32
  }
  func.func @transform_5(%arg0: i32) -> (i32, i32, i32) {
    %c0_i32 = arith.constant 0 : i32
    %c0_i32_0 = arith.constant 0 : i32
    %c0_i32_1 = arith.constant 0 : i32
    %c0_i32_2 = arith.constant 0 : i32
    return %c0_i32, %c0_i32_0, %c0_i32_1 : i32, i32, i32
  }
  func.func @transform_6(%arg0: i32) -> (i32, i32, i32) {
    %c0_i32 = arith.constant 0 : i32
    %c0_i32_0 = arith.constant 0 : i32
    %c0_i32_1 = arith.constant 0 : i32
    %c0_i32_2 = arith.constant 0 : i32
    return %c0_i32, %c0_i32_0, %c0_i32_1 : i32, i32, i32
  }
  func.func @transform_7(%arg0: i32) -> (i32, i32) {
    %c0_i32 = arith.constant 0 : i32
    %c0_i32_0 = arith.constant 0 : i32
    %c0_i32_1 = arith.constant 0 : i32
    return %c0_i32, %c0_i32_0 : i32, i32
  }
  func.func @transform_8(%arg0: i32) -> (i32, i32) {
    %c0_i32 = arith.constant 0 : i32
    %c0_i32_0 = arith.constant 0 : i32
    %c0_i32_1 = arith.constant 0 : i32
    return %c0_i32, %c0_i32_0 : i32, i32
  }
  func.func @transform_9(%arg0: i32) -> (i32, i32) {
    %c0_i32 = arith.constant 0 : i32
    %c0_i32_0 = arith.constant 0 : i32
    %c0_i32_1 = arith.constant 0 : i32
    return %c0_i32, %c0_i32_0 : i32, i32
  }
  func.func @transform_10(%arg0: i32) -> (i32, i32) {
    %c0_i32 = arith.constant 0 : i32
    %c0_i32_0 = arith.constant 0 : i32
    %c0_i32_1 = arith.constant 0 : i32
    return %c0_i32, %c0_i32_0 : i32, i32
  }
  func.func @transform_11(%arg0: i32) -> (i32, i32) {
    %c0_i32 = arith.constant 0 : i32
    %c0_i32_0 = arith.constant 0 : i32
    %c0_i32_1 = arith.constant 0 : i32
    return %c0_i32, %c0_i32_0 : i32, i32
  }
  func.func @transform_12(%arg0: i32) -> (i32, i32, i32) {
    %c0_i32 = arith.constant 0 : i32
    %c0_i32_0 = arith.constant 0 : i32
    %c0_i32_1 = arith.constant 0 : i32
    return %arg0, %c0_i32, %c0_i32_0 : i32, i32, i32
  }
}

</mosaic_0001>

<llo_original>
// kernel: dec_block_forward.6
$region0: #{dec_block_forward.6}
  #allocation0 [shape = 'u32[]', space=smem, size = 0x4, offset = 0x4, fixed_abs, tag = 'smem constant byte address 0x4 - core index']
  #allocation1 [shape = 'u32[72,128]{1,0:T(1,128)}', space=vmem, size = 0x9000, scoped, tag = 'internal scratch']
  %s0 = inlined_call_operand.vmem [shape: f32[2,80,48], index: 0, kind: input, shape index: {}]
  %s1 = inlined_call_operand.vmem [shape: f32[2,64,16], index: 1, kind: input, shape index: {}]
  %s2 = inlined_call_operand.vmem [shape: f32[144,16], index: 2, kind: input, shape index: {}]
  %s3 = inlined_call_operand.vmem [shape: f32[1,16], index: 3, kind: input, shape index: {}]
  %s4 = inlined_call_operand.vmem [shape: f32[1,16], index: 4, kind: input, shape index: {}]
  %s5 = inlined_call_operand.vmem [shape: f32[1,16], index: 5, kind: input, shape index: {}]
  %s6 = inlined_call_operand.vmem [shape: f32[16,8], index: 6, kind: input, shape index: {}]
  %s7 = inlined_call_operand.vmem [shape: f32[8,16], index: 7, kind: input, shape index: {}]
  %s8 = inlined_call_operand.vmem [shape: f32[2,64,16], index: 8, kind: output, shape index: {}]
  %s9 = sld [smem:[#allocation0]]
  $region65: #{dec_block_forward.6} parent=0
    _
  %s11 = ssub.s32 1, %s9
  %s12 = scalar_select 0, %s11, %s9
  loop: start=0, step=1, limit=4
  $region2: #{dec_block_forward.6} parent=0 // loop_pre_header
    _
  $region3: #{dec_block_forward.6} parent=0 // loop_header
    %s14 = sphi 0, %s18
    %p15 = scmp.ge.s32.totalorder %s14, 4
    %s24 = sphi 0, %s26
    %s27 = sphi 0, %s24
    %s28 = sphi 0, %s27
    %s44 = sphi 0, %s28
    %s50 = sphi 0, %s52
    %s53 = sphi 0, %s50
    %s54 = sphi 0, %s53
    %s70 = sphi 0, %s54
    %s74 = sphi 0, %s74
    %s76 = sphi 0, %s74
    %s77 = sphi 0, %s76
    %s91 = sphi 0, %s77
    %s95 = sphi 0, %s95
    %s97 = sphi 0, %s95
    %s98 = sphi 0, %s97
    %s112 = sphi 0, %s98
    %s116 = sphi 0, %s116
    %s118 = sphi 0, %s116
    %s119 = sphi 0, %s118
    %s133 = sphi 0, %s119
    %s137 = sphi 0, %s137
    %s139 = sphi 0, %s137
    %s140 = sphi 0, %s139
    %s154 = sphi 0, %s140
    %s158 = sphi 0, %s158
    %s160 = sphi 0, %s158
    %s161 = sphi 0, %s160
    %s175 = sphi 0, %s161
    %s179 = sphi 0, %s179
    %s181 = sphi 0, %s179
    %s182 = sphi 0, %s181
    %s196 = sphi 0, %s182
    %s202 = sphi 0, %s204
    %s205 = sphi 0, %s202
    %s206 = sphi 0, %s205
    %s222 = sphi 0, %s206
  $region4: #{dec_block_forward.6} parent=0 // loop_header_branch
    %17 = sbr.rel (%p15) target = $region8
  $region5: #{dec_block_forward.6} parent=0 // loop_body
    %s19 = ssub.s32 %s14, 1
    %s20 = ssub.s32 %s14, 2
    %s21 = sadd.s32 %s14, 1
    %s22 = ssub.s32 %s14, %s21
    %p23 = scmp.eq.s32.totalorder %s22, 0
    %s25 = sadd.s32 %s24, 1
    %s26 = scalar_select %p23, %s24, %s25
    %p29 = pneg %p23
    %p30 = scmp.eq.s32.totalorder %s14, 1
    %p31 = por %p29, %p30
    %p32 = scmp.ne.s32.totalorder %s24, %s27
    %p33 = scmp.eq.s32.totalorder %s14, 0
    %p34 = por %p32, %p33
    %p35 = scmp.ne.s32.totalorder %s24, %s27
    %p36 = scmp.eq.s32.totalorder %s19, 1
    %p37 = por %p35, %p36
    %p38 = scmp.ne.s32.totalorder %s27, %s28
    %p39 = scmp.eq.s32.totalorder %s19, 0
    %p40 = por %p38, %p39
    %p41 = scmp.ne.s32.totalorder %s27, %s28
    %p42 = scmp.eq.s32.totalorder %s20, 1
    %p43 = por %p41, %p42
    %p45 = scmp.ne.s32.totalorder %s28, %s44
    %p46 = scmp.eq.s32.totalorder %s20, 0
    %p47 = por %p45, %p46
    %s48 = ssub.s32 %s14, %s21
    %p49 = scmp.eq.s32.totalorder %s48, 0
    %s51 = sadd.s32 %s50, 1
    %s52 = scalar_select %p49, %s50, %s51
    %p55 = pneg %p49
    %p56 = scmp.eq.s32.totalorder %s14, 1
    %p57 = por %p55, %p56
    %p58 = scmp.ne.s32.totalorder %s50, %s53
    %p59 = scmp.eq.s32.totalorder %s14, 0
    %p60 = por %p58, %p59
    %p61 = scmp.ne.s32.totalorder %s50, %s53
    %p62 = scmp.eq.s32.totalorder %s19, 1
    %p63 = por %p61, %p62
    %p64 = scmp.ne.s32.totalorder %s53, %s54
    %p65 = scmp.eq.s32.totalorder %s19, 0
    %p66 = por %p64, %p65
    %p67 = scmp.ne.s32.totalorder %s53, %s54
    %p68 = scmp.eq.s32.totalorder %s20, 1
    %p69 = por %p67, %p68
    %p71 = scmp.ne.s32.totalorder %s54, %s70
    %p72 = scmp.eq.s32.totalorder %s20, 0
    %p73 = por %p71, %p72
    %s75 = sadd.s32 %s74, 1
    %p78 = scmp.eq.s32.totalorder %s14, 1
    %p79 = scmp.ne.s32.totalorder %s74, %s76
    %p80 = scmp.eq.s32.totalorder %s14, 0
    %p81 = por %p79, %p80
    %p82 = scmp.ne.s32.totalorder %s74, %s76
    %p83 = scmp.eq.s32.totalorder %s19, 1
    %p84 = por %p82, %p83
    %p85 = scmp.ne.s32.totalorder %s76, %s77
    %p86 = scmp.eq.s32.totalorder %s19, 0
    %p87 = por %p85, %p86
    %p88 = scmp.ne.s32.totalorder %s76, %s77
    %p89 = scmp.eq.s32.totalorder %s20, 1
    %p90 = por %p88, %p89
    %p92 = scmp.ne.s32.totalorder %s77, %s91
    %p93 = scmp.eq.s32.totalorder %s20, 0
    %p94 = por %p92, %p93
    %s96 = sadd.s32 %s95, 1
    %p99 = scmp.eq.s32.totalorder %s14, 1
    %p100 = scmp.ne.s32.totalorder %s95, %s97
    %p101 = scmp.eq.s32.totalorder %s14, 0
    %p102 = por %p100, %p101
    %p103 = scmp.ne.s32.totalorder %s95, %s97
    %p104 = scmp.eq.s32.totalorder %s19, 1
    %p105 = por %p103, %p104
    %p106 = scmp.ne.s32.totalorder %s97, %s98
    %p107 = scmp.eq.s32.totalorder %s19, 0
    %p108 = por %p106, %p107
    %p109 = scmp.ne.s32.totalorder %s97, %s98
    %p110 = scmp.eq.s32.totalorder %s20, 1
    %p111 = por %p109, %p110
    %p113 = scmp.ne.s32.totalorder %s98, %s112
    %p114 = scmp.eq.s32.totalorder %s20, 0
    %p115 = por %p113, %p114
    %s117 = sadd.s32 %s116, 1
    %p120 = scmp.eq.s32.totalorder %s14, 1
    %p121 = scmp.ne.s32.totalorder %s116, %s118
    %p122 = scmp.eq.s32.totalorder %s14, 0
    %p123 = por %p121, %p122
    %p124 = scmp.ne.s32.totalorder %s116, %s118
    %p125 = scmp.eq.s32.totalorder %s19, 1
    %p126 = por %p124, %p125
    %p127 = scmp.ne.s32.totalorder %s118, %s119
    %p128 = scmp.eq.s32.totalorder %s19, 0
    %p129 = por %p127, %p128
    %p130 = scmp.ne.s32.totalorder %s118, %s119
    %p131 = scmp.eq.s32.totalorder %s20, 1
    %p132 = por %p130, %p131
    %p134 = scmp.ne.s32.totalorder %s119, %s133
    %p135 = scmp.eq.s32.totalorder %s20, 0
    %p136 = por %p134, %p135
    %s138 = sadd.s32 %s137, 1
    %p141 = scmp.eq.s32.totalorder %s14, 1
    %p142 = scmp.ne.s32.totalorder %s137, %s139
    %p143 = scmp.eq.s32.totalorder %s14, 0
    %p144 = por %p142, %p143
    %p145 = scmp.ne.s32.totalorder %s137, %s139
    %p146 = scmp.eq.s32.totalorder %s19, 1
    %p147 = por %p145, %p146
    %p148 = scmp.ne.s32.totalorder %s139, %s140
    %p149 = scmp.eq.s32.totalorder %s19, 0
    %p150 = por %p148, %p149
    %p151 = scmp.ne.s32.totalorder %s139, %s140
    %p152 = scmp.eq.s32.totalorder %s20, 1
    %p153 = por %p151, %p152
    %p155 = scmp.ne.s32.totalorder %s140, %s154
    %p156 = scmp.eq.s32.totalorder %s20, 0
    %p157 = por %p155, %p156
    %s159 = sadd.s32 %s158, 1
    %p162 = scmp.eq.s32.totalorder %s14, 1
    %p163 = scmp.ne.s32.totalorder %s158, %s160
    %p164 = scmp.eq.s32.totalorder %s14, 0
    %p165 = por %p163, %p164
    %p166 = scmp.ne.s32.totalorder %s158, %s160
    %p167 = scmp.eq.s32.totalorder %s19, 1
    %p168 = por %p166, %p167
    %p169 = scmp.ne.s32.totalorder %s160, %s161
    %p170 = scmp.eq.s32.totalorder %s19, 0
    %p171 = por %p169, %p170
    %p172 = scmp.ne.s32.totalorder %s160, %s161
    %p173 = scmp.eq.s32.totalorder %s20, 1
    %p174 = por %p172, %p173
    %p176 = scmp.ne.s32.totalorder %s161, %s175
    %p177 = scmp.eq.s32.totalorder %s20, 0
    %p178 = por %p176, %p177
    %s180 = sadd.s32 %s179, 1
    %p183 = scmp.eq.s32.totalorder %s14, 1
    %p184 = scmp.ne.s32.totalorder %s179, %s181
    %p185 = scmp.eq.s32.totalorder %s14, 0
    %p186 = por %p184, %p185
    %p187 = scmp.ne.s32.totalorder %s179, %s181
    %p188 = scmp.eq.s32.totalorder %s19, 1
    %p189 = por %p187, %p188
    %p190 = scmp.ne.s32.totalorder %s181, %s182
    %p191 = scmp.eq.s32.totalorder %s19, 0
    %p192 = por %p190, %p191
    %p193 = scmp.ne.s32.totalorder %s181, %s182
    %p194 = scmp.eq.s32.totalorder %s20, 1
    %p195 = por %p193, %p194
    %p197 = scmp.ne.s32.totalorder %s182, %s196
    %p198 = scmp.eq.s32.totalorder %s20, 0
    %p199 = por %p197, %p198
    %s200 = ssub.s32 %s14, %s21
    %p201 = scmp.eq.s32.totalorder %s200, 0
    %s203 = sadd.s32 %s202, 1
    %s204 = scalar_select %p201, %s202, %s203
    %p207 = pneg %p201
    %p208 = scmp.eq.s32.totalorder %s14, 1
    %p209 = por %p207, %p208
    %p210 = scmp.ne.s32.totalorder %s202, %s205
    %p211 = scmp.eq.s32.totalorder %s14, 0
    %p212 = por %p210, %p211
    %p213 = scmp.ne.s32.totalorder %s202, %s205
    %p214 = scmp.eq.s32.totalorder %s19, 1
    %p215 = por %p213, %p214
    %p216 = scmp.ne.s32.totalorder %s205, %s206
    %p217 = scmp.eq.s32.totalorder %s19, 0
    %p218 = por %p216, %p217
    %p219 = scmp.ne.s32.totalorder %s205, %s206
    %p220 = scmp.eq.s32.totalorder %s20, 1
    %p221 = por %p219, %p220
    %p223 = scmp.ne.s32.totalorder %s206, %s222
    %p224 = scmp.eq.s32.totalorder %s20, 0
    %p225 = por %p223, %p224
    %p226 = scmp.le.s32.totalorder 1, %s14
    %p227 = scmp.lt.s32.totalorder %s14, 3
    %p228 = pnand %p226, %p227
    %p229 = pneg %p228
    // Predicated region
    $region9: #{dec_block_forward.6} parent=5 // pred_check
      _
    $region10: #{dec_block_forward.6} parent=5 // pred_check_branch
      %231 = sbr.rel (%p228) target = $region12
    $region11: #{dec_block_forward.6} parent=5 // pred_region
      %s232 = ssub.s32 %s14, 1
      // Predicated region
      $region13: #{dec_block_forward.6} parent=11 // pred_check
        %p233 = pneg %p87
      $region14: #{dec_block_forward.6} parent=11 // pred_check_branch
        %235 = sbr.rel (%p233) target = $region16
      $region15: #{dec_block_forward.6} parent=11 // pred_region
        _
      $region16: #{dec_block_forward.6} parent=11 // pred_fallthru
        _
      // Predicated region
      $region17: #{dec_block_forward.6} parent=11 // pred_check
        %p236 = pneg %p108
      $region18: #{dec_block_forward.6} parent=11 // pred_check_branch
        %238 = sbr.rel (%p236) target = $region20
      $region19: #{dec_block_forward.6} parent=11 // pred_region
        _
      $region20: #{dec_block_forward.6} parent=11 // pred_fallthru
        _
      // Predicated region
      $region21: #{dec_block_forward.6} parent=11 // pred_check
        %p239 = pneg %p129
      $region22: #{dec_block_forward.6} parent=11 // pred_check_branch
        %241 = sbr.rel (%p239) target = $region24
      $region23: #{dec_block_forward.6} parent=11 // pred_region
        _
      $region24: #{dec_block_forward.6} parent=11 // pred_fallthru
        _
      // Predicated region
      $region25: #{dec_block_forward.6} parent=11 // pred_check
        %p242 = pneg %p150
      $region26: #{dec_block_forward.6} parent=11 // pred_check_branch
        %244 = sbr.rel (%p242) target = $region28
      $region27: #{dec_block_forward.6} parent=11 // pred_region
        _
      $region28: #{dec_block_forward.6} parent=11 // pred_fallthru
        _
      // Predicated region
      $region29: #{dec_block_forward.6} parent=11 // pred_check
        %p245 = pneg %p171
      $region30: #{dec_block_forward.6} parent=11 // pred_check_branch
        %247 = sbr.rel (%p245) target = $region32
      $region31: #{dec_block_forward.6} parent=11 // pred_region
        _
      $region32: #{dec_block_forward.6} parent=11 // pred_fallthru
        _
      // Predicated region
      $region33: #{dec_block_forward.6} parent=11 // pred_check
        %p248 = pneg %p192
      $region34: #{dec_block_forward.6} parent=11 // pred_check_branch
        %250 = sbr.rel (%p248) target = $region36
      $region35: #{dec_block_forward.6} parent=11 // pred_region
        _
      $region36: #{dec_block_forward.6} parent=11 // pred_fallthru
        _
    $region12: #{dec_block_forward.6} parent=5 // pred_fallthru
      _
    %p251 = scmp.lt.s32.totalorder %s14, 2
    // Predicated region
    $region37: #{dec_block_forward.6} parent=5 // pred_check
      %p252 = pneg %p251
    $region38: #{dec_block_forward.6} parent=5 // pred_check_branch
      %254 = sbr.rel (%p252) target = $region40
    $region39: #{dec_block_forward.6} parent=5 // pred_region
      // Predicated region
      $region41: #{dec_block_forward.6} parent=39 // pred_check
        %p255 = pneg %p34
      $region42: #{dec_block_forward.6} parent=39 // pred_check_branch
        %257 = sbr.rel (%p255) target = $region44
      $region43: #{dec_block_forward.6} parent=39 // pred_region
        %p258 = scmp.lt.s32.totalorder %s14, 1
        %s259 = scalar_select %p258, %s14, 1
        %s260 = smul.addr %s259, 10
        %s261 = smul.addr %s260, 8
        %s262 = scalar_lea.vmem %s0, %s261
      $region44: #{dec_block_forward.6} parent=39 // pred_fallthru
        _
      // Predicated region
      $region45: #{dec_block_forward.6} parent=39 // pred_check
        %p263 = pneg %p60
      $region46: #{dec_block_forward.6} parent=39 // pred_check_branch
        %265 = sbr.rel (%p263) target = $region48
      $region47: #{dec_block_forward.6} parent=39 // pred_region
        %p266 = scmp.lt.s32.totalorder %s14, 1
        %s267 = scalar_select %p266, %s14, 1
        %s268 = smul.addr %s267, 8
        %s269 = smul.addr %s268, 8
        %s270 = scalar_lea.vmem %s1, %s269
      $region48: #{dec_block_forward.6} parent=39 // pred_fallthru
        _
    $region40: #{dec_block_forward.6} parent=5 // pred_fallthru
      _
    %p271 = scmp.le.s32.totalorder 1, %s14
    %p272 = scmp.lt.s32.totalorder %s14, 3
    %p273 = pnand %p271, %p272
    %p274 = pneg %p273
    // Predicated region
    $region49: #{dec_block_forward.6} parent=5 // pred_check
      _
    $region50: #{dec_block_forward.6} parent=5 // pred_check_branch
      %276 = sbr.rel (%p273) target = $region52
    $region51: #{dec_block_forward.6} parent=5 // pred_region
      %s277 = ssub.s32 %s14, 1
      %p278 = scmp.lt.s32.totalorder %s19, 1
      %s279 = scalar_select %p278, %s19, 1
      %s280 = smul.addr %s279, 10
      %s281 = smul.addr %s280, 8
      %s282 = scalar_lea.vmem %s0, %s281
      %p283 = pneg %p40
      %p284 = pneg %p37
      %p285 = scmp.lt.s32.totalorder %s19, 1
      %s286 = scalar_select %p285, %s19, 1
      %s287 = smul.addr %s286, 8
      %s288 = smul.addr %s287, 8
      %s289 = scalar_lea.vmem %s1, %s288
      %p290 = pneg %p66
      %p291 = pneg %p63
      %p292 = pneg %p87
      %p293 = pneg %p84
      %p294 = pneg %p108
      %p295 = pneg %p105
      %p296 = pneg %p129
      %p297 = pneg %p126
      %p298 = pneg %p150
      %p299 = pneg %p147
      %p300 = pneg %p171
      %p301 = pneg %p168
      %p302 = pneg %p192
      %p303 = pneg %p189
      %p304 = pneg %p218
      %p305 = pneg %p215
      %p306 = scmp.lt.s32.totalorder %s19, 1
      %s307 = scalar_select %p306, %s19, 1
      %s308 = smul.addr %s307, 8
      %s309 = smul.addr %s308, 8
      %s310 = scalar_lea.vmem %s8, %s309
      %p311 = scmp.lt.s32.totalorder %s19, 1
      %s312 = scalar_select %p311, %s19, 1
      %s313 = smul.addr %s312, 10
      %s314 = smul.addr %s313, 8
      %s315 = scalar_lea.vmem %s0, %s314
      %p316 = scmp.lt.s32.totalorder %s19, 1
      %s317 = scalar_select %p316, %s19, 1
      %s318 = smul.addr %s317, 8
      %s319 = smul.addr %s318, 8
      %s320 = scalar_lea.vmem %s1, %s319
      %p321 = scmp.lt.s32.totalorder %s19, 1
      %s322 = scalar_select %p321, %s19, 1
      %s323 = smul.addr %s322, 8
      %s324 = smul.addr %s323, 8
      %s325 = scalar_lea.vmem %s8, %s324
      %v326 = vld [vmem:[%s315] sm:$0xff]
      %v327 = vld [vmem:[%s315 + $0x8] sm:$0xff]
      %v328 = vld [vmem:[%s315 + $0x10] sm:$0xff]
      %v329 = vld [vmem:[%s315 + $0x18] sm:$0xff]
      %v330 = vld [vmem:[%s315 + $0x20] sm:$0xff]
      %v331 = vld [vmem:[%s315 + $0x28] sm:$0xff]
      %v332 = vld [vmem:[%s315 + $0x30] sm:$0xff]
      %v333 = vld [vmem:[%s315 + $0x38] sm:$0xff]
      %v334 = vld [vmem:[%s2] sm:$0xff]
      %v335 = vld [vmem:[%s2 + $0x8] sm:$0xff]
      %v336 = vld [vmem:[%s2 + $0x10] sm:$0xff]
      %v337 = vld [vmem:[%s2 + $0x18] sm:$0xff]
      %v338 = vld [vmem:[%s2 + $0x20] sm:$0xff]
      %v339 = vld [vmem:[%s2 + $0x28] sm:$0xff]
      %v340 = vld [vmem:[%s315 + $0x40] sm:$0xff]
      %v341 = vld [vmem:[%s2 + $0x30] sm:$0xff]
      %v342 = vld [vmem:[%s2 + $0x38] sm:$0xff]
      %v343 = vld [vmem:[%s2 + $0x40] sm:$0xff]
      %v344 = vld [vmem:[%s2 + $0x48] sm:$0xff]
      %v345 = vld [vmem:[%s2 + $0x50] sm:$0xff]
      %v346 = vld [vmem:[%s2 + $0x58] sm:$0xff]
      %vm347 = vcmask 392192
      %v349 = vsel %vm347, %v327, 0
      %v352 = vsel %vm347, %v328, 0
      %v355 = vsel %vm347, %v329, 0
      %v358 = vsel %vm347, %v330, 0
      %v361 = vsel %vm347, %v331, 0
      %v364 = vsel %vm347, %v332, 0
      %v367 = vsel %vm347, %v333, 0
      %v370 = vsel %vm347, %v340, 0
      %372 = vmatpush.msra.mxu0 0.0
      %373 = vmatpush.msra.mxu0 0.0
      %374 = vmatpush.msra.mxu0 0.0
      %375 = vmatpush.msra.mxu0 0.0
      %376 = vmatpush.msra.mxu0 0.0
      %377 = vmatpush.msra.mxu0 0.0
      %378 = vmatpush.msra.mxu0 0.0
      %379 = vmatpush.msra.mxu0 0.0
      %380 = vmatpush.msra.mxu0 0.0
      %381 = vmatpush.msra.mxu0 0.0
      %382 = vmatpush.msra.mxu0 %v346
      %383 = vmatpush.msra.mxu0 %v345
      %384 = vmatpush.msra.mxu0 %v344
      %385 = vmatpush.msra.mxu0 %v343
      %386 = vmatpush.msra.mxu0 %v342
      %387 = vmatpush.msra.mxu0 %v341
      %388 = vmatmul.f32.gmra.mxu0 %v349
      %v389 = vpop.f32.mrf.mxu0
      %v390 = vadd.f32 0.0, %v389
      %391 = vmatmul.f32.gmra.mxu0 %v352
      %v392 = vpop.f32.mrf.mxu0
      %v393 = vadd.f32 0.0, %v392
      %394 = vmatmul.f32.gmra.mxu0 %v355
      %v395 = vpop.f32.mrf.mxu0
      %v396 = vadd.f32 0.0, %v395
      %397 = vmatmul.f32.gmra.mxu0 %v358
      %v398 = vpop.f32.mrf.mxu0
      %v399 = vadd.f32 0.0, %v398
      %400 = vmatmul.f32.gmra.mxu0 %v361
      %v401 = vpop.f32.mrf.mxu0
      %v402 = vadd.f32 0.0, %v401
      %403 = vmatmul.f32.gmra.mxu0 %v364
      %v404 = vpop.f32.mrf.mxu0
      %v405 = vadd.f32 0.0, %v404
      %406 = vmatmul.f32.gmra.mxu0 %v367
      %v407 = vpop.f32.mrf.mxu0
      %v408 = vadd.f32 0.0, %v407
      %409 = vmatmul.f32.gmra.mxu0 %v370
      %v410 = vpop.f32.mrf.mxu0
      %v411 = vadd.f32 0.0, %v410
      %412 = vdwg.mxu0
      %v414 = vsel %vm347, %v326, 0
      %416 = vmatpush.msra.mxu0 0.0
      %417 = vmatpush.msra.mxu0 0.0
      %418 = vmatpush.msra.mxu0 0.0
      %419 = vmatpush.msra.mxu0 0.0
      %420 = vmatpush.msra.mxu0 0.0
      %421 = vmatpush.msra.mxu0 0.0
      %422 = vmatpush.msra.mxu0 0.0
      %423 = vmatpush.msra.mxu0 0.0
      %424 = vmatpush.msra.mxu0 0.0
      %425 = vmatpush.msra.mxu0 0.0
      %426 = vmatpush.msra.mxu0 %v339
      %427 = vmatpush.msra.mxu0 %v338
      %428 = vmatpush.msra.mxu0 %v337
      %429 = vmatpush.msra.mxu0 %v336
      %430 = vmatpush.msra.mxu0 %v335
      %431 = vmatpush.msra.mxu0 %v334
      %432 = vmatmul.f32.gmra.mxu0 %v414
      %v433 = vpop.f32.mrf.mxu0
      %v434 = vadd.f32 %v390, %v433
      %435 = vmatmul.f32.gmra.mxu0 %v349
      %v436 = vpop.f32.mrf.mxu0
      %v437 = vadd.f32 %v393, %v436
      %438 = vmatmul.f32.gmra.mxu0 %v352
      %v439 = vpop.f32.mrf.mxu0
      %v440 = vadd.f32 %v396, %v439
      %441 = vmatmul.f32.gmra.mxu0 %v355
      %v442 = vpop.f32.mrf.mxu0
      %v443 = vadd.f32 %v399, %v442
      %444 = vmatmul.f32.gmra.mxu0 %v358
      %v445 = vpop.f32.mrf.mxu0
      %v446 = vadd.f32 %v402, %v445
      %447 = vmatmul.f32.gmra.mxu0 %v361
      %v448 = vpop.f32.mrf.mxu0
      %v449 = vadd.f32 %v405, %v448
      %450 = vmatmul.f32.gmra.mxu0 %v364
      %v451 = vpop.f32.mrf.mxu0
      %v452 = vadd.f32 %v408, %v451
      %453 = vmatmul.f32.gmra.mxu0 %v367
      %v454 = vpop.f32.mrf.mxu0
      %v455 = vadd.f32 %v411, %v454
      %456 = vdwg.mxu0
      %v457 = vld [vmem:[%s315 + $0x10] sm:$0xff]
      %v458 = vld [vmem:[%s315 + $0x18] sm:$0xff]
      %v459 = vld [vmem:[%s315 + $0x20] sm:$0xff]
      %v460 = vld [vmem:[%s315 + $0x28] sm:$0xff]
      %v461 = vld [vmem:[%s315 + $0x30] sm:$0xff]
      %v462 = vld [vmem:[%s315 + $0x38] sm:$0xff]
      %v463 = vld [vmem:[%s315 + $0x40] sm:$0xff]
      %v464 = vld [vmem:[%s315 + $0x48] sm:$0xff]
      %v465 = vld [vmem:[%s2 + $0x60] sm:$0xff]
      %v466 = vld [vmem:[%s2 + $0x68] sm:$0xff]
      %v467 = vld [vmem:[%s2 + $0x70] sm:$0xff]
      %v468 = vld [vmem:[%s2 + $0x78] sm:$0xff]
      %v469 = vld [vmem:[%s2 + $0x80] sm:$0xff]
      %v470 = vld [vmem:[%s2 + $0x88] sm:$0xff]
      %v472 = vsel %vm347, %v457, 0
      %v475 = vsel %vm347, %v458, 0
      %v478 = vsel %vm347, %v459, 0
      %v481 = vsel %vm347, %v460, 0
      %v484 = vsel %vm347, %v461, 0
      %v487 = vsel %vm347, %v462, 0
      %v490 = vsel %vm347, %v463, 0
      %v493 = vsel %vm347, %v464, 0
      %495 = vmatpush.msra.mxu0 0.0
      %496 = vmatpush.msra.mxu0 0.0
      %497 = vmatpush.msra.mxu0 0.0
      %498 = vmatpush.msra.mxu0 0.0
      %499 = vmatpush.msra.mxu0 0.0
      %500 = vmatpush.msra.mxu0 0.0
      %501 = vmatpush.msra.mxu0 0.0
      %502 = vmatpush.msra.mxu0 0.0
      %503 = vmatpush.msra.mxu0 0.0
      %504 = vmatpush.msra.mxu0 0.0
      %505 = vmatpush.msra.mxu0 %v470
      %506 = vmatpush.msra.mxu0 %v469
      %507 = vmatpush.msra.mxu0 %v468
      %508 = vmatpush.msra.mxu0 %v467
      %509 = vmatpush.msra.mxu0 %v466
      %510 = vmatpush.msra.mxu0 %v465
      %511 = vmatmul.f32.gmra.mxu0 %v472
      %v512 = vpop.f32.mrf.mxu0
      %v513 = vadd.f32 0.0, %v512
      %514 = vmatmul.f32.gmra.mxu0 %v475
      %v515 = vpop.f32.mrf.mxu0
      %v516 = vadd.f32 0.0, %v515
      %517 = vmatmul.f32.gmra.mxu0 %v478
      %v518 = vpop.f32.mrf.mxu0
      %v519 = vadd.f32 0.0, %v518
      %520 = vmatmul.f32.gmra.mxu0 %v481
      %v521 = vpop.f32.mrf.mxu0
      %v522 = vadd.f32 0.0, %v521
      %523 = vmatmul.f32.gmra.mxu0 %v484
      %v524 = vpop.f32.mrf.mxu0
      %v525 = vadd.f32 0.0, %v524
      %526 = vmatmul.f32.gmra.mxu0 %v487
      %v527 = vpop.f32.mrf.mxu0
      %v528 = vadd.f32 0.0, %v527
      %529 = vmatmul.f32.gmra.mxu0 %v490
      %v530 = vpop.f32.mrf.mxu0
      %v531 = vadd.f32 0.0, %v530
      %532 = vmatmul.f32.gmra.mxu0 %v493
      %v533 = vpop.f32.mrf.mxu0
      %v534 = vadd.f32 0.0, %v533
      %535 = vdwg.mxu0
      %v536 = vadd.f32 %v434, %v513
      %v537 = vadd.f32 %v437, %v516
      %v538 = vadd.f32 %v440, %v519
      %v539 = vadd.f32 %v443, %v522
      %v540 = vadd.f32 %v446, %v525
      %v541 = vadd.f32 %v449, %v528
      %v542 = vadd.f32 %v452, %v531
      %v543 = vadd.f32 %v455, %v534
      %v544 = vld [vmem:[%s3] sm:$0x1]
      %v546 = vperm.slane %v544, 0
      %v548 = vadd.f32 %v536, %v546
      %v549 = vadd.f32 %v537, %v546
      %v550 = vadd.f32 %v538, %v546
      %v551 = vadd.f32 %v539, %v546
      %v552 = vadd.f32 %v540, %v546
      %v553 = vadd.f32 %v541, %v546
      %v554 = vadd.f32 %v542, %v546
      %v555 = vadd.f32 %v543, %v546
      %vm556 = vcmask 130048
      %v557 = vsel %vm556, %v548, 0.0
      %v558 = vsel %vm556, %v549, 0.0
      %v559 = vadd.f32 %v557, %v558
      %v560 = vsel %vm556, %v550, 0.0
      %v561 = vadd.f32 %v559, %v560
      %v562 = vsel %vm556, %v551, 0.0
      %v563 = vadd.f32 %v561, %v562
      %v564 = vsel %vm556, %v552, 0.0
      %v565 = vadd.f32 %v563, %v564
      %v566 = vsel %vm556, %v553, 0.0
      %v567 = vadd.f32 %v565, %v566
      %v568 = vsel %vm556, %v554, 0.0
      %v569 = vadd.f32 %v567, %v568
      %v570 = vsel %vm556, %v555, 0.0
      %v571 = vadd.f32 %v569, %v570
      %v572 = vrot.slane %v571, 4
      %v573 = vadd.f32 %v571, %v572
      %v574 = vrot.slane %v573, 2
      %v575 = vadd.f32 %v573, %v574
      %v576 = vrot.slane %v575, 1
      %v577 = vadd.f32 %v575, %v576
      %v578 = vld [vmem:[%s6] sm:$0xff]
      %v579 = vld [vmem:[%s6 + $0x8] sm:$0xff]
      %v581 = vsel %vm556, %v577, 0
      %583 = vmatpush.msra.mxu0 0.0
      %584 = vmatpush.msra.mxu0 0.0
      %585 = vmatpush.msra.mxu0 0.0
      %586 = vmatpush.msra.mxu0 0.0
      %587 = vmatpush.msra.mxu0 0.0
      %588 = vmatpush.msra.mxu0 0.0
      %589 = vmatpush.msra.mxu0 0.0
      %590 = vmatpush.msra.mxu0 0.0
      %591 = vmatpush.msra.mxu0 0.0
      %592 = vmatpush.msra.mxu0 0.0
      %593 = vmatpush.msra.mxu0 0.0
      %594 = vmatpush.msra.mxu0 0.0
      %595 = vmatpush.msra.mxu0 0.0
      %596 = vmatpush.msra.mxu0 0.0
      %597 = vmatpush.msra.mxu0 %v579
      %598 = vmatpush.msra.mxu0 %v578
      %599 = vmatmul.f32.gmra.mxu0 %v581
      %v600 = vpop.f32.mrf.mxu0
      %v601 = vadd.f32 0.0, %v600
      %602 = vdwg.mxu0
      %v603 = vmul.f32 %v548, %v548
      %v604 = vmul.f32 %v549, %v549
      %v605 = vmul.f32 %v550, %v550
      %v606 = vmul.f32 %v551, %v551
      %v607 = vmul.f32 %v552, %v552
      %v608 = vmul.f32 %v553, %v553
      %v609 = vmul.f32 %v554, %v554
      %v610 = vmul.f32 %v555, %v555
      %v611 = vsel %vm556, %v603, 0.0
      %v612 = vsel %vm556, %v604, 0.0
      %v613 = vadd.f32 %v611, %v612
      %v614 = vsel %vm556, %v605, 0.0
      %v615 = vadd.f32 %v613, %v614
      %v616 = vsel %vm556, %v606, 0.0
      %v617 = vadd.f32 %v615, %v616
      %v618 = vsel %vm556, %v607, 0.0
      %v619 = vadd.f32 %v617, %v618
      %v620 = vsel %vm556, %v608, 0.0
      %v621 = vadd.f32 %v619, %v620
      %v622 = vsel %vm556, %v609, 0.0
      %v623 = vadd.f32 %v621, %v622
      %v624 = vsel %vm556, %v610, 0.0
      %v625 = vadd.f32 %v623, %v624
      %v626 = vrot.slane %v625, 4
      %v627 = vadd.f32 %v625, %v626
      %v628 = vrot.slane %v627, 2
      %v629 = vadd.f32 %v627, %v628
      %v630 = vrot.slane %v629, 1
      %v631 = vadd.f32 %v629, %v630
      %v633 = vsel %vm556, %v631, 0
      %635 = vmatpush.msra.mxu0 0.0
      %636 = vmatpush.msra.mxu0 0.0
      %637 = vmatpush.msra.mxu0 0.0
      %638 = vmatpush.msra.mxu0 0.0
      %639 = vmatpush.msra.mxu0 0.0
      %640 = vmatpush.msra.mxu0 0.0
      %641 = vmatpush.msra.mxu0 0.0
      %642 = vmatpush.msra.mxu0 0.0
      %643 = vmatpush.msra.mxu0 0.0
      %644 = vmatpush.msra.mxu0 0.0
      %645 = vmatpush.msra.mxu0 0.0
      %646 = vmatpush.msra.mxu0 0.0
      %647 = vmatpush.msra.mxu0 0.0
      %648 = vmatpush.msra.mxu0 0.0
      %649 = vmatpush.msra.mxu0 %v579
      %650 = vmatpush.msra.mxu0 %v578
      %651 = vmatmul.f32.gmra.mxu0 %v633
      %v652 = vpop.f32.mrf.mxu0
      %v653 = vadd.f32 0.0, %v652
      %654 = vdwg.mxu0
      %v655 = vrcp.pop 128.0
      %v656 = vmul.f32 128.0, %v655
      %v657 = vsub.f32 1.0, %v656
      %v658 = vmul.f32 %v655, %v657
      %v659 = vadd.f32 %v655, %v658
      %vm660 = vweird.f32 %v655
      %v661 = vsel %vm660, %v655, %v659
      %v662 = vmul.f32 %v601, %v661
      %v663 = vmul.f32 %v653, %v661
      %v664 = vmul.f32 %v662, %v662
      %v665 = vsub.f32 %v663, %v664
      %v666 = vadd.f32 %v665, 1e-05
      %v667 = vrsqrt.pop %v666
      %v668 = vmul.f32 %v667, %v666
      %v669 = vmul.f32 %v668, %v667
      %v670 = vmul.f32 0.5, %v669
      %v671 = vsub.f32 1.5, %v670
      %v672 = vmul.f32 %v667, %v671
      %vm673 = vweird.f32 %v666
      %vm674 = vweird.f32 %v667
      %vm675 = vmor %vm673, %vm674
      %v676 = vsel %vm675, %v667, %v672
      %v677 = vld [vmem:[%s7] sm:$0xff]
      %vm678 = vcmask 64512
      %v680 = vsel %vm678, %v662, 0
      %682 = vmatpush.msra.mxu0 0.0
      %683 = vmatpush.msra.mxu0 0.0
      %684 = vmatpush.msra.mxu0 0.0
      %685 = vmatpush.msra.mxu0 0.0
      %686 = vmatpush.msra.mxu0 0.0
      %687 = vmatpush.msra.mxu0 0.0
      %688 = vmatpush.msra.mxu0 0.0
      %689 = vmatpush.msra.mxu0 0.0
      %690 = vmatpush.msra.mxu0 0.0
      %691 = vmatpush.msra.mxu0 0.0
      %692 = vmatpush.msra.mxu0 0.0
      %693 = vmatpush.msra.mxu0 0.0
      %694 = vmatpush.msra.mxu0 0.0
      %695 = vmatpush.msra.mxu0 0.0
      %696 = vmatpush.msra.mxu0 0.0
      %697 = vmatpush.msra.mxu0 %v677
      %698 = vmatmul.f32.gmra.mxu0 %v680
      %v699 = vpop.f32.mrf.mxu0
      %v700 = vadd.f32 0.0, %v699
      %701 = vdwg.mxu0
      %v703 = vsel %vm678, %v676, 0
      %705 = vmatpush.msra.mxu0 0.0
      %706 = vmatpush.msra.mxu0 0.0
      %707 = vmatpush.msra.mxu0 0.0
      %708 = vmatpush.msra.mxu0 0.0
      %709 = vmatpush.msra.mxu0 0.0
      %710 = vmatpush.msra.mxu0 0.0
      %711 = vmatpush.msra.mxu0 0.0
      %712 = vmatpush.msra.mxu0 0.0
      %713 = vmatpush.msra.mxu0 0.0
      %714 = vmatpush.msra.mxu0 0.0
      %715 = vmatpush.msra.mxu0 0.0
      %716 = vmatpush.msra.mxu0 0.0
      %717 = vmatpush.msra.mxu0 0.0
      %718 = vmatpush.msra.mxu0 0.0
      %719 = vmatpush.msra.mxu0 0.0
      %720 = vmatpush.msra.mxu0 %v677
      %721 = vmatmul.f32.gmra.mxu0 %v703
      %v722 = vpop.f32.mrf.mxu0
      %v723 = vadd.f32 0.0, %v722
      %724 = vdwg.mxu0
      %v725 = vperm.slane %v700, 0
      %v726 = vsub.f32 %v548, %v725
      %v727 = vsub.f32 %v549, %v725
      %v728 = vsub.f32 %v550, %v725
      %v729 = vsub.f32 %v551, %v725
      %v730 = vsub.f32 %v552, %v725
      %v731 = vsub.f32 %v553, %v725
      %v732 = vsub.f32 %v554, %v725
      %v733 = vsub.f32 %v555, %v725
      %v734 = vperm.slane %v723, 0
      %v735 = vmul.f32 %v726, %v734
      %v736 = vmul.f32 %v727, %v734
      %v737 = vmul.f32 %v728, %v734
      %v738 = vmul.f32 %v729, %v734
      %v739 = vmul.f32 %v730, %v734
      %v740 = vmul.f32 %v731, %v734
      %v741 = vmul.f32 %v732, %v734
      %v742 = vmul.f32 %v733, %v734
      %v743 = vld [vmem:[%s4] sm:$0x1]
      %v745 = vperm.slane %v743, 0
      %v747 = vmul.f32 %v735, %v745
      %v748 = vmul.f32 %v736, %v745
      %v749 = vmul.f32 %v737, %v745
      %v750 = vmul.f32 %v738, %v745
      %v751 = vmul.f32 %v739, %v745
      %v752 = vmul.f32 %v740, %v745
      %v753 = vmul.f32 %v741, %v745
      %v754 = vmul.f32 %v742, %v745
      %v755 = vld [vmem:[%s5] sm:$0x1]
      %v757 = vperm.slane %v755, 0
      %v759 = vadd.f32 %v747, %v757
      %v760 = vadd.f32 %v748, %v757
      %v761 = vadd.f32 %v749, %v757
      %v762 = vadd.f32 %v750, %v757
      %v763 = vadd.f32 %v751, %v757
      %v764 = vadd.f32 %v752, %v757
      %v765 = vadd.f32 %v753, %v757
      %v766 = vadd.f32 %v754, %v757
      %v767 = vsub.f32 0.0, %v759
      %v768 = vsub.f32 0.0, %v760
      %v769 = vsub.f32 0.0, %v761
      %v770 = vsub.f32 0.0, %v762
      %v771 = vsub.f32 0.0, %v763
      %v772 = vsub.f32 0.0, %v764
      %v773 = vsub.f32 0.0, %v765
      %v774 = vsub.f32 0.0, %v766
      %v775 = vmul.f32 %v767, 1.442695
      %v776 = vpow.pop %v775
      %v777 = vmul.f32 %v768, 1.442695
      %v778 = vpow.pop %v777
      %v779 = vmul.f32 %v769, 1.442695
      %v780 = vpow.pop %v779
      %v781 = vmul.f32 %v770, 1.442695
      %v782 = vpow.pop %v781
      %v783 = vmul.f32 %v771, 1.442695
      %v784 = vpow.pop %v783
      %v785 = vmul.f32 %v772, 1.442695
      %v786 = vpow.pop %v785
      %v787 = vmul.f32 %v773, 1.442695
      %v788 = vpow.pop %v787
      %v789 = vmul.f32 %v774, 1.442695
      %v790 = vpow.pop %v789
      %v791 = vadd.f32 %v776, 1.0
      %v792 = vadd.f32 %v778, 1.0
      %v793 = vadd.f32 %v780, 1.0
      %v794 = vadd.f32 %v782, 1.0
      %v795 = vadd.f32 %v784, 1.0
      %v796 = vadd.f32 %v786, 1.0
      %v797 = vadd.f32 %v788, 1.0
      %v798 = vadd.f32 %v790, 1.0
      %v799 = vrcp.pop %v791
      %v800 = vrcp.pop %v792
      %v801 = vrcp.pop %v793
      %v802 = vrcp.pop %v794
      %v803 = vrcp.pop %v795
      %v804 = vrcp.pop %v796
      %v805 = vrcp.pop %v797
      %v806 = vrcp.pop %v798
      %v807 = vmul.f32 %v759, %v799
      %v808 = vmul.f32 %v760, %v800
      %v809 = vmul.f32 %v761, %v801
      %v810 = vmul.f32 %v762, %v802
      %v811 = vmul.f32 %v763, %v803
      %v812 = vmul.f32 %v764, %v804
      %v813 = vmul.f32 %v765, %v805
      %v814 = vmul.f32 %v766, %v806
      %v815 = vld [vmem:[%s320] sm:$0xff]
      %v816 = vld [vmem:[%s320 + $0x8] sm:$0xff]
      %v817 = vld [vmem:[%s320 + $0x10] sm:$0xff]
      %v818 = vld [vmem:[%s320 + $0x18] sm:$0xff]
      %v819 = vld [vmem:[%s320 + $0x20] sm:$0xff]
      %v820 = vld [vmem:[%s320 + $0x28] sm:$0xff]
      %v821 = vld [vmem:[%s320 + $0x30] sm:$0xff]
      %v822 = vld [vmem:[%s320 + $0x38] sm:$0xff]
      %v823 = vadd.f32 %v807, %v815
      %v824 = vadd.f32 %v808, %v816
      %v825 = vadd.f32 %v809, %v817
      %v826 = vadd.f32 %v810, %v818
      %v827 = vadd.f32 %v811, %v819
      %v828 = vadd.f32 %v812, %v820
      %v829 = vadd.f32 %v813, %v821
      %v830 = vadd.f32 %v814, %v822
      %831 = vst.msk [vmem:[%s325] sm:$0xff] %vm556, %v823
      %832 = vst.msk [vmem:[%s325 + $0x8] sm:$0xff] %vm556, %v824
      %833 = vst.msk [vmem:[%s325 + $0x10] sm:$0xff] %vm556, %v825
      %834 = vst.msk [vmem:[%s325 + $0x18] sm:$0xff] %vm556, %v826
      %835 = vst.msk [vmem:[%s325 + $0x20] sm:$0xff] %vm556, %v827
      %836 = vst.msk [vmem:[%s325 + $0x28] sm:$0xff] %vm556, %v828
      %837 = vst.msk [vmem:[%s325 + $0x30] sm:$0xff] %vm556, %v829
      %838 = vst.msk [vmem:[%s325 + $0x38] sm:$0xff] %vm556, %v830
      %p839 = scmp.lt.s32.totalorder %s19, 1
      %s840 = scalar_select %p839, %s19, 1
      %s841 = smul.addr %s840, 8
      %s842 = smul.addr %s841, 8
      %s843 = scalar_lea.vmem %s8, %s842
      // Predicated region
      $region53: #{dec_block_forward.6} parent=51 // pred_check
        %p844 = pneg %p215
      $region54: #{dec_block_forward.6} parent=51 // pred_check_branch
        %846 = sbr.rel (%p844) target = $region56
      $region55: #{dec_block_forward.6} parent=51 // pred_region
        _
      $region56: #{dec_block_forward.6} parent=51 // pred_fallthru
        _
    $region52: #{dec_block_forward.6} parent=5 // pred_fallthru
      _
    %p847 = scmp.le.s32.totalorder 2, %s14
    // Predicated region
    $region57: #{dec_block_forward.6} parent=5 // pred_check
      %p848 = pneg %p847
    $region58: #{dec_block_forward.6} parent=5 // pred_check_branch
      %850 = sbr.rel (%p848) target = $region60
    $region59: #{dec_block_forward.6} parent=5 // pred_region
      %s851 = ssub.s32 %s14, 2
      // Predicated region
      $region61: #{dec_block_forward.6} parent=59 // pred_check
        %p852 = pneg %p221
      $region62: #{dec_block_forward.6} parent=59 // pred_check_branch
        %854 = sbr.rel (%p852) target = $region64
      $region63: #{dec_block_forward.6} parent=59 // pred_region
        %p855 = scmp.lt.s32.totalorder %s20, 1
        %s856 = scalar_select %p855, %s20, 1
        %s857 = smul.addr %s856, 8
        %s858 = smul.addr %s857, 8
        %s859 = scalar_lea.vmem %s8, %s858
      $region64: #{dec_block_forward.6} parent=59 // pred_fallthru
        _
    $region60: #{dec_block_forward.6} parent=5 // pred_fallthru
      _
  $region6: #{dec_block_forward.6} parent=0 // loop_footer
    %s18 = sadd.s32 1, %s14
  $region7: #{dec_block_forward.6} parent=0 // loop_footer_branch
    %13 = sbr.rel target = $region3
  $region8: #{dec_block_forward.6} parent=0 // loop_exit
    _

// kernel: dec_block_forward.5
$region0: #{dec_block_forward.5}
  #allocation0 [shape = 'u32[]', space=smem, size = 0x4, offset = 0x4, fixed_abs, tag = 'smem constant byte address 0x4 - core index']
  #allocation1 [shape = 'u32[72,128]{1,0:T(1,128)}', space=vmem, size = 0x9000, scoped, tag = 'internal scratch']
  %s0 = inlined_call_operand.vmem [shape: f32[2,80,72], index: 0, kind: input, shape index: {}]
  %s1 = inlined_call_operand.vmem [shape: f32[216,16], index: 1, kind: input, shape index: {}]
  %s2 = inlined_call_operand.vmem [shape: f32[72,16], index: 2, kind: input, shape index: {}]
  %s3 = inlined_call_operand.vmem [shape: f32[1,16], index: 3, kind: input, shape index: {}]
  %s4 = inlined_call_operand.vmem [shape: f32[1,16], index: 4, kind: input, shape index: {}]
  %s5 = inlined_call_operand.vmem [shape: f32[1,16], index: 5, kind: input, shape index: {}]
  %s6 = inlined_call_operand.vmem [shape: f32[1,16], index: 6, kind: input, shape index: {}]
  %s7 = inlined_call_operand.vmem [shape: f32[16,8], index: 7, kind: input, shape index: {}]
  %s8 = inlined_call_operand.vmem [shape: f32[8,16], index: 8, kind: input, shape index: {}]
  %s9 = inlined_call_operand.vmem [shape: f32[2,64,16], index: 9, kind: output, shape index: {0}]
  %s10 = inlined_call_operand.vmem [shape: f32[2,64,16], index: 10, kind: output, shape index: {1}]
  %11 = xla_tuple %s9, %s10
  %s12 = sld [smem:[#allocation0]]
  $region77: #{dec_block_forward.5} parent=0
    _
  %s14 = ssub.s32 1, %s12
  %s15 = scalar_select 0, %s14, %s12
  loop: start=0, step=1, limit=4
  $region2: #{dec_block_forward.5} parent=0 // loop_pre_header
    _
  $region3: #{dec_block_forward.5} parent=0 // loop_header
    %s17 = sphi 0, %s21
    %p18 = scmp.ge.s32.totalorder %s17, 4
    %s27 = sphi 0, %s29
    %s30 = sphi 0, %s27
    %s31 = sphi 0, %s30
    %s47 = sphi 0, %s31
    %s51 = sphi 0, %s51
    %s53 = sphi 0, %s51
    %s54 = sphi 0, %s53
    %s68 = sphi 0, %s54
    %s72 = sphi 0, %s72
    %s74 = sphi 0, %s72
    %s75 = sphi 0, %s74
    %s89 = sphi 0, %s75
    %s93 = sphi 0, %s93
    %s95 = sphi 0, %s93
    %s96 = sphi 0, %s95
    %s110 = sphi 0, %s96
    %s114 = sphi 0, %s114
    %s116 = sphi 0, %s114
    %s117 = sphi 0, %s116
    %s131 = sphi 0, %s117
    %s135 = sphi 0, %s135
    %s137 = sphi 0, %s135
    %s138 = sphi 0, %s137
    %s152 = sphi 0, %s138
    %s156 = sphi 0, %s156
    %s158 = sphi 0, %s156
    %s159 = sphi 0, %s158
    %s173 = sphi 0, %s159
    %s177 = sphi 0, %s177
    %s179 = sphi 0, %s177
    %s180 = sphi 0, %s179
    %s194 = sphi 0, %s180
    %s198 = sphi 0, %s198
    %s200 = sphi 0, %s198
    %s201 = sphi 0, %s200
    %s215 = sphi 0, %s201
    %s221 = sphi 0, %s223
    %s224 = sphi 0, %s221
    %s225 = sphi 0, %s224
    %s241 = sphi 0, %s225
    %s247 = sphi 0, %s249
    %s250 = sphi 0, %s247
    %s251 = sphi 0, %s250
    %s267 = sphi 0, %s251
  $region4: #{dec_block_forward.5} parent=0 // loop_header_branch
    %20 = sbr.rel (%p18) target = $region8
  $region5: #{dec_block_forward.5} parent=0 // loop_body
    %s22 = ssub.s32 %s17, 1
    %s23 = ssub.s32 %s17, 2
    %s24 = sadd.s32 %s17, 1
    %s25 = ssub.s32 %s17, %s24
    %p26 = scmp.eq.s32.totalorder %s25, 0
    %s28 = sadd.s32 %s27, 1
    %s29 = scalar_select %p26, %s27, %s28
    %p32 = pneg %p26
    %p33 = scmp.eq.s32.totalorder %s17, 1
    %p34 = por %p32, %p33
    %p35 = scmp.ne.s32.totalorder %s27, %s30
    %p36 = scmp.eq.s32.totalorder %s17, 0
    %p37 = por %p35, %p36
    %p38 = scmp.ne.s32.totalorder %s27, %s30
    %p39 = scmp.eq.s32.totalorder %s22, 1
    %p40 = por %p38, %p39
    %p41 = scmp.ne.s32.totalorder %s30, %s31
    %p42 = scmp.eq.s32.totalorder %s22, 0
    %p43 = por %p41, %p42
    %p44 = scmp.ne.s32.totalorder %s30, %s31
    %p45 = scmp.eq.s32.totalorder %s23, 1
    %p46 = por %p44, %p45
    %p48 = scmp.ne.s32.totalorder %s31, %s47
    %p49 = scmp.eq.s32.totalorder %s23, 0
    %p50 = por %p48, %p49
    %s52 = sadd.s32 %s51, 1
    %p55 = scmp.eq.s32.totalorder %s17, 1
    %p56 = scmp.ne.s32.totalorder %s51, %s53
    %p57 = scmp.eq.s32.totalorder %s17, 0
    %p58 = por %p56, %p57
    %p59 = scmp.ne.s32.totalorder %s51, %s53
    %p60 = scmp.eq.s32.totalorder %s22, 1
    %p61 = por %p59, %p60
    %p62 = scmp.ne.s32.totalorder %s53, %s54
    %p63 = scmp.eq.s32.totalorder %s22, 0
    %p64 = por %p62, %p63
    %p65 = scmp.ne.s32.totalorder %s53, %s54
    %p66 = scmp.eq.s32.totalorder %s23, 1
    %p67 = por %p65, %p66
    %p69 = scmp.ne.s32.totalorder %s54, %s68
    %p70 = scmp.eq.s32.totalorder %s23, 0
    %p71 = por %p69, %p70
    %s73 = sadd.s32 %s72, 1
    %p76 = scmp.eq.s32.totalorder %s17, 1
    %p77 = scmp.ne.s32.totalorder %s72, %s74
    %p78 = scmp.eq.s32.totalorder %s17, 0
    %p79 = por %p77, %p78
    %p80 = scmp.ne.s32.totalorder %s72, %s74
    %p81 = scmp.eq.s32.totalorder %s22, 1
    %p82 = por %p80, %p81
    %p83 = scmp.ne.s32.totalorder %s74, %s75
    %p84 = scmp.eq.s32.totalorder %s22, 0
    %p85 = por %p83, %p84
    %p86 = scmp.ne.s32.totalorder %s74, %s75
    %p87 = scmp.eq.s32.totalorder %s23, 1
    %p88 = por %p86, %p87
    %p90 = scmp.ne.s32.totalorder %s75, %s89
    %p91 = scmp.eq.s32.totalorder %s23, 0
    %p92 = por %p90, %p91
    %s94 = sadd.s32 %s93, 1
    %p97 = scmp.eq.s32.totalorder %s17, 1
    %p98 = scmp.ne.s32.totalorder %s93, %s95
    %p99 = scmp.eq.s32.totalorder %s17, 0
    %p100 = por %p98, %p99
    %p101 = scmp.ne.s32.totalorder %s93, %s95
    %p102 = scmp.eq.s32.totalorder %s22, 1
    %p103 = por %p101, %p102
    %p104 = scmp.ne.s32.totalorder %s95, %s96
    %p105 = scmp.eq.s32.totalorder %s22, 0
    %p106 = por %p104, %p105
    %p107 = scmp.ne.s32.totalorder %s95, %s96
    %p108 = scmp.eq.s32.totalorder %s23, 1
    %p109 = por %p107, %p108
    %p111 = scmp.ne.s32.totalorder %s96, %s110
    %p112 = scmp.eq.s32.totalorder %s23, 0
    %p113 = por %p111, %p112
    %s115 = sadd.s32 %s114, 1
    %p118 = scmp.eq.s32.totalorder %s17, 1
    %p119 = scmp.ne.s32.totalorder %s114, %s116
    %p120 = scmp.eq.s32.totalorder %s17, 0
    %p121 = por %p119, %p120
    %p122 = scmp.ne.s32.totalorder %s114, %s116
    %p123 = scmp.eq.s32.totalorder %s22, 1
    %p124 = por %p122, %p123
    %p125 = scmp.ne.s32.totalorder %s116, %s117
    %p126 = scmp.eq.s32.totalorder %s22, 0
    %p127 = por %p125, %p126
    %p128 = scmp.ne.s32.totalorder %s116, %s117
    %p129 = scmp.eq.s32.totalorder %s23, 1
    %p130 = por %p128, %p129
    %p132 = scmp.ne.s32.totalorder %s117, %s131
    %p133 = scmp.eq.s32.totalorder %s23, 0
    %p134 = por %p132, %p133
    %s136 = sadd.s32 %s135, 1
    %p139 = scmp.eq.s32.totalorder %s17, 1
    %p140 = scmp.ne.s32.totalorder %s135, %s137
    %p141 = scmp.eq.s32.totalorder %s17, 0
    %p142 = por %p140, %p141
    %p143 = scmp.ne.s32.totalorder %s135, %s137
    %p144 = scmp.eq.s32.totalorder %s22, 1
    %p145 = por %p143, %p144
    %p146 = scmp.ne.s32.totalorder %s137, %s138
    %p147 = scmp.eq.s32.totalorder %s22, 0
    %p148 = por %p146, %p147
    %p149 = scmp.ne.s32.totalorder %s137, %s138
    %p150 = scmp.eq.s32.totalorder %s23, 1
    %p151 = por %p149, %p150
    %p153 = scmp.ne.s32.totalorder %s138, %s152
    %p154 = scmp.eq.s32.totalorder %s23, 0
    %p155 = por %p153, %p154
    %s157 = sadd.s32 %s156, 1
    %p160 = scmp.eq.s32.totalorder %s17, 1
    %p161 = scmp.ne.s32.totalorder %s156, %s158
    %p162 = scmp.eq.s32.totalorder %s17, 0
    %p163 = por %p161, %p162
    %p164 = scmp.ne.s32.totalorder %s156, %s158
    %p165 = scmp.eq.s32.totalorder %s22, 1
    %p166 = por %p164, %p165
    %p167 = scmp.ne.s32.totalorder %s158, %s159
    %p168 = scmp.eq.s32.totalorder %s22, 0
    %p169 = por %p167, %p168
    %p170 = scmp.ne.s32.totalorder %s158, %s159
    %p171 = scmp.eq.s32.totalorder %s23, 1
    %p172 = por %p170, %p171
    %p174 = scmp.ne.s32.totalorder %s159, %s173
    %p175 = scmp.eq.s32.totalorder %s23, 0
    %p176 = por %p174, %p175
    %s178 = sadd.s32 %s177, 1
    %p181 = scmp.eq.s32.totalorder %s17, 1
    %p182 = scmp.ne.s32.totalorder %s177, %s179
    %p183 = scmp.eq.s32.totalorder %s17, 0
    %p184 = por %p182, %p183
    %p185 = scmp.ne.s32.totalorder %s177, %s179
    %p186 = scmp.eq.s32.totalorder %s22, 1
    %p187 = por %p185, %p186
    %p188 = scmp.ne.s32.totalorder %s179, %s180
    %p189 = scmp.eq.s32.totalorder %s22, 0
    %p190 = por %p188, %p189
    %p191 = scmp.ne.s32.totalorder %s179, %s180
    %p192 = scmp.eq.s32.totalorder %s23, 1
    %p193 = por %p191, %p192
    %p195 = scmp.ne.s32.totalorder %s180, %s194
    %p196 = scmp.eq.s32.totalorder %s23, 0
    %p197 = por %p195, %p196
    %s199 = sadd.s32 %s198, 1
    %p202 = scmp.eq.s32.totalorder %s17, 1
    %p203 = scmp.ne.s32.totalorder %s198, %s200
    %p204 = scmp.eq.s32.totalorder %s17, 0
    %p205 = por %p203, %p204
    %p206 = scmp.ne.s32.totalorder %s198, %s200
    %p207 = scmp.eq.s32.totalorder %s22, 1
    %p208 = por %p206, %p207
    %p209 = scmp.ne.s32.totalorder %s200, %s201
    %p210 = scmp.eq.s32.totalorder %s22, 0
    %p211 = por %p209, %p210
    %p212 = scmp.ne.s32.totalorder %s200, %s201
    %p213 = scmp.eq.s32.totalorder %s23, 1
    %p214 = por %p212, %p213
    %p216 = scmp.ne.s32.totalorder %s201, %s215
    %p217 = scmp.eq.s32.totalorder %s23, 0
    %p218 = por %p216, %p217
    %s219 = ssub.s32 %s17, %s24
    %p220 = scmp.eq.s32.totalorder %s219, 0
    %s222 = sadd.s32 %s221, 1
    %s223 = scalar_select %p220, %s221, %s222
    %p226 = pneg %p220
    %p227 = scmp.eq.s32.totalorder %s17, 1
    %p228 = por %p226, %p227
    %p229 = scmp.ne.s32.totalorder %s221, %s224
    %p230 = scmp.eq.s32.totalorder %s17, 0
    %p231 = por %p229, %p230
    %p232 = scmp.ne.s32.totalorder %s221, %s224
    %p233 = scmp.eq.s32.totalorder %s22, 1
    %p234 = por %p232, %p233
    %p235 = scmp.ne.s32.totalorder %s224, %s225
    %p236 = scmp.eq.s32.totalorder %s22, 0
    %p237 = por %p235, %p236
    %p238 = scmp.ne.s32.totalorder %s224, %s225
    %p239 = scmp.eq.s32.totalorder %s23, 1
    %p240 = por %p238, %p239
    %p242 = scmp.ne.s32.totalorder %s225, %s241
    %p243 = scmp.eq.s32.totalorder %s23, 0
    %p244 = por %p242, %p243
    %s245 = ssub.s32 %s17, %s24
    %p246 = scmp.eq.s32.totalorder %s245, 0
    %s248 = sadd.s32 %s247, 1
    %s249 = scalar_select %p246, %s247, %s248
    %p252 = pneg %p246
    %p253 = scmp.eq.s32.totalorder %s17, 1
    %p254 = por %p252, %p253
    %p255 = scmp.ne.s32.totalorder %s247, %s250
    %p256 = scmp.eq.s32.totalorder %s17, 0
    %p257 = por %p255, %p256
    %p258 = scmp.ne.s32.totalorder %s247, %s250
    %p259 = scmp.eq.s32.totalorder %s22, 1
    %p260 = por %p258, %p259
    %p261 = scmp.ne.s32.totalorder %s250, %s251
    %p262 = scmp.eq.s32.totalorder %s22, 0
    %p263 = por %p261, %p262
    %p264 = scmp.ne.s32.totalorder %s250, %s251
    %p265 = scmp.eq.s32.totalorder %s23, 1
    %p266 = por %p264, %p265
    %p268 = scmp.ne.s32.totalorder %s251, %s267
    %p269 = scmp.eq.s32.totalorder %s23, 0
    %p270 = por %p268, %p269
    %p271 = scmp.le.s32.totalorder 1, %s17
    %p272 = scmp.lt.s32.totalorder %s17, 3
    %p273 = pnand %p271, %p272
    %p274 = pneg %p273
    // Predicated region
    $region9: #{dec_block_forward.5} parent=5 // pred_check
      _
    $region10: #{dec_block_forward.5} parent=5 // pred_check_branch
      %276 = sbr.rel (%p273) target = $region12
    $region11: #{dec_block_forward.5} parent=5 // pred_region
      %s277 = ssub.s32 %s17, 1
      // Predicated region
      $region13: #{dec_block_forward.5} parent=11 // pred_check
        %p278 = pneg %p64
      $region14: #{dec_block_forward.5} parent=11 // pred_check_branch
        %280 = sbr.rel (%p278) target = $region16
      $region15: #{dec_block_forward.5} parent=11 // pred_region
        _
      $region16: #{dec_block_forward.5} parent=11 // pred_fallthru
        _
      // Predicated region
      $region17: #{dec_block_forward.5} parent=11 // pred_check
        %p281 = pneg %p85
      $region18: #{dec_block_forward.5} parent=11 // pred_check_branch
        %283 = sbr.rel (%p281) target = $region20
      $region19: #{dec_block_forward.5} parent=11 // pred_region
        _
      $region20: #{dec_block_forward.5} parent=11 // pred_fallthru
        _
      // Predicated region
      $region21: #{dec_block_forward.5} parent=11 // pred_check
        %p284 = pneg %p106
      $region22: #{dec_block_forward.5} parent=11 // pred_check_branch
        %286 = sbr.rel (%p284) target = $region24
      $region23: #{dec_block_forward.5} parent=11 // pred_region
        _
      $region24: #{dec_block_forward.5} parent=11 // pred_fallthru
        _
      // Predicated region
      $region25: #{dec_block_forward.5} parent=11 // pred_check
        %p287 = pneg %p127
      $region26: #{dec_block_forward.5} parent=11 // pred_check_branch
        %289 = sbr.rel (%p287) target = $region28
      $region27: #{dec_block_forward.5} parent=11 // pred_region
        _
      $region28: #{dec_block_forward.5} parent=11 // pred_fallthru
        _
      // Predicated region
      $region29: #{dec_block_forward.5} parent=11 // pred_check
        %p290 = pneg %p148
      $region30: #{dec_block_forward.5} parent=11 // pred_check_branch
        %292 = sbr.rel (%p290) target = $region32
      $region31: #{dec_block_forward.5} parent=11 // pred_region
        _
      $region32: #{dec_block_forward.5} parent=11 // pred_fallthru
        _
      // Predicated region
      $region33: #{dec_block_forward.5} parent=11 // pred_check
        %p293 = pneg %p169
      $region34: #{dec_block_forward.5} parent=11 // pred_check_branch
        %295 = sbr.rel (%p293) target = $region36
      $region35: #{dec_block_forward.5} parent=11 // pred_region
        _
      $region36: #{dec_block_forward.5} parent=11 // pred_fallthru
        _
      // Predicated region
      $region37: #{dec_block_forward.5} parent=11 // pred_check
        %p296 = pneg %p190
      $region38: #{dec_block_forward.5} parent=11 // pred_check_branch
        %298 = sbr.rel (%p296) target = $region40
      $region39: #{dec_block_forward.5} parent=11 // pred_region
        _
      $region40: #{dec_block_forward.5} parent=11 // pred_fallthru
        _
      // Predicated region
      $region41: #{dec_block_forward.5} parent=11 // pred_check
        %p299 = pneg %p211
      $region42: #{dec_block_forward.5} parent=11 // pred_check_branch
        %301 = sbr.rel (%p299) target = $region44
      $region43: #{dec_block_forward.5} parent=11 // pred_region
        _
      $region44: #{dec_block_forward.5} parent=11 // pred_fallthru
        _
    $region12: #{dec_block_forward.5} parent=5 // pred_fallthru
      _
    %p302 = scmp.lt.s32.totalorder %s17, 2
    // Predicated region
    $region45: #{dec_block_forward.5} parent=5 // pred_check
      %p303 = pneg %p302
    $region46: #{dec_block_forward.5} parent=5 // pred_check_branch
      %305 = sbr.rel (%p303) target = $region48
    $region47: #{dec_block_forward.5} parent=5 // pred_region
      // Predicated region
      $region49: #{dec_block_forward.5} parent=47 // pred_check
        %p306 = pneg %p37
      $region50: #{dec_block_forward.5} parent=47 // pred_check_branch
        %308 = sbr.rel (%p306) target = $region52
      $region51: #{dec_block_forward.5} parent=47 // pred_region
        %p309 = scmp.lt.s32.totalorder %s17, 1
        %s310 = scalar_select %p309, %s17, 1
        %s311 = smul.addr %s310, 10
        %s312 = smul.addr %s311, 8
        %s313 = scalar_lea.vmem %s0, %s312
      $region52: #{dec_block_forward.5} parent=47 // pred_fallthru
        _
    $region48: #{dec_block_forward.5} parent=5 // pred_fallthru
      _
    %p314 = scmp.le.s32.totalorder 1, %s17
    %p315 = scmp.lt.s32.totalorder %s17, 3
    %p316 = pnand %p314, %p315
    %p317 = pneg %p316
    // Predicated region
    $region53: #{dec_block_forward.5} parent=5 // pred_check
      _
    $region54: #{dec_block_forward.5} parent=5 // pred_check_branch
      %319 = sbr.rel (%p316) target = $region56
    $region55: #{dec_block_forward.5} parent=5 // pred_region
      %s320 = ssub.s32 %s17, 1
      %p321 = scmp.lt.s32.totalorder %s22, 1
      %s322 = scalar_select %p321, %s22, 1
      %s323 = smul.addr %s322, 10
      %s324 = smul.addr %s323, 8
      %s325 = scalar_lea.vmem %s0, %s324
      %p326 = pneg %p43
      %p327 = pneg %p40
      %p328 = pneg %p64
      %p329 = pneg %p61
      %p330 = pneg %p85
      %p331 = pneg %p82
      %p332 = pneg %p106
      %p333 = pneg %p103
      %p334 = pneg %p127
      %p335 = pneg %p124
      %p336 = pneg %p148
      %p337 = pneg %p145
      %p338 = pneg %p169
      %p339 = pneg %p166
      %p340 = pneg %p190
      %p341 = pneg %p187
      %p342 = pneg %p211
      %p343 = pneg %p208
      %p344 = pneg %p237
      %p345 = pneg %p234
      %p346 = scmp.lt.s32.totalorder %s22, 1
      %s347 = scalar_select %p346, %s22, 1
      %s348 = smul.addr %s347, 8
      %s349 = smul.addr %s348, 8
      %s350 = scalar_lea.vmem %s9, %s349
      %p351 = pneg %p263
      %p352 = pneg %p260
      %p353 = scmp.lt.s32.totalorder %s22, 1
      %s354 = scalar_select %p353, %s22, 1
      %s355 = smul.addr %s354, 8
      %s356 = smul.addr %s355, 8
      %s357 = scalar_lea.vmem %s10, %s356
      %p358 = scmp.lt.s32.totalorder %s22, 1
      %s359 = scalar_select %p358, %s22, 1
      %s360 = smul.addr %s359, 10
      %s361 = smul.addr %s360, 8
      %s362 = scalar_lea.vmem %s0, %s361
      %p363 = scmp.lt.s32.totalorder %s22, 1
      %s364 = scalar_select %p363, %s22, 1
      %s365 = smul.addr %s364, 8
      %s366 = smul.addr %s365, 8
      %s367 = scalar_lea.vmem %s9, %s366
      %p368 = scmp.lt.s32.totalorder %s22, 1
      %s369 = scalar_select %p368, %s22, 1
      %s370 = smul.addr %s369, 8
      %s371 = smul.addr %s370, 8
      %s372 = scalar_lea.vmem %s10, %s371
      %v373 = vld [vmem:[%s362] sm:$0xff]
      %v374 = vld [vmem:[%s362 + $0x8] sm:$0xff]
      %v375 = vld [vmem:[%s362 + $0x10] sm:$0xff]
      %v376 = vld [vmem:[%s362 + $0x18] sm:$0xff]
      %v377 = vld [vmem:[%s362 + $0x20] sm:$0xff]
      %v378 = vld [vmem:[%s362 + $0x28] sm:$0xff]
      %v379 = vld [vmem:[%s362 + $0x30] sm:$0xff]
      %v380 = vld [vmem:[%s362 + $0x38] sm:$0xff]
      %v381 = vld [vmem:[%s1] sm:$0xff]
      %v382 = vld [vmem:[%s1 + $0x8] sm:$0xff]
      %v383 = vld [vmem:[%s1 + $0x10] sm:$0xff]
      %v384 = vld [vmem:[%s1 + $0x18] sm:$0xff]
      %v385 = vld [vmem:[%s1 + $0x20] sm:$0xff]
      %v386 = vld [vmem:[%s1 + $0x28] sm:$0xff]
      %v387 = vld [vmem:[%s1 + $0x30] sm:$0xff]
      %v388 = vld [vmem:[%s1 + $0x38] sm:$0xff]
      %v389 = vld [vmem:[%s1 + $0x40] sm:$0xff]
      %v390 = vld [vmem:[%s362 + $0x40] sm:$0xff]
      %v391 = vld [vmem:[%s1 + $0x48] sm:$0xff]
      %v392 = vld [vmem:[%s1 + $0x50] sm:$0xff]
      %v393 = vld [vmem:[%s1 + $0x58] sm:$0xff]
      %v394 = vld [vmem:[%s1 + $0x60] sm:$0xff]
      %v395 = vld [vmem:[%s1 + $0x68] sm:$0xff]
      %v396 = vld [vmem:[%s1 + $0x70] sm:$0xff]
      %v397 = vld [vmem:[%s1 + $0x78] sm:$0xff]
      %v398 = vld [vmem:[%s1 + $0x80] sm:$0xff]
      %v399 = vld [vmem:[%s1 + $0x88] sm:$0xff]
      %vm400 = vcmask 588800
      %v402 = vsel %vm400, %v374, 0
      %v405 = vsel %vm400, %v375, 0
      %v408 = vsel %vm400, %v376, 0
      %v411 = vsel %vm400, %v377, 0
      %v414 = vsel %vm400, %v378, 0
      %v417 = vsel %vm400, %v379, 0
      %v420 = vsel %vm400, %v380, 0
      %v423 = vsel %vm400, %v390, 0
      %425 = vmatpush.msra.mxu0 0.0
      %426 = vmatpush.msra.mxu0 0.0
      %427 = vmatpush.msra.mxu0 0.0
      %428 = vmatpush.msra.mxu0 0.0
      %429 = vmatpush.msra.mxu0 0.0
      %430 = vmatpush.msra.mxu0 0.0
      %431 = vmatpush.msra.mxu0 0.0
      %432 = vmatpush.msra.mxu0 %v399
      %433 = vmatpush.msra.mxu0 %v398
      %434 = vmatpush.msra.mxu0 %v397
      %435 = vmatpush.msra.mxu0 %v396
      %436 = vmatpush.msra.mxu0 %v395
      %437 = vmatpush.msra.mxu0 %v394
      %438 = vmatpush.msra.mxu0 %v393
      %439 = vmatpush.msra.mxu0 %v392
      %440 = vmatpush.msra.mxu0 %v391
      %441 = vmatmul.f32.gmra.mxu0 %v402
      %v442 = vpop.f32.mrf.mxu0
      %v443 = vadd.f32 0.0, %v442
      %444 = vmatmul.f32.gmra.mxu0 %v405
      %v445 = vpop.f32.mrf.mxu0
      %v446 = vadd.f32 0.0, %v445
      %447 = vmatmul.f32.gmra.mxu0 %v408
      %v448 = vpop.f32.mrf.mxu0
      %v449 = vadd.f32 0.0, %v448
      %450 = vmatmul.f32.gmra.mxu0 %v411
      %v451 = vpop.f32.mrf.mxu0
      %v452 = vadd.f32 0.0, %v451
      %453 = vmatmul.f32.gmra.mxu0 %v414
      %v454 = vpop.f32.mrf.mxu0
      %v455 = vadd.f32 0.0, %v454
      %456 = vmatmul.f32.gmra.mxu0 %v417
      %v457 = vpop.f32.mrf.mxu0
      %v458 = vadd.f32 0.0, %v457
      %459 = vmatmul.f32.gmra.mxu0 %v420
      %v460 = vpop.f32.mrf.mxu0
      %v461 = vadd.f32 0.0, %v460
      %462 = vmatmul.f32.gmra.mxu0 %v423
      %v463 = vpop.f32.mrf.mxu0
      %v464 = vadd.f32 0.0, %v463
      %465 = vdwg.mxu0
      %v467 = vsel %vm400, %v373, 0
      %469 = vmatpush.msra.mxu0 0.0
      %470 = vmatpush.msra.mxu0 0.0
      %471 = vmatpush.msra.mxu0 0.0
      %472 = vmatpush.msra.mxu0 0.0
      %473 = vmatpush.msra.mxu0 0.0
      %474 = vmatpush.msra.mxu0 0.0
      %475 = vmatpush.msra.mxu0 0.0
      %476 = vmatpush.msra.mxu0 %v389
      %477 = vmatpush.msra.mxu0 %v388
      %478 = vmatpush.msra.mxu0 %v387
      %479 = vmatpush.msra.mxu0 %v386
      %480 = vmatpush.msra.mxu0 %v385
      %481 = vmatpush.msra.mxu0 %v384
      %482 = vmatpush.msra.mxu0 %v383
      %483 = vmatpush.msra.mxu0 %v382
      %484 = vmatpush.msra.mxu0 %v381
      %485 = vmatmul.f32.gmra.mxu0 %v467
      %v486 = vpop.f32.mrf.mxu0
      %v487 = vadd.f32 %v443, %v486
      %488 = vmatmul.f32.gmra.mxu0 %v402
      %v489 = vpop.f32.mrf.mxu0
      %v490 = vadd.f32 %v446, %v489
      %491 = vmatmul.f32.gmra.mxu0 %v405
      %v492 = vpop.f32.mrf.mxu0
      %v493 = vadd.f32 %v449, %v492
      %494 = vmatmul.f32.gmra.mxu0 %v408
      %v495 = vpop.f32.mrf.mxu0
      %v496 = vadd.f32 %v452, %v495
      %497 = vmatmul.f32.gmra.mxu0 %v411
      %v498 = vpop.f32.mrf.mxu0
      %v499 = vadd.f32 %v455, %v498
      %500 = vmatmul.f32.gmra.mxu0 %v414
      %v501 = vpop.f32.mrf.mxu0
      %v502 = vadd.f32 %v458, %v501
      %503 = vmatmul.f32.gmra.mxu0 %v417
      %v504 = vpop.f32.mrf.mxu0
      %v505 = vadd.f32 %v461, %v504
      %506 = vmatmul.f32.gmra.mxu0 %v420
      %v507 = vpop.f32.mrf.mxu0
      %v508 = vadd.f32 %v464, %v507
      %509 = vdwg.mxu0
      %v510 = vld [vmem:[%s2] sm:$0xff]
      %v511 = vld [vmem:[%s2 + $0x8] sm:$0xff]
      %v512 = vld [vmem:[%s2 + $0x10] sm:$0xff]
      %v513 = vld [vmem:[%s2 + $0x18] sm:$0xff]
      %v514 = vld [vmem:[%s2 + $0x20] sm:$0xff]
      %v515 = vld [vmem:[%s2 + $0x28] sm:$0xff]
      %v516 = vld [vmem:[%s2 + $0x30] sm:$0xff]
      %v517 = vld [vmem:[%s2 + $0x38] sm:$0xff]
      %v518 = vld [vmem:[%s2 + $0x40] sm:$0xff]
      %v519 = vld [vmem:[%s4] sm:$0x1]
      %v521 = vperm.slane %v519, 0
      %523 = vmatpush.msra.mxu0 0.0
      %524 = vmatpush.msra.mxu0 0.0
      %525 = vmatpush.msra.mxu0 0.0
      %526 = vmatpush.msra.mxu0 0.0
      %527 = vmatpush.msra.mxu0 0.0
      %528 = vmatpush.msra.mxu0 0.0
      %529 = vmatpush.msra.mxu0 0.0
      %530 = vmatpush.msra.mxu0 %v518
      %531 = vmatpush.msra.mxu0 %v517
      %532 = vmatpush.msra.mxu0 %v516
      %533 = vmatpush.msra.mxu0 %v515
      %534 = vmatpush.msra.mxu0 %v514
      %535 = vmatpush.msra.mxu0 %v513
      %536 = vmatpush.msra.mxu0 %v512
      %537 = vmatpush.msra.mxu0 %v511
      %538 = vmatpush.msra.mxu0 %v510
      %539 = vmatmul.f32.gmra.mxu0 %v402
      %v540 = vpop.f32.mrf.mxu0
      %v541 = vadd.f32 %v521, %v540
      %542 = vmatmul.f32.gmra.mxu0 %v405
      %v543 = vpop.f32.mrf.mxu0
      %v544 = vadd.f32 %v521, %v543
      %545 = vmatmul.f32.gmra.mxu0 %v408
      %v546 = vpop.f32.mrf.mxu0
      %v547 = vadd.f32 %v521, %v546
      %548 = vmatmul.f32.gmra.mxu0 %v411
      %v549 = vpop.f32.mrf.mxu0
      %v550 = vadd.f32 %v521, %v549
      %551 = vmatmul.f32.gmra.mxu0 %v414
      %v552 = vpop.f32.mrf.mxu0
      %v553 = vadd.f32 %v521, %v552
      %554 = vmatmul.f32.gmra.mxu0 %v417
      %v555 = vpop.f32.mrf.mxu0
      %v556 = vadd.f32 %v521, %v555
      %557 = vmatmul.f32.gmra.mxu0 %v420
      %v558 = vpop.f32.mrf.mxu0
      %v559 = vadd.f32 %v521, %v558
      %560 = vmatmul.f32.gmra.mxu0 %v423
      %v561 = vpop.f32.mrf.mxu0
      %v562 = vadd.f32 %v521, %v561
      %563 = vdwg.mxu0
      %v564 = vld [vmem:[%s362 + $0x10] sm:$0xff]
      %v565 = vld [vmem:[%s362 + $0x18] sm:$0xff]
      %v566 = vld [vmem:[%s362 + $0x20] sm:$0xff]
      %v567 = vld [vmem:[%s362 + $0x28] sm:$0xff]
      %v568 = vld [vmem:[%s362 + $0x30] sm:$0xff]
      %v569 = vld [vmem:[%s362 + $0x38] sm:$0xff]
      %v570 = vld [vmem:[%s362 + $0x40] sm:$0xff]
      %v571 = vld [vmem:[%s362 + $0x48] sm:$0xff]
      %v572 = vld [vmem:[%s1 + $0x90] sm:$0xff]
      %v573 = vld [vmem:[%s1 + $0x98] sm:$0xff]
      %v574 = vld [vmem:[%s1 + $0xa0] sm:$0xff]
      %v575 = vld [vmem:[%s1 + $0xa8] sm:$0xff]
      %v576 = vld [vmem:[%s1 + $0xb0] sm:$0xff]
      %v577 = vld [vmem:[%s1 + $0xb8] sm:$0xff]
      %v578 = vld [vmem:[%s1 + $0xc0] sm:$0xff]
      %v579 = vld [vmem:[%s1 + $0xc8] sm:$0xff]
      %v580 = vld [vmem:[%s1 + $0xd0] sm:$0xff]
      %v582 = vsel %vm400, %v564, 0
      %v585 = vsel %vm400, %v565, 0
      %v588 = vsel %vm400, %v566, 0
      %v591 = vsel %vm400, %v567, 0
      %v594 = vsel %vm400, %v568, 0
      %v597 = vsel %vm400, %v569, 0
      %v600 = vsel %vm400, %v570, 0
      %v603 = vsel %vm400, %v571, 0
      %605 = vmatpush.msra.mxu0 0.0
      %606 = vmatpush.msra.mxu0 0.0
      %607 = vmatpush.msra.mxu0 0.0
      %608 = vmatpush.msra.mxu0 0.0
      %609 = vmatpush.msra.mxu0 0.0
      %610 = vmatpush.msra.mxu0 0.0
      %611 = vmatpush.msra.mxu0 0.0
      %612 = vmatpush.msra.mxu0 %v580
      %613 = vmatpush.msra.mxu0 %v579
      %614 = vmatpush.msra.mxu0 %v578
      %615 = vmatpush.msra.mxu0 %v577
      %616 = vmatpush.msra.mxu0 %v576
      %617 = vmatpush.msra.mxu0 %v575
      %618 = vmatpush.msra.mxu0 %v574
      %619 = vmatpush.msra.mxu0 %v573
      %620 = vmatpush.msra.mxu0 %v572
      %621 = vmatmul.f32.gmra.mxu0 %v582
      %v622 = vpop.f32.mrf.mxu0
      %v623 = vadd.f32 0.0, %v622
      %624 = vmatmul.f32.gmra.mxu0 %v585
      %v625 = vpop.f32.mrf.mxu0
      %v626 = vadd.f32 0.0, %v625
      %627 = vmatmul.f32.gmra.mxu0 %v588
      %v628 = vpop.f32.mrf.mxu0
      %v629 = vadd.f32 0.0, %v628
      %630 = vmatmul.f32.gmra.mxu0 %v591
      %v631 = vpop.f32.mrf.mxu0
      %v632 = vadd.f32 0.0, %v631
      %633 = vmatmul.f32.gmra.mxu0 %v594
      %v634 = vpop.f32.mrf.mxu0
      %v635 = vadd.f32 0.0, %v634
      %636 = vmatmul.f32.gmra.mxu0 %v597
      %v637 = vpop.f32.mrf.mxu0
      %v638 = vadd.f32 0.0, %v637
      %639 = vmatmul.f32.gmra.mxu0 %v600
      %v640 = vpop.f32.mrf.mxu0
      %v641 = vadd.f32 0.0, %v640
      %642 = vmatmul.f32.gmra.mxu0 %v603
      %v643 = vpop.f32.mrf.mxu0
      %v644 = vadd.f32 0.0, %v643
      %645 = vdwg.mxu0
      %v646 = vadd.f32 %v487, %v623
      %v647 = vadd.f32 %v490, %v626
      %v648 = vadd.f32 %v493, %v629
      %v649 = vadd.f32 %v496, %v632
      %v650 = vadd.f32 %v499, %v635
      %v651 = vadd.f32 %v502, %v638
      %v652 = vadd.f32 %v505, %v641
      %v653 = vadd.f32 %v508, %v644
      %v654 = vld [vmem:[%s3] sm:$0x1]
      %v656 = vperm.slane %v654, 0
      %v658 = vadd.f32 %v646, %v656
      %v659 = vadd.f32 %v647, %v656
      %v660 = vadd.f32 %v648, %v656
      %v661 = vadd.f32 %v649, %v656
      %v662 = vadd.f32 %v650, %v656
      %v663 = vadd.f32 %v651, %v656
      %v664 = vadd.f32 %v652, %v656
      %v665 = vadd.f32 %v653, %v656
      %vm666 = vcmask 130048
      %v667 = vsel %vm666, %v658, 0.0
      %v668 = vsel %vm666, %v659, 0.0
      %v669 = vadd.f32 %v667, %v668
      %v670 = vsel %vm666, %v660, 0.0
      %v671 = vadd.f32 %v669, %v670
      %v672 = vsel %vm666, %v661, 0.0
      %v673 = vadd.f32 %v671, %v672
      %v674 = vsel %vm666, %v662, 0.0
      %v675 = vadd.f32 %v673, %v674
      %v676 = vsel %vm666, %v663, 0.0
      %v677 = vadd.f32 %v675, %v676
      %v678 = vsel %vm666, %v664, 0.0
      %v679 = vadd.f32 %v677, %v678
      %v680 = vsel %vm666, %v665, 0.0
      %v681 = vadd.f32 %v679, %v680
      %v682 = vrot.slane %v681, 4
      %v683 = vadd.f32 %v681, %v682
      %v684 = vrot.slane %v683, 2
      %v685 = vadd.f32 %v683, %v684
      %v686 = vrot.slane %v685, 1
      %v687 = vadd.f32 %v685, %v686
      %v688 = vld [vmem:[%s7] sm:$0xff]
      %v689 = vld [vmem:[%s7 + $0x8] sm:$0xff]
      %v691 = vsel %vm666, %v687, 0
      %693 = vmatpush.msra.mxu0 0.0
      %694 = vmatpush.msra.mxu0 0.0
      %695 = vmatpush.msra.mxu0 0.0
      %696 = vmatpush.msra.mxu0 0.0
      %697 = vmatpush.msra.mxu0 0.0
      %698 = vmatpush.msra.mxu0 0.0
      %699 = vmatpush.msra.mxu0 0.0
      %700 = vmatpush.msra.mxu0 0.0
      %701 = vmatpush.msra.mxu0 0.0
      %702 = vmatpush.msra.mxu0 0.0
      %703 = vmatpush.msra.mxu0 0.0
      %704 = vmatpush.msra.mxu0 0.0
      %705 = vmatpush.msra.mxu0 0.0
      %706 = vmatpush.msra.mxu0 0.0
      %707 = vmatpush.msra.mxu0 %v689
      %708 = vmatpush.msra.mxu0 %v688
      %709 = vmatmul.f32.gmra.mxu0 %v691
      %v710 = vpop.f32.mrf.mxu0
      %v711 = vadd.f32 0.0, %v710
      %712 = vdwg.mxu0
      %v713 = vmul.f32 %v658, %v658
      %v714 = vmul.f32 %v659, %v659
      %v715 = vmul.f32 %v660, %v660
      %v716 = vmul.f32 %v661, %v661
      %v717 = vmul.f32 %v662, %v662
      %v718 = vmul.f32 %v663, %v663
      %v719 = vmul.f32 %v664, %v664
      %v720 = vmul.f32 %v665, %v665
      %v721 = vsel %vm666, %v713, 0.0
      %v722 = vsel %vm666, %v714, 0.0
      %v723 = vadd.f32 %v721, %v722
      %v724 = vsel %vm666, %v715, 0.0
      %v725 = vadd.f32 %v723, %v724
      %v726 = vsel %vm666, %v716, 0.0
      %v727 = vadd.f32 %v725, %v726
      %v728 = vsel %vm666, %v717, 0.0
      %v729 = vadd.f32 %v727, %v728
      %v730 = vsel %vm666, %v718, 0.0
      %v731 = vadd.f32 %v729, %v730
      %v732 = vsel %vm666, %v719, 0.0
      %v733 = vadd.f32 %v731, %v732
      %v734 = vsel %vm666, %v720, 0.0
      %v735 = vadd.f32 %v733, %v734
      %v736 = vrot.slane %v735, 4
      %v737 = vadd.f32 %v735, %v736
      %v738 = vrot.slane %v737, 2
      %v739 = vadd.f32 %v737, %v738
      %v740 = vrot.slane %v739, 1
      %v741 = vadd.f32 %v739, %v740
      %v743 = vsel %vm666, %v741, 0
      %745 = vmatpush.msra.mxu0 0.0
      %746 = vmatpush.msra.mxu0 0.0
      %747 = vmatpush.msra.mxu0 0.0
      %748 = vmatpush.msra.mxu0 0.0
      %749 = vmatpush.msra.mxu0 0.0
      %750 = vmatpush.msra.mxu0 0.0
      %751 = vmatpush.msra.mxu0 0.0
      %752 = vmatpush.msra.mxu0 0.0
      %753 = vmatpush.msra.mxu0 0.0
      %754 = vmatpush.msra.mxu0 0.0
      %755 = vmatpush.msra.mxu0 0.0
      %756 = vmatpush.msra.mxu0 0.0
      %757 = vmatpush.msra.mxu0 0.0
      %758 = vmatpush.msra.mxu0 0.0
      %759 = vmatpush.msra.mxu0 %v689
      %760 = vmatpush.msra.mxu0 %v688
      %761 = vmatmul.f32.gmra.mxu0 %v743
      %v762 = vpop.f32.mrf.mxu0
      %v763 = vadd.f32 0.0, %v762
      %764 = vdwg.mxu0
      %v765 = vrcp.pop 128.0
      %v766 = vmul.f32 128.0, %v765
      %v767 = vsub.f32 1.0, %v766
      %v768 = vmul.f32 %v765, %v767
      %v769 = vadd.f32 %v765, %v768
      %vm770 = vweird.f32 %v765
      %v771 = vsel %vm770, %v765, %v769
      %v772 = vmul.f32 %v711, %v771
      %v773 = vmul.f32 %v763, %v771
      %v774 = vmul.f32 %v772, %v772
      %v775 = vsub.f32 %v773, %v774
      %v776 = vadd.f32 %v775, 1e-05
      %v777 = vrsqrt.pop %v776
      %v778 = vmul.f32 %v777, %v776
      %v779 = vmul.f32 %v778, %v777
      %v780 = vmul.f32 0.5, %v779
      %v781 = vsub.f32 1.5, %v780
      %v782 = vmul.f32 %v777, %v781
      %vm783 = vweird.f32 %v776
      %vm784 = vweird.f32 %v777
      %vm785 = vmor %vm783, %vm784
      %v786 = vsel %vm785, %v777, %v782
      %v787 = vld [vmem:[%s8] sm:$0xff]
      %vm788 = vcmask 64512
      %v790 = vsel %vm788, %v772, 0
      %792 = vmatpush.msra.mxu0 0.0
      %793 = vmatpush.msra.mxu0 0.0
      %794 = vmatpush.msra.mxu0 0.0
      %795 = vmatpush.msra.mxu0 0.0
      %796 = vmatpush.msra.mxu0 0.0
      %797 = vmatpush.msra.mxu0 0.0
      %798 = vmatpush.msra.mxu0 0.0
      %799 = vmatpush.msra.mxu0 0.0
      %800 = vmatpush.msra.mxu0 0.0
      %801 = vmatpush.msra.mxu0 0.0
      %802 = vmatpush.msra.mxu0 0.0
      %803 = vmatpush.msra.mxu0 0.0
      %804 = vmatpush.msra.mxu0 0.0
      %805 = vmatpush.msra.mxu0 0.0
      %806 = vmatpush.msra.mxu0 0.0
      %807 = vmatpush.msra.mxu0 %v787
      %808 = vmatmul.f32.gmra.mxu0 %v790
      %v809 = vpop.f32.mrf.mxu0
      %v810 = vadd.f32 0.0, %v809
      %811 = vdwg.mxu0
      %v813 = vsel %vm788, %v786, 0
      %815 = vmatpush.msra.mxu0 0.0
      %816 = vmatpush.msra.mxu0 0.0
      %817 = vmatpush.msra.mxu0 0.0
      %818 = vmatpush.msra.mxu0 0.0
      %819 = vmatpush.msra.mxu0 0.0
      %820 = vmatpush.msra.mxu0 0.0
      %821 = vmatpush.msra.mxu0 0.0
      %822 = vmatpush.msra.mxu0 0.0
      %823 = vmatpush.msra.mxu0 0.0
      %824 = vmatpush.msra.mxu0 0.0
      %825 = vmatpush.msra.mxu0 0.0
      %826 = vmatpush.msra.mxu0 0.0
      %827 = vmatpush.msra.mxu0 0.0
      %828 = vmatpush.msra.mxu0 0.0
      %829 = vmatpush.msra.mxu0 0.0
      %830 = vmatpush.msra.mxu0 %v787
      %831 = vmatmul.f32.gmra.mxu0 %v813
      %v832 = vpop.f32.mrf.mxu0
      %v833 = vadd.f32 0.0, %v832
      %834 = vdwg.mxu0
      %v835 = vperm.slane %v810, 0
      %v836 = vsub.f32 %v658, %v835
      %v837 = vsub.f32 %v659, %v835
      %v838 = vsub.f32 %v660, %v835
      %v839 = vsub.f32 %v661, %v835
      %v840 = vsub.f32 %v662, %v835
      %v841 = vsub.f32 %v663, %v835
      %v842 = vsub.f32 %v664, %v835
      %v843 = vsub.f32 %v665, %v835
      %v844 = vperm.slane %v833, 0
      %v845 = vmul.f32 %v836, %v844
      %v846 = vmul.f32 %v837, %v844
      %v847 = vmul.f32 %v838, %v844
      %v848 = vmul.f32 %v839, %v844
      %v849 = vmul.f32 %v840, %v844
      %v850 = vmul.f32 %v841, %v844
      %v851 = vmul.f32 %v842, %v844
      %v852 = vmul.f32 %v843, %v844
      %v853 = vld [vmem:[%s5] sm:$0x1]
      %v855 = vperm.slane %v853, 0
      %v857 = vmul.f32 %v845, %v855
      %v858 = vmul.f32 %v846, %v855
      %v859 = vmul.f32 %v847, %v855
      %v860 = vmul.f32 %v848, %v855
      %v861 = vmul.f32 %v849, %v855
      %v862 = vmul.f32 %v850, %v855
      %v863 = vmul.f32 %v851, %v855
      %v864 = vmul.f32 %v852, %v855
      %v865 = vld [vmem:[%s6] sm:$0x1]
      %v867 = vperm.slane %v865, 0
      %v869 = vadd.f32 %v857, %v867
      %v870 = vadd.f32 %v858, %v867
      %v871 = vadd.f32 %v859, %v867
      %v872 = vadd.f32 %v860, %v867
      %v873 = vadd.f32 %v861, %v867
      %v874 = vadd.f32 %v862, %v867
      %v875 = vadd.f32 %v863, %v867
      %v876 = vadd.f32 %v864, %v867
      %v877 = vsub.f32 0.0, %v869
      %v878 = vsub.f32 0.0, %v870
      %v879 = vsub.f32 0.0, %v871
      %v880 = vsub.f32 0.0, %v872
      %v881 = vsub.f32 0.0, %v873
      %v882 = vsub.f32 0.0, %v874
      %v883 = vsub.f32 0.0, %v875
      %v884 = vsub.f32 0.0, %v876
      %v885 = vmul.f32 %v877, 1.442695
      %v886 = vpow.pop %v885
      %v887 = vmul.f32 %v878, 1.442695
      %v888 = vpow.pop %v887
      %v889 = vmul.f32 %v879, 1.442695
      %v890 = vpow.pop %v889
      %v891 = vmul.f32 %v880, 1.442695
      %v892 = vpow.pop %v891
      %v893 = vmul.f32 %v881, 1.442695
      %v894 = vpow.pop %v893
      %v895 = vmul.f32 %v882, 1.442695
      %v896 = vpow.pop %v895
      %v897 = vmul.f32 %v883, 1.442695
      %v898 = vpow.pop %v897
      %v899 = vmul.f32 %v884, 1.442695
      %v900 = vpow.pop %v899
      %v901 = vadd.f32 %v886, 1.0
      %v902 = vadd.f32 %v888, 1.0
      %v903 = vadd.f32 %v890, 1.0
      %v904 = vadd.f32 %v892, 1.0
      %v905 = vadd.f32 %v894, 1.0
      %v906 = vadd.f32 %v896, 1.0
      %v907 = vadd.f32 %v898, 1.0
      %v908 = vadd.f32 %v900, 1.0
      %v909 = vrcp.pop %v901
      %v910 = vrcp.pop %v902
      %v911 = vrcp.pop %v903
      %v912 = vrcp.pop %v904
      %v913 = vrcp.pop %v905
      %v914 = vrcp.pop %v906
      %v915 = vrcp.pop %v907
      %v916 = vrcp.pop %v908
      %v917 = vmul.f32 %v869, %v909
      %v918 = vmul.f32 %v870, %v910
      %v919 = vmul.f32 %v871, %v911
      %v920 = vmul.f32 %v872, %v912
      %v921 = vmul.f32 %v873, %v913
      %v922 = vmul.f32 %v874, %v914
      %v923 = vmul.f32 %v875, %v915
      %v924 = vmul.f32 %v876, %v916
      %925 = vst.msk [vmem:[%s367] sm:$0xff] %vm666, %v917
      %926 = vst.msk [vmem:[%s367 + $0x8] sm:$0xff] %vm666, %v918
      %927 = vst.msk [vmem:[%s367 + $0x10] sm:$0xff] %vm666, %v919
      %928 = vst.msk [vmem:[%s367 + $0x18] sm:$0xff] %vm666, %v920
      %929 = vst.msk [vmem:[%s367 + $0x20] sm:$0xff] %vm666, %v921
      %930 = vst.msk [vmem:[%s367 + $0x28] sm:$0xff] %vm666, %v922
      %931 = vst.msk [vmem:[%s367 + $0x30] sm:$0xff] %vm666, %v923
      %932 = vst.msk [vmem:[%s367 + $0x38] sm:$0xff] %vm666, %v924
      %933 = vst.msk [vmem:[%s372] sm:$0xff] %vm666, %v541
      %934 = vst.msk [vmem:[%s372 + $0x8] sm:$0xff] %vm666, %v544
      %935 = vst.msk [vmem:[%s372 + $0x10] sm:$0xff] %vm666, %v547
      %936 = vst.msk [vmem:[%s372 + $0x18] sm:$0xff] %vm666, %v550
      %937 = vst.msk [vmem:[%s372 + $0x20] sm:$0xff] %vm666, %v553
      %938 = vst.msk [vmem:[%s372 + $0x28] sm:$0xff] %vm666, %v556
      %939 = vst.msk [vmem:[%s372 + $0x30] sm:$0xff] %vm666, %v559
      %940 = vst.msk [vmem:[%s372 + $0x38] sm:$0xff] %vm666, %v562
      %p941 = scmp.lt.s32.totalorder %s22, 1
      %s942 = scalar_select %p941, %s22, 1
      %s943 = smul.addr %s942, 8
      %s944 = smul.addr %s943, 8
      %s945 = scalar_lea.vmem %s9, %s944
      %p946 = scmp.lt.s32.totalorder %s22, 1
      %s947 = scalar_select %p946, %s22, 1
      %s948 = smul.addr %s947, 8
      %s949 = smul.addr %s948, 8
      %s950 = scalar_lea.vmem %s10, %s949
      // Predicated region
      $region57: #{dec_block_forward.5} parent=55 // pred_check
        %p951 = pneg %p234
      $region58: #{dec_block_forward.5} parent=55 // pred_check_branch
        %953 = sbr.rel (%p951) target = $region60
      $region59: #{dec_block_forward.5} parent=55 // pred_region
        _
      $region60: #{dec_block_forward.5} parent=55 // pred_fallthru
        _
      // Predicated region
      $region61: #{dec_block_forward.5} parent=55 // pred_check
        %p954 = pneg %p260
      $region62: #{dec_block_forward.5} parent=55 // pred_check_branch
        %956 = sbr.rel (%p954) target = $region64
      $region63: #{dec_block_forward.5} parent=55 // pred_region
        _
      $region64: #{dec_block_forward.5} parent=55 // pred_fallthru
        _
    $region56: #{dec_block_forward.5} parent=5 // pred_fallthru
      _
    %p957 = scmp.le.s32.totalorder 2, %s17
    // Predicated region
    $region65: #{dec_block_forward.5} parent=5 // pred_check
      %p958 = pneg %p957
    $region66: #{dec_block_forward.5} parent=5 // pred_check_branch
      %960 = sbr.rel (%p958) target = $region68
    $region67: #{dec_block_forward.5} parent=5 // pred_region
      %s961 = ssub.s32 %s17, 2
      // Predicated region
      $region69: #{dec_block_forward.5} parent=67 // pred_check
        %p962 = pneg %p240
      $region70: #{dec_block_forward.5} parent=67 // pred_check_branch
        %964 = sbr.rel (%p962) target = $region72
      $region71: #{dec_block_forward.5} parent=67 // pred_region
        %p965 = scmp.lt.s32.totalorder %s23, 1
        %s966 = scalar_select %p965, %s23, 1
        %s967 = smul.addr %s966, 8
        %s968 = smul.addr %s967, 8
        %s969 = scalar_lea.vmem %s9, %s968
      $region72: #{dec_block_forward.5} parent=67 // pred_fallthru
        _
      // Predicated region
      $region73: #{dec_block_forward.5} parent=67 // pred_check
        %p970 = pneg %p266
      $region74: #{dec_block_forward.5} parent=67 // pred_check_branch
        %972 = sbr.rel (%p970) target = $region76
      $region75: #{dec_block_forward.5} parent=67 // pred_region
        %p973 = scmp.lt.s32.totalorder %s23, 1
        %s974 = scalar_select %p973, %s23, 1
        %s975 = smul.addr %s974, 8
        %s976 = smul.addr %s975, 8
        %s977 = scalar_lea.vmem %s10, %s976
      $region76: #{dec_block_forward.5} parent=67 // pred_fallthru
        _
    $region68: #{dec_block_forward.5} parent=5 // pred_fallthru
      _
  $region6: #{dec_block_forward.5} parent=0 // loop_footer
    %s21 = sadd.s32 1, %s17
  $region7: #{dec_block_forward.5} parent=0 // loop_footer_branch
    %16 = sbr.rel target = $region3
  $region8: #{dec_block_forward.5} parent=0 // loop_exit
    _

// kernel: dec_block_forward.9
$region0: #{dec_block_forward.9}
  #allocation0 [shape = 'u32[]', space=smem, size = 0x4, offset = 0x4, fixed_abs, tag = 'smem constant byte address 0x4 - core index']
  #allocation1 [shape = 'u32[72,128]{1,0:T(1,128)}', space=vmem, size = 0x9000, scoped, tag = 'internal scratch']
  %s0 = inlined_call_operand.vmem [shape: f32[2,64,16], index: 0, kind: input, shape index: {}]
  %s1 = inlined_call_operand.vmem [shape: f32[1,16], index: 1, kind: input, shape index: {}]
  %s2 = inlined_call_operand.vmem [shape: f32[1,16], index: 2, kind: input, shape index: {}]
  %s3 = inlined_call_operand.vmem [shape: f32[4,16,32], index: 3, kind: input, shape index: {}]
  %s4 = inlined_call_operand.vmem [shape: f32[4,16,32], index: 4, kind: input, shape index: {}]
  %s5 = inlined_call_operand.vmem [shape: f32[4,16,32], index: 5, kind: input, shape index: {}]
  %s6 = inlined_call_operand.vmem [shape: f32[4,32,16], index: 6, kind: input, shape index: {}]
  %s7 = inlined_call_operand.vmem [shape: f32[1,16], index: 7, kind: input, shape index: {}]
  %s8 = inlined_call_operand.vmem [shape: f32[1,16], index: 8, kind: input, shape index: {}]
  %s9 = inlined_call_operand.vmem [shape: f32[1,16], index: 9, kind: input, shape index: {}]
  %s10 = inlined_call_operand.vmem [shape: f32[16,8], index: 10, kind: input, shape index: {}]
  %s11 = inlined_call_operand.vmem [shape: f32[1,8], index: 11, kind: input, shape index: {}]
  %s12 = inlined_call_operand.vmem [shape: f32[2,64,8], index: 12, kind: output, shape index: {}]
  %s13 = sld [smem:[#allocation0]]
  $region81: #{dec_block_forward.9} parent=0
    _
  %s15 = ssub.s32 1, %s13
  %s16 = scalar_select 0, %s15, %s13
  loop: start=0, step=1, limit=4
  $region2: #{dec_block_forward.9} parent=0 // loop_pre_header
    _
  $region3: #{dec_block_forward.9} parent=0 // loop_header
    %s18 = sphi 0, %s22
    %p19 = scmp.ge.s32.totalorder %s18, 4
    %s28 = sphi 0, %s30
    %s31 = sphi 0, %s28
    %s32 = sphi 0, %s31
    %s48 = sphi 0, %s32
    %s52 = sphi 0, %s52
    %s54 = sphi 0, %s52
    %s55 = sphi 0, %s54
    %s69 = sphi 0, %s55
    %s73 = sphi 0, %s73
    %s75 = sphi 0, %s73
    %s76 = sphi 0, %s75
    %s90 = sphi 0, %s76
    %s94 = sphi 0, %s94
    %s96 = sphi 0, %s94
    %s97 = sphi 0, %s96
    %s111 = sphi 0, %s97
    %s115 = sphi 0, %s115
    %s117 = sphi 0, %s115
    %s118 = sphi 0, %s117
    %s132 = sphi 0, %s118
    %s136 = sphi 0, %s136
    %s138 = sphi 0, %s136
    %s139 = sphi 0, %s138
    %s153 = sphi 0, %s139
    %s157 = sphi 0, %s157
    %s159 = sphi 0, %s157
    %s160 = sphi 0, %s159
    %s174 = sphi 0, %s160
    %s178 = sphi 0, %s178
    %s180 = sphi 0, %s178
    %s181 = sphi 0, %s180
    %s195 = sphi 0, %s181
    %s199 = sphi 0, %s199
    %s201 = sphi 0, %s199
    %s202 = sphi 0, %s201
    %s216 = sphi 0, %s202
    %s220 = sphi 0, %s220
    %s222 = sphi 0, %s220
    %s223 = sphi 0, %s222
    %s237 = sphi 0, %s223
    %s241 = sphi 0, %s241
    %s243 = sphi 0, %s241
    %s244 = sphi 0, %s243
    %s258 = sphi 0, %s244
    %s262 = sphi 0, %s262
    %s264 = sphi 0, %s262
    %s265 = sphi 0, %s264
    %s279 = sphi 0, %s265
    %s285 = sphi 0, %s287
    %s288 = sphi 0, %s285
    %s289 = sphi 0, %s288
    %s305 = sphi 0, %s289
  $region4: #{dec_block_forward.9} parent=0 // loop_header_branch
    %21 = sbr.rel (%p19) target = $region8
  $region5: #{dec_block_forward.9} parent=0 // loop_body
    %s23 = ssub.s32 %s18, 1
    %s24 = ssub.s32 %s18, 2
    %s25 = sadd.s32 %s18, 1
    %s26 = ssub.s32 %s18, %s25
    %p27 = scmp.eq.s32.totalorder %s26, 0
    %s29 = sadd.s32 %s28, 1
    %s30 = scalar_select %p27, %s28, %s29
    %p33 = pneg %p27
    %p34 = scmp.eq.s32.totalorder %s18, 1
    %p35 = por %p33, %p34
    %p36 = scmp.ne.s32.totalorder %s28, %s31
    %p37 = scmp.eq.s32.totalorder %s18, 0
    %p38 = por %p36, %p37
    %p39 = scmp.ne.s32.totalorder %s28, %s31
    %p40 = scmp.eq.s32.totalorder %s23, 1
    %p41 = por %p39, %p40
    %p42 = scmp.ne.s32.totalorder %s31, %s32
    %p43 = scmp.eq.s32.totalorder %s23, 0
    %p44 = por %p42, %p43
    %p45 = scmp.ne.s32.totalorder %s31, %s32
    %p46 = scmp.eq.s32.totalorder %s24, 1
    %p47 = por %p45, %p46
    %p49 = scmp.ne.s32.totalorder %s32, %s48
    %p50 = scmp.eq.s32.totalorder %s24, 0
    %p51 = por %p49, %p50
    %s53 = sadd.s32 %s52, 1
    %p56 = scmp.eq.s32.totalorder %s18, 1
    %p57 = scmp.ne.s32.totalorder %s52, %s54
    %p58 = scmp.eq.s32.totalorder %s18, 0
    %p59 = por %p57, %p58
    %p60 = scmp.ne.s32.totalorder %s52, %s54
    %p61 = scmp.eq.s32.totalorder %s23, 1
    %p62 = por %p60, %p61
    %p63 = scmp.ne.s32.totalorder %s54, %s55
    %p64 = scmp.eq.s32.totalorder %s23, 0
    %p65 = por %p63, %p64
    %p66 = scmp.ne.s32.totalorder %s54, %s55
    %p67 = scmp.eq.s32.totalorder %s24, 1
    %p68 = por %p66, %p67
    %p70 = scmp.ne.s32.totalorder %s55, %s69
    %p71 = scmp.eq.s32.totalorder %s24, 0
    %p72 = por %p70, %p71
    %s74 = sadd.s32 %s73, 1
    %p77 = scmp.eq.s32.totalorder %s18, 1
    %p78 = scmp.ne.s32.totalorder %s73, %s75
    %p79 = scmp.eq.s32.totalorder %s18, 0
    %p80 = por %p78, %p79
    %p81 = scmp.ne.s32.totalorder %s73, %s75
    %p82 = scmp.eq.s32.totalorder %s23, 1
    %p83 = por %p81, %p82
    %p84 = scmp.ne.s32.totalorder %s75, %s76
    %p85 = scmp.eq.s32.totalorder %s23, 0
    %p86 = por %p84, %p85
    %p87 = scmp.ne.s32.totalorder %s75, %s76
    %p88 = scmp.eq.s32.totalorder %s24, 1
    %p89 = por %p87, %p88
    %p91 = scmp.ne.s32.totalorder %s76, %s90
    %p92 = scmp.eq.s32.totalorder %s24, 0
    %p93 = por %p91, %p92
    %s95 = sadd.s32 %s94, 1
    %p98 = scmp.eq.s32.totalorder %s18, 1
    %p99 = scmp.ne.s32.totalorder %s94, %s96
    %p100 = scmp.eq.s32.totalorder %s18, 0
    %p101 = por %p99, %p100
    %p102 = scmp.ne.s32.totalorder %s94, %s96
    %p103 = scmp.eq.s32.totalorder %s23, 1
    %p104 = por %p102, %p103
    %p105 = scmp.ne.s32.totalorder %s96, %s97
    %p106 = scmp.eq.s32.totalorder %s23, 0
    %p107 = por %p105, %p106
    %p108 = scmp.ne.s32.totalorder %s96, %s97
    %p109 = scmp.eq.s32.totalorder %s24, 1
    %p110 = por %p108, %p109
    %p112 = scmp.ne.s32.totalorder %s97, %s111
    %p113 = scmp.eq.s32.totalorder %s24, 0
    %p114 = por %p112, %p113
    %s116 = sadd.s32 %s115, 1
    %p119 = scmp.eq.s32.totalorder %s18, 1
    %p120 = scmp.ne.s32.totalorder %s115, %s117
    %p121 = scmp.eq.s32.totalorder %s18, 0
    %p122 = por %p120, %p121
    %p123 = scmp.ne.s32.totalorder %s115, %s117
    %p124 = scmp.eq.s32.totalorder %s23, 1
    %p125 = por %p123, %p124
    %p126 = scmp.ne.s32.totalorder %s117, %s118
    %p127 = scmp.eq.s32.totalorder %s23, 0
    %p128 = por %p126, %p127
    %p129 = scmp.ne.s32.totalorder %s117, %s118
    %p130 = scmp.eq.s32.totalorder %s24, 1
    %p131 = por %p129, %p130
    %p133 = scmp.ne.s32.totalorder %s118, %s132
    %p134 = scmp.eq.s32.totalorder %s24, 0
    %p135 = por %p133, %p134
    %s137 = sadd.s32 %s136, 1
    %p140 = scmp.eq.s32.totalorder %s18, 1
    %p141 = scmp.ne.s32.totalorder %s136, %s138
    %p142 = scmp.eq.s32.totalorder %s18, 0
    %p143 = por %p141, %p142
    %p144 = scmp.ne.s32.totalorder %s136, %s138
    %p145 = scmp.eq.s32.totalorder %s23, 1
    %p146 = por %p144, %p145
    %p147 = scmp.ne.s32.totalorder %s138, %s139
    %p148 = scmp.eq.s32.totalorder %s23, 0
    %p149 = por %p147, %p148
    %p150 = scmp.ne.s32.totalorder %s138, %s139
    %p151 = scmp.eq.s32.totalorder %s24, 1
    %p152 = por %p150, %p151
    %p154 = scmp.ne.s32.totalorder %s139, %s153
    %p155 = scmp.eq.s32.totalorder %s24, 0
    %p156 = por %p154, %p155
    %s158 = sadd.s32 %s157, 1
    %p161 = scmp.eq.s32.totalorder %s18, 1
    %p162 = scmp.ne.s32.totalorder %s157, %s159
    %p163 = scmp.eq.s32.totalorder %s18, 0
    %p164 = por %p162, %p163
    %p165 = scmp.ne.s32.totalorder %s157, %s159
    %p166 = scmp.eq.s32.totalorder %s23, 1
    %p167 = por %p165, %p166
    %p168 = scmp.ne.s32.totalorder %s159, %s160
    %p169 = scmp.eq.s32.totalorder %s23, 0
    %p170 = por %p168, %p169
    %p171 = scmp.ne.s32.totalorder %s159, %s160
    %p172 = scmp.eq.s32.totalorder %s24, 1
    %p173 = por %p171, %p172
    %p175 = scmp.ne.s32.totalorder %s160, %s174
    %p176 = scmp.eq.s32.totalorder %s24, 0
    %p177 = por %p175, %p176
    %s179 = sadd.s32 %s178, 1
    %p182 = scmp.eq.s32.totalorder %s18, 1
    %p183 = scmp.ne.s32.totalorder %s178, %s180
    %p184 = scmp.eq.s32.totalorder %s18, 0
    %p185 = por %p183, %p184
    %p186 = scmp.ne.s32.totalorder %s178, %s180
    %p187 = scmp.eq.s32.totalorder %s23, 1
    %p188 = por %p186, %p187
    %p189 = scmp.ne.s32.totalorder %s180, %s181
    %p190 = scmp.eq.s32.totalorder %s23, 0
    %p191 = por %p189, %p190
    %p192 = scmp.ne.s32.totalorder %s180, %s181
    %p193 = scmp.eq.s32.totalorder %s24, 1
    %p194 = por %p192, %p193
    %p196 = scmp.ne.s32.totalorder %s181, %s195
    %p197 = scmp.eq.s32.totalorder %s24, 0
    %p198 = por %p196, %p197
    %s200 = sadd.s32 %s199, 1
    %p203 = scmp.eq.s32.totalorder %s18, 1
    %p204 = scmp.ne.s32.totalorder %s199, %s201
    %p205 = scmp.eq.s32.totalorder %s18, 0
    %p206 = por %p204, %p205
    %p207 = scmp.ne.s32.totalorder %s199, %s201
    %p208 = scmp.eq.s32.totalorder %s23, 1
    %p209 = por %p207, %p208
    %p210 = scmp.ne.s32.totalorder %s201, %s202
    %p211 = scmp.eq.s32.totalorder %s23, 0
    %p212 = por %p210, %p211
    %p213 = scmp.ne.s32.totalorder %s201, %s202
    %p214 = scmp.eq.s32.totalorder %s24, 1
    %p215 = por %p213, %p214
    %p217 = scmp.ne.s32.totalorder %s202, %s216
    %p218 = scmp.eq.s32.totalorder %s24, 0
    %p219 = por %p217, %p218
    %s221 = sadd.s32 %s220, 1
    %p224 = scmp.eq.s32.totalorder %s18, 1
    %p225 = scmp.ne.s32.totalorder %s220, %s222
    %p226 = scmp.eq.s32.totalorder %s18, 0
    %p227 = por %p225, %p226
    %p228 = scmp.ne.s32.totalorder %s220, %s222
    %p229 = scmp.eq.s32.totalorder %s23, 1
    %p230 = por %p228, %p229
    %p231 = scmp.ne.s32.totalorder %s222, %s223
    %p232 = scmp.eq.s32.totalorder %s23, 0
    %p233 = por %p231, %p232
    %p234 = scmp.ne.s32.totalorder %s222, %s223
    %p235 = scmp.eq.s32.totalorder %s24, 1
    %p236 = por %p234, %p235
    %p238 = scmp.ne.s32.totalorder %s223, %s237
    %p239 = scmp.eq.s32.totalorder %s24, 0
    %p240 = por %p238, %p239
    %s242 = sadd.s32 %s241, 1
    %p245 = scmp.eq.s32.totalorder %s18, 1
    %p246 = scmp.ne.s32.totalorder %s241, %s243
    %p247 = scmp.eq.s32.totalorder %s18, 0
    %p248 = por %p246, %p247
    %p249 = scmp.ne.s32.totalorder %s241, %s243
    %p250 = scmp.eq.s32.totalorder %s23, 1
    %p251 = por %p249, %p250
    %p252 = scmp.ne.s32.totalorder %s243, %s244
    %p253 = scmp.eq.s32.totalorder %s23, 0
    %p254 = por %p252, %p253
    %p255 = scmp.ne.s32.totalorder %s243, %s244
    %p256 = scmp.eq.s32.totalorder %s24, 1
    %p257 = por %p255, %p256
    %p259 = scmp.ne.s32.totalorder %s244, %s258
    %p260 = scmp.eq.s32.totalorder %s24, 0
    %p261 = por %p259, %p260
    %s263 = sadd.s32 %s262, 1
    %p266 = scmp.eq.s32.totalorder %s18, 1
    %p267 = scmp.ne.s32.totalorder %s262, %s264
    %p268 = scmp.eq.s32.totalorder %s18, 0
    %p269 = por %p267, %p268
    %p270 = scmp.ne.s32.totalorder %s262, %s264
    %p271 = scmp.eq.s32.totalorder %s23, 1
    %p272 = por %p270, %p271
    %p273 = scmp.ne.s32.totalorder %s264, %s265
    %p274 = scmp.eq.s32.totalorder %s23, 0
    %p275 = por %p273, %p274
    %p276 = scmp.ne.s32.totalorder %s264, %s265
    %p277 = scmp.eq.s32.totalorder %s24, 1
    %p278 = por %p276, %p277
    %p280 = scmp.ne.s32.totalorder %s265, %s279
    %p281 = scmp.eq.s32.totalorder %s24, 0
    %p282 = por %p280, %p281
    %s283 = ssub.s32 %s18, %s25
    %p284 = scmp.eq.s32.totalorder %s283, 0
    %s286 = sadd.s32 %s285, 1
    %s287 = scalar_select %p284, %s285, %s286
    %p290 = pneg %p284
    %p291 = scmp.eq.s32.totalorder %s18, 1
    %p292 = por %p290, %p291
    %p293 = scmp.ne.s32.totalorder %s285, %s288
    %p294 = scmp.eq.s32.totalorder %s18, 0
    %p295 = por %p293, %p294
    %p296 = scmp.ne.s32.totalorder %s285, %s288
    %p297 = scmp.eq.s32.totalorder %s23, 1
    %p298 = por %p296, %p297
    %p299 = scmp.ne.s32.totalorder %s288, %s289
    %p300 = scmp.eq.s32.totalorder %s23, 0
    %p301 = por %p299, %p300
    %p302 = scmp.ne.s32.totalorder %s288, %s289
    %p303 = scmp.eq.s32.totalorder %s24, 1
    %p304 = por %p302, %p303
    %p306 = scmp.ne.s32.totalorder %s289, %s305
    %p307 = scmp.eq.s32.totalorder %s24, 0
    %p308 = por %p306, %p307
    %p309 = scmp.le.s32.totalorder 1, %s18
    %p310 = scmp.lt.s32.totalorder %s18, 3
    %p311 = pnand %p309, %p310
    %p312 = pneg %p311
    // Predicated region
    $region9: #{dec_block_forward.9} parent=5 // pred_check
      _
    $region10: #{dec_block_forward.9} parent=5 // pred_check_branch
      %314 = sbr.rel (%p311) target = $region12
    $region11: #{dec_block_forward.9} parent=5 // pred_region
      %s315 = ssub.s32 %s18, 1
      // Predicated region
      $region13: #{dec_block_forward.9} parent=11 // pred_check
        %p316 = pneg %p65
      $region14: #{dec_block_forward.9} parent=11 // pred_check_branch
        %318 = sbr.rel (%p316) target = $region16
      $region15: #{dec_block_forward.9} parent=11 // pred_region
        _
      $region16: #{dec_block_forward.9} parent=11 // pred_fallthru
        _
      // Predicated region
      $region17: #{dec_block_forward.9} parent=11 // pred_check
        %p319 = pneg %p86
      $region18: #{dec_block_forward.9} parent=11 // pred_check_branch
        %321 = sbr.rel (%p319) target = $region20
      $region19: #{dec_block_forward.9} parent=11 // pred_region
        _
      $region20: #{dec_block_forward.9} parent=11 // pred_fallthru
        _
      // Predicated region
      $region21: #{dec_block_forward.9} parent=11 // pred_check
        %p322 = pneg %p107
      $region22: #{dec_block_forward.9} parent=11 // pred_check_branch
        %324 = sbr.rel (%p322) target = $region24
      $region23: #{dec_block_forward.9} parent=11 // pred_region
        _
      $region24: #{dec_block_forward.9} parent=11 // pred_fallthru
        _
      // Predicated region
      $region25: #{dec_block_forward.9} parent=11 // pred_check
        %p325 = pneg %p128
      $region26: #{dec_block_forward.9} parent=11 // pred_check_branch
        %327 = sbr.rel (%p325) target = $region28
      $region27: #{dec_block_forward.9} parent=11 // pred_region
        _
      $region28: #{dec_block_forward.9} parent=11 // pred_fallthru
        _
      // Predicated region
      $region29: #{dec_block_forward.9} parent=11 // pred_check
        %p328 = pneg %p149
      $region30: #{dec_block_forward.9} parent=11 // pred_check_branch
        %330 = sbr.rel (%p328) target = $region32
      $region31: #{dec_block_forward.9} parent=11 // pred_region
        _
      $region32: #{dec_block_forward.9} parent=11 // pred_fallthru
        _
      // Predicated region
      $region33: #{dec_block_forward.9} parent=11 // pred_check
        %p331 = pneg %p170
      $region34: #{dec_block_forward.9} parent=11 // pred_check_branch
        %333 = sbr.rel (%p331) target = $region36
      $region35: #{dec_block_forward.9} parent=11 // pred_region
        _
      $region36: #{dec_block_forward.9} parent=11 // pred_fallthru
        _
      // Predicated region
      $region37: #{dec_block_forward.9} parent=11 // pred_check
        %p334 = pneg %p191
      $region38: #{dec_block_forward.9} parent=11 // pred_check_branch
        %336 = sbr.rel (%p334) target = $region40
      $region39: #{dec_block_forward.9} parent=11 // pred_region
        _
      $region40: #{dec_block_forward.9} parent=11 // pred_fallthru
        _
      // Predicated region
      $region41: #{dec_block_forward.9} parent=11 // pred_check
        %p337 = pneg %p212
      $region42: #{dec_block_forward.9} parent=11 // pred_check_branch
        %339 = sbr.rel (%p337) target = $region44
      $region43: #{dec_block_forward.9} parent=11 // pred_region
        _
      $region44: #{dec_block_forward.9} parent=11 // pred_fallthru
        _
      // Predicated region
      $region45: #{dec_block_forward.9} parent=11 // pred_check
        %p340 = pneg %p233
      $region46: #{dec_block_forward.9} parent=11 // pred_check_branch
        %342 = sbr.rel (%p340) target = $region48
      $region47: #{dec_block_forward.9} parent=11 // pred_region
        _
      $region48: #{dec_block_forward.9} parent=11 // pred_fallthru
        _
      // Predicated region
      $region49: #{dec_block_forward.9} parent=11 // pred_check
        %p343 = pneg %p254
      $region50: #{dec_block_forward.9} parent=11 // pred_check_branch
        %345 = sbr.rel (%p343) target = $region52
      $region51: #{dec_block_forward.9} parent=11 // pred_region
        _
      $region52: #{dec_block_forward.9} parent=11 // pred_fallthru
        _
      // Predicated region
      $region53: #{dec_block_forward.9} parent=11 // pred_check
        %p346 = pneg %p275
      $region54: #{dec_block_forward.9} parent=11 // pred_check_branch
        %348 = sbr.rel (%p346) target = $region56
      $region55: #{dec_block_forward.9} parent=11 // pred_region
        _
      $region56: #{dec_block_forward.9} parent=11 // pred_fallthru
        _
    $region12: #{dec_block_forward.9} parent=5 // pred_fallthru
      _
    %p349 = scmp.lt.s32.totalorder %s18, 2
    // Predicated region
    $region57: #{dec_block_forward.9} parent=5 // pred_check
      %p350 = pneg %p349
    $region58: #{dec_block_forward.9} parent=5 // pred_check_branch
      %352 = sbr.rel (%p350) target = $region60
    $region59: #{dec_block_forward.9} parent=5 // pred_region
      // Predicated region
      $region61: #{dec_block_forward.9} parent=59 // pred_check
        %p353 = pneg %p38
      $region62: #{dec_block_forward.9} parent=59 // pred_check_branch
        %355 = sbr.rel (%p353) target = $region64
      $region63: #{dec_block_forward.9} parent=59 // pred_region
        %p356 = scmp.lt.s32.totalorder %s18, 1
        %s357 = scalar_select %p356, %s18, 1
        %s358 = smul.addr %s357, 8
        %s359 = smul.addr %s358, 8
        %s360 = scalar_lea.vmem %s0, %s359
      $region64: #{dec_block_forward.9} parent=59 // pred_fallthru
        _
    $region60: #{dec_block_forward.9} parent=5 // pred_fallthru
      _
    %p361 = scmp.le.s32.totalorder 1, %s18
    %p362 = scmp.lt.s32.totalorder %s18, 3
    %p363 = pnand %p361, %p362
    %p364 = pneg %p363
    // Predicated region
    $region65: #{dec_block_forward.9} parent=5 // pred_check
      _
    $region66: #{dec_block_forward.9} parent=5 // pred_check_branch
      %366 = sbr.rel (%p363) target = $region68
    $region67: #{dec_block_forward.9} parent=5 // pred_region
      %s367 = ssub.s32 %s18, 1
      %p368 = scmp.lt.s32.totalorder %s23, 1
      %s369 = scalar_select %p368, %s23, 1
      %s370 = smul.addr %s369, 8
      %s371 = smul.addr %s370, 8
      %s372 = scalar_lea.vmem %s0, %s371
      %p373 = pneg %p44
      %p374 = pneg %p41
      %p375 = pneg %p65
      %p376 = pneg %p62
      %p377 = pneg %p86
      %p378 = pneg %p83
      %p379 = pneg %p107
      %p380 = pneg %p104
      %p381 = pneg %p128
      %p382 = pneg %p125
      %p383 = pneg %p149
      %p384 = pneg %p146
      %p385 = pneg %p170
      %p386 = pneg %p167
      %p387 = pneg %p191
      %p388 = pneg %p188
      %p389 = pneg %p212
      %p390 = pneg %p209
      %p391 = pneg %p233
      %p392 = pneg %p230
      %p393 = pneg %p254
      %p394 = pneg %p251
      %p395 = pneg %p275
      %p396 = pneg %p272
      %p397 = pneg %p301
      %p398 = pneg %p298
      %p399 = scmp.lt.s32.totalorder %s23, 1
      %s400 = scalar_select %p399, %s23, 1
      %s401 = smul.addr %s400, 8
      %s402 = smul.addr %s401, 8
      %s403 = scalar_lea.vmem %s12, %s402
      %p404 = scmp.lt.s32.totalorder %s23, 1
      %s405 = scalar_select %p404, %s23, 1
      %s406 = smul.addr %s405, 8
      %s407 = smul.addr %s406, 8
      %s408 = scalar_lea.vmem %s0, %s407
      %p409 = scmp.lt.s32.totalorder %s23, 1
      %s410 = scalar_select %p409, %s23, 1
      %s411 = smul.addr %s410, 8
      %s412 = smul.addr %s411, 8
      %s413 = scalar_lea.vmem %s12, %s412
      %v414 = vld [vmem:[%s408] sm:$0xff]
      %v415 = vld [vmem:[%s408 + $0x8] sm:$0xff]
      %v416 = vld [vmem:[%s408 + $0x10] sm:$0xff]
      %v417 = vld [vmem:[%s408 + $0x18] sm:$0xff]
      %v418 = vld [vmem:[%s408 + $0x20] sm:$0xff]
      %v419 = vld [vmem:[%s408 + $0x28] sm:$0xff]
      %v420 = vld [vmem:[%s408 + $0x30] sm:$0xff]
      %v421 = vld [vmem:[%s408 + $0x38] sm:$0xff]
      %v422 = vld [vmem:[%s1] sm:$0x1]
      %v423 = vld [vmem:[%s2] sm:$0x1]
      %vm424 = vcmask 130048
      %v425 = vsel %vm424, %v414, 0.0
      %v426 = vsel %vm424, %v415, 0.0
      %v427 = vadd.f32 %v425, %v426
      %v428 = vsel %vm424, %v416, 0.0
      %v429 = vadd.f32 %v427, %v428
      %v430 = vsel %vm424, %v417, 0.0
      %v431 = vadd.f32 %v429, %v430
      %v432 = vsel %vm424, %v418, 0.0
      %v433 = vadd.f32 %v431, %v432
      %v434 = vsel %vm424, %v419, 0.0
      %v435 = vadd.f32 %v433, %v434
      %v436 = vsel %vm424, %v420, 0.0
      %v437 = vadd.f32 %v435, %v436
      %v438 = vsel %vm424, %v421, 0.0
      %v439 = vadd.f32 %v437, %v438
      %v440 = vrot.slane %v439, 4
      %v441 = vadd.f32 %v439, %v440
      %v442 = vrot.slane %v441, 2
      %v443 = vadd.f32 %v441, %v442
      %v444 = vrot.slane %v443, 1
      %v445 = vadd.f32 %v443, %v444
      %v446 = vsel %vm424, %v445, 0.0
      %447 = vadd.xlane.f32.xlu0 %v446
      %v448 = vpop.xlane.xlu0 %447
      %v449 = vmul.f32 %v414, %v414
      %v450 = vmul.f32 %v415, %v415
      %v451 = vmul.f32 %v416, %v416
      %v452 = vmul.f32 %v417, %v417
      %v453 = vmul.f32 %v418, %v418
      %v454 = vmul.f32 %v419, %v419
      %v455 = vmul.f32 %v420, %v420
      %v456 = vmul.f32 %v421, %v421
      %v457 = vsel %vm424, %v449, 0.0
      %v458 = vsel %vm424, %v450, 0.0
      %v459 = vadd.f32 %v457, %v458
      %v460 = vsel %vm424, %v451, 0.0
      %v461 = vadd.f32 %v459, %v460
      %v462 = vsel %vm424, %v452, 0.0
      %v463 = vadd.f32 %v461, %v462
      %v464 = vsel %vm424, %v453, 0.0
      %v465 = vadd.f32 %v463, %v464
      %v466 = vsel %vm424, %v454, 0.0
      %v467 = vadd.f32 %v465, %v466
      %v468 = vsel %vm424, %v455, 0.0
      %v469 = vadd.f32 %v467, %v468
      %v470 = vsel %vm424, %v456, 0.0
      %v471 = vadd.f32 %v469, %v470
      %v472 = vrot.slane %v471, 4
      %v473 = vadd.f32 %v471, %v472
      %v474 = vrot.slane %v473, 2
      %v475 = vadd.f32 %v473, %v474
      %v476 = vrot.slane %v475, 1
      %v477 = vadd.f32 %v475, %v476
      %v478 = vsel %vm424, %v477, 0.0
      %479 = vadd.xlane.f32.xlu0 %v478
      %v480 = vpop.xlane.xlu0 %479
      %v481 = vrcp.pop 1024.0
      %v482 = vmul.f32 1024.0, %v481
      %v483 = vsub.f32 1.0, %v482
      %v484 = vmul.f32 %v481, %v483
      %v485 = vadd.f32 %v481, %v484
      %vm486 = vweird.f32 %v481
      %v487 = vsel %vm486, %v481, %v485
      %v488 = vmul.f32 %v448, %v487
      %v489 = vmul.f32 %v480, %v487
      %v490 = vmul.f32 %v488, %v488
      %v491 = vsub.f32 %v489, %v490
      %v492 = vsub.f32 %v414, %v488
      %v493 = vsub.f32 %v415, %v488
      %v494 = vsub.f32 %v416, %v488
      %v495 = vsub.f32 %v417, %v488
      %v496 = vsub.f32 %v418, %v488
      %v497 = vsub.f32 %v419, %v488
      %v498 = vsub.f32 %v420, %v488
      %v499 = vsub.f32 %v421, %v488
      %v500 = vadd.f32 %v491, 1e-05
      %v501 = vrsqrt.pop %v500
      %v502 = vmul.f32 %v501, %v500
      %v503 = vmul.f32 %v502, %v501
      %v504 = vmul.f32 0.5, %v503
      %v505 = vsub.f32 1.5, %v504
      %v506 = vmul.f32 %v501, %v505
      %vm507 = vweird.f32 %v500
      %vm508 = vweird.f32 %v501
      %vm509 = vmor %vm507, %vm508
      %v510 = vsel %vm509, %v501, %v506
      %v511 = vmul.f32 %v492, %v510
      %v512 = vmul.f32 %v493, %v510
      %v513 = vmul.f32 %v494, %v510
      %v514 = vmul.f32 %v495, %v510
      %v515 = vmul.f32 %v496, %v510
      %v516 = vmul.f32 %v497, %v510
      %v517 = vmul.f32 %v498, %v510
      %v518 = vmul.f32 %v499, %v510
      %v520 = vperm.slane %v422, 0
      %v522 = vmul.f32 %v511, %v520
      %v523 = vmul.f32 %v512, %v520
      %v524 = vmul.f32 %v513, %v520
      %v525 = vmul.f32 %v514, %v520
      %v526 = vmul.f32 %v515, %v520
      %v527 = vmul.f32 %v516, %v520
      %v528 = vmul.f32 %v517, %v520
      %v529 = vmul.f32 %v518, %v520
      %v531 = vperm.slane %v423, 0
      %v533 = vadd.f32 %v522, %v531
      %v534 = vadd.f32 %v523, %v531
      %v535 = vadd.f32 %v524, %v531
      %v536 = vadd.f32 %v525, %v531
      %v537 = vadd.f32 %v526, %v531
      %v538 = vadd.f32 %v527, %v531
      %v539 = vadd.f32 %v528, %v531
      %v540 = vadd.f32 %v529, %v531
      %v541 = vld [vmem:[%s3] sm:$0xff]
      %v542 = vld [vmem:[%s3 + $0x8] sm:$0xff]
      %v544 = vsel %vm424, %v533, 0
      %v547 = vsel %vm424, %v534, 0
      %v550 = vsel %vm424, %v535, 0
      %v553 = vsel %vm424, %v536, 0
      %v556 = vsel %vm424, %v537, 0
      %v559 = vsel %vm424, %v538, 0
      %v562 = vsel %vm424, %v539, 0
      %v565 = vsel %vm424, %v540, 0
      %567 = vmatpush.msra.mxu0 0.0
      %568 = vmatpush.msra.mxu0 0.0
      %569 = vmatpush.msra.mxu0 0.0
      %570 = vmatpush.msra.mxu0 0.0
      %571 = vmatpush.msra.mxu0 0.0
      %572 = vmatpush.msra.mxu0 0.0
      %573 = vmatpush.msra.mxu0 0.0
      %574 = vmatpush.msra.mxu0 0.0
      %575 = vmatpush.msra.mxu0 0.0
      %576 = vmatpush.msra.mxu0 0.0
      %577 = vmatpush.msra.mxu0 0.0
      %578 = vmatpush.msra.mxu0 0.0
      %579 = vmatpush.msra.mxu0 0.0
      %580 = vmatpush.msra.mxu0 0.0
      %581 = vmatpush.msra.mxu0 %v542
      %582 = vmatpush.msra.mxu0 %v541
      %583 = vmatmul.f32.gmra.mxu0 %v544
      %v584 = vpop.f32.mrf.mxu0
      %v585 = vadd.f32 0.0, %v584
      %586 = vmatmul.f32.gmra.mxu0 %v547
      %v587 = vpop.f32.mrf.mxu0
      %v588 = vadd.f32 0.0, %v587
      %589 = vmatmul.f32.gmra.mxu0 %v550
      %v590 = vpop.f32.mrf.mxu0
      %v591 = vadd.f32 0.0, %v590
      %592 = vmatmul.f32.gmra.mxu0 %v553
      %v593 = vpop.f32.mrf.mxu0
      %v594 = vadd.f32 0.0, %v593
      %595 = vmatmul.f32.gmra.mxu0 %v556
      %v596 = vpop.f32.mrf.mxu0
      %v597 = vadd.f32 0.0, %v596
      %598 = vmatmul.f32.gmra.mxu0 %v559
      %v599 = vpop.f32.mrf.mxu0
      %v600 = vadd.f32 0.0, %v599
      %601 = vmatmul.f32.gmra.mxu0 %v562
      %v602 = vpop.f32.mrf.mxu0
      %v603 = vadd.f32 0.0, %v602
      %604 = vmatmul.f32.gmra.mxu0 %v565
      %v605 = vpop.f32.mrf.mxu0
      %v606 = vadd.f32 0.0, %v605
      %607 = vdwg.mxu0
      %v608 = vld [vmem:[%s4] sm:$0xff]
      %v609 = vld [vmem:[%s4 + $0x8] sm:$0xff]
      %610 = vmatpush.msra.mxu0 0.0
      %611 = vmatpush.msra.mxu0 0.0
      %612 = vmatpush.msra.mxu0 0.0
      %613 = vmatpush.msra.mxu0 0.0
      %614 = vmatpush.msra.mxu0 0.0
      %615 = vmatpush.msra.mxu0 0.0
      %616 = vmatpush.msra.mxu0 0.0
      %617 = vmatpush.msra.mxu0 0.0
      %618 = vmatpush.msra.mxu0 0.0
      %619 = vmatpush.msra.mxu0 0.0
      %620 = vmatpush.msra.mxu0 0.0
      %621 = vmatpush.msra.mxu0 0.0
      %622 = vmatpush.msra.mxu0 0.0
      %623 = vmatpush.msra.mxu0 0.0
      %624 = vmatpush.msra.mxu0 %v609
      %625 = vmatpush.msra.mxu0 %v608
      %626 = vmatmul.f32.gmra.mxu0 %v544
      %v627 = vpop.f32.mrf.mxu0
      %v628 = vadd.f32 0.0, %v627
      %629 = vmatmul.f32.gmra.mxu0 %v547
      %v630 = vpop.f32.mrf.mxu0
      %v631 = vadd.f32 0.0, %v630
      %632 = vmatmul.f32.gmra.mxu0 %v550
      %v633 = vpop.f32.mrf.mxu0
      %v634 = vadd.f32 0.0, %v633
      %635 = vmatmul.f32.gmra.mxu0 %v553
      %v636 = vpop.f32.mrf.mxu0
      %v637 = vadd.f32 0.0, %v636
      %638 = vmatmul.f32.gmra.mxu0 %v556
      %v639 = vpop.f32.mrf.mxu0
      %v640 = vadd.f32 0.0, %v639
      %641 = vmatmul.f32.gmra.mxu0 %v559
      %v642 = vpop.f32.mrf.mxu0
      %v643 = vadd.f32 0.0, %v642
      %644 = vmatmul.f32.gmra.mxu0 %v562
      %v645 = vpop.f32.mrf.mxu0
      %v646 = vadd.f32 0.0, %v645
      %647 = vmatmul.f32.gmra.mxu0 %v565
      %v648 = vpop.f32.mrf.mxu0
      %v649 = vadd.f32 0.0, %v648
      %650 = vdwg.mxu0
      %v651 = vld [vmem:[%s5] sm:$0xff]
      %v652 = vld [vmem:[%s5 + $0x8] sm:$0xff]
      %653 = vmatpush.msra.mxu0 0.0
      %654 = vmatpush.msra.mxu0 0.0
      %655 = vmatpush.msra.mxu0 0.0
      %656 = vmatpush.msra.mxu0 0.0
      %657 = vmatpush.msra.mxu0 0.0
      %658 = vmatpush.msra.mxu0 0.0
      %659 = vmatpush.msra.mxu0 0.0
      %660 = vmatpush.msra.mxu0 0.0
      %661 = vmatpush.msra.mxu0 0.0
      %662 = vmatpush.msra.mxu0 0.0
      %663 = vmatpush.msra.mxu0 0.0
      %664 = vmatpush.msra.mxu0 0.0
      %665 = vmatpush.msra.mxu0 0.0
      %666 = vmatpush.msra.mxu0 0.0
      %667 = vmatpush.msra.mxu0 %v652
      %668 = vmatpush.msra.mxu0 %v651
      %669 = vmatmul.f32.gmra.mxu0 %v544
      %v670 = vpop.f32.mrf.mxu0
      %v671 = vadd.f32 0.0, %v670
      %672 = vmatmul.f32.gmra.mxu0 %v547
      %v673 = vpop.f32.mrf.mxu0
      %v674 = vadd.f32 0.0, %v673
      %675 = vmatmul.f32.gmra.mxu0 %v550
      %v676 = vpop.f32.mrf.mxu0
      %v677 = vadd.f32 0.0, %v676
      %678 = vmatmul.f32.gmra.mxu0 %v553
      %v679 = vpop.f32.mrf.mxu0
      %v680 = vadd.f32 0.0, %v679
      %681 = vmatmul.f32.gmra.mxu0 %v556
      %v682 = vpop.f32.mrf.mxu0
      %v683 = vadd.f32 0.0, %v682
      %684 = vmatmul.f32.gmra.mxu0 %v559
      %v685 = vpop.f32.mrf.mxu0
      %v686 = vadd.f32 0.0, %v685
      %687 = vmatmul.f32.gmra.mxu0 %v562
      %v688 = vpop.f32.mrf.mxu0
      %v689 = vadd.f32 0.0, %v688
      %690 = vmatmul.f32.gmra.mxu0 %v565
      %v691 = vpop.f32.mrf.mxu0
      %v692 = vadd.f32 0.0, %v691
      %693 = vdwg.mxu0
      %vm694 = vcmask 261120
      %v695 = vsel %vm694, %v585, -inf
      %696 = vmax.xlane.f32.xlu0 %v695
      %v697 = vpop.xlane.xlu0 %696
      %v698 = vsel %vm694, %v588, -inf
      %699 = vmax.xlane.f32.xlu0 %v698
      %v700 = vpop.xlane.xlu0 %699
      %v701 = vsel %vm694, %v591, -inf
      %702 = vmax.xlane.f32.xlu0 %v701
      %v703 = vpop.xlane.xlu0 %702
      %v704 = vsel %vm694, %v594, -inf
      %705 = vmax.xlane.f32.xlu0 %v704
      %v706 = vpop.xlane.xlu0 %705
      %v707 = vsel %vm694, %v597, -inf
      %708 = vmax.xlane.f32.xlu0 %v707
      %v709 = vpop.xlane.xlu0 %708
      %v710 = vsel %vm694, %v600, -inf
      %711 = vmax.xlane.f32.xlu0 %v710
      %v712 = vpop.xlane.xlu0 %711
      %v713 = vsel %vm694, %v603, -inf
      %714 = vmax.xlane.f32.xlu0 %v713
      %v715 = vpop.xlane.xlu0 %714
      %v716 = vsel %vm694, %v606, -inf
      %717 = vmax.xlane.f32.xlu0 %v716
      %v718 = vpop.xlane.xlu0 %717
      %v719 = vsub.f32 %v585, %v697
      %v720 = vsub.f32 %v588, %v700
      %v721 = vsub.f32 %v591, %v703
      %v722 = vsub.f32 %v594, %v706
      %v723 = vsub.f32 %v597, %v709
      %v724 = vsub.f32 %v600, %v712
      %v725 = vsub.f32 %v603, %v715
      %v726 = vsub.f32 %v606, %v718
      %v727 = vmul.f32 %v719, 1.442695
      %v728 = vpow.pop %v727
      %v729 = vmul.f32 %v720, 1.442695
      %v730 = vpow.pop %v729
      %v731 = vmul.f32 %v721, 1.442695
      %v732 = vpow.pop %v731
      %v733 = vmul.f32 %v722, 1.442695
      %v734 = vpow.pop %v733
      %v735 = vmul.f32 %v723, 1.442695
      %v736 = vpow.pop %v735
      %v737 = vmul.f32 %v724, 1.442695
      %v738 = vpow.pop %v737
      %v739 = vmul.f32 %v725, 1.442695
      %v740 = vpow.pop %v739
      %v741 = vmul.f32 %v726, 1.442695
      %v742 = vpow.pop %v741
      %v743 = vsel %vm694, %v728, 0.0
      %744 = vadd.xlane.f32.xlu0 %v743
      %v745 = vpop.xlane.xlu0 %744
      %v746 = vsel %vm694, %v730, 0.0
      %747 = vadd.xlane.f32.xlu0 %v746
      %v748 = vpop.xlane.xlu0 %747
      %v749 = vsel %vm694, %v732, 0.0
      %750 = vadd.xlane.f32.xlu0 %v749
      %v751 = vpop.xlane.xlu0 %750
      %v752 = vsel %vm694, %v734, 0.0
      %753 = vadd.xlane.f32.xlu0 %v752
      %v754 = vpop.xlane.xlu0 %753
      %v755 = vsel %vm694, %v736, 0.0
      %756 = vadd.xlane.f32.xlu0 %v755
      %v757 = vpop.xlane.xlu0 %756
      %v758 = vsel %vm694, %v738, 0.0
      %759 = vadd.xlane.f32.xlu0 %v758
      %v760 = vpop.xlane.xlu0 %759
      %v761 = vsel %vm694, %v740, 0.0
      %762 = vadd.xlane.f32.xlu0 %v761
      %v763 = vpop.xlane.xlu0 %762
      %v764 = vsel %vm694, %v742, 0.0
      %765 = vadd.xlane.f32.xlu0 %v764
      %v766 = vpop.xlane.xlu0 %765
      %v767 = vrcp.pop %v745
      %v768 = vrcp.pop %v748
      %v769 = vrcp.pop %v751
      %v770 = vrcp.pop %v754
      %v771 = vrcp.pop %v757
      %v772 = vrcp.pop %v760
      %v773 = vrcp.pop %v763
      %v774 = vrcp.pop %v766
      %v775 = vmul.f32 %v728, %v767
      %v776 = vmul.f32 %v730, %v768
      %v777 = vmul.f32 %v732, %v769
      %v778 = vmul.f32 %v734, %v770
      %v779 = vmul.f32 %v736, %v771
      %v780 = vmul.f32 %v738, %v772
      %v781 = vmul.f32 %v740, %v773
      %v782 = vmul.f32 %v742, %v774
      %v783 = vmul.f32 %v775, 0.17677669
      %v784 = vmul.f32 %v776, 0.17677669
      %v785 = vmul.f32 %v777, 0.17677669
      %v786 = vmul.f32 %v778, 0.17677669
      %v787 = vmul.f32 %v779, 0.17677669
      %v788 = vmul.f32 %v780, 0.17677669
      %v789 = vmul.f32 %v781, 0.17677669
      %v790 = vmul.f32 %v782, 0.17677669
      %v791 = vsel %vm694, %v628, -inf
      %v792 = vsel %vm694, %v631, -inf
      %v793 = vsel %vm694, %v634, -inf
      %v794 = vsel %vm694, %v637, -inf
      %v795 = vsel %vm694, %v640, -inf
      %v796 = vmax.f32 %v791, %v795
      %v797 = vsel %vm694, %v643, -inf
      %v798 = vmax.f32 %v792, %v797
      %v799 = vsel %vm694, %v646, -inf
      %v800 = vmax.f32 %v793, %v799
      %v801 = vsel %vm694, %v649, -inf
      %v802 = vmax.f32 %v794, %v801
      %v803 = vmax.f32 %v796, %v798
      %v804 = vmax.f32 %v800, %v802
      %v805 = vmax.f32 %v803, %v804
      %v806 = vrot.slane %v805, 4
      %v807 = vmax.f32 %v805, %v806
      %v808 = vrot.slane %v807, 2
      %v809 = vmax.f32 %v807, %v808
      %v810 = vrot.slane %v809, 1
      %v811 = vmax.f32 %v809, %v810
      %v812 = vsub.f32 %v628, %v811
      %v813 = vsub.f32 %v631, %v811
      %v814 = vsub.f32 %v634, %v811
      %v815 = vsub.f32 %v637, %v811
      %v816 = vsub.f32 %v640, %v811
      %v817 = vsub.f32 %v643, %v811
      %v818 = vsub.f32 %v646, %v811
      %v819 = vsub.f32 %v649, %v811
      %v820 = vmul.f32 %v812, 1.442695
      %v821 = vpow.pop %v820
      %v822 = vmul.f32 %v813, 1.442695
      %v823 = vpow.pop %v822
      %v824 = vmul.f32 %v814, 1.442695
      %v825 = vpow.pop %v824
      %v826 = vmul.f32 %v815, 1.442695
      %v827 = vpow.pop %v826
      %v828 = vmul.f32 %v816, 1.442695
      %v829 = vpow.pop %v828
      %v830 = vmul.f32 %v817, 1.442695
      %v831 = vpow.pop %v830
      %v832 = vmul.f32 %v818, 1.442695
      %v833 = vpow.pop %v832
      %v834 = vmul.f32 %v819, 1.442695
      %v835 = vpow.pop %v834
      %v836 = vsel %vm694, %v821, 0.0
      %v837 = vsel %vm694, %v823, 0.0
      %v838 = vadd.f32 %v836, %v837
      %v839 = vsel %vm694, %v825, 0.0
      %v840 = vadd.f32 %v838, %v839
      %v841 = vsel %vm694, %v827, 0.0
      %v842 = vadd.f32 %v840, %v841
      %v843 = vsel %vm694, %v829, 0.0
      %v844 = vadd.f32 %v842, %v843
      %v845 = vsel %vm694, %v831, 0.0
      %v846 = vadd.f32 %v844, %v845
      %v847 = vsel %vm694, %v833, 0.0
      %v848 = vadd.f32 %v846, %v847
      %v849 = vsel %vm694, %v835, 0.0
      %v850 = vadd.f32 %v848, %v849
      %v851 = vrot.slane %v850, 4
      %v852 = vadd.f32 %v850, %v851
      %v853 = vrot.slane %v852, 2
      %v854 = vadd.f32 %v852, %v853
      %v855 = vrot.slane %v854, 1
      %v856 = vadd.f32 %v854, %v855
      %v857 = vrcp.pop %v856
      %v858 = vmul.f32 %v821, %v857
      %v859 = vmul.f32 %v823, %v857
      %v860 = vmul.f32 %v825, %v857
      %v861 = vmul.f32 %v827, %v857
      %v862 = vmul.f32 %v829, %v857
      %v863 = vmul.f32 %v831, %v857
      %v864 = vmul.f32 %v833, %v857
      %v865 = vmul.f32 %v835, %v857
      %866 = vxpose.xlu0.b32.start [1/16] %v858, 128
      %867 = vxpose.xlu0.b32.cont [2/16] %v859, 128
      %868 = vxpose.xlu0.b32.cont [3/16] %v860, 128
      %869 = vxpose.xlu0.b32.cont [4/16] %v861, 128
      %870 = vxpose.xlu0.b32.cont [5/16] %v862, 128
      %871 = vxpose.xlu0.b32.cont [6/16] %v863, 128
      %872 = vxpose.xlu0.b32.cont [7/16] %v864, 128
      %873 = vxpose.xlu0.b32.cont [8/16] %v865, 128
      %874 = vxpose.xlu0.b32.cont [9/16] 0.0, 128
      %875 = vxpose.xlu0.b32.cont [10/16] 0.0, 128
      %876 = vxpose.xlu0.b32.cont [11/16] 0.0, 128
      %877 = vxpose.xlu0.b32.cont [12/16] 0.0, 128
      %878 = vxpose.xlu0.b32.cont [13/16] 0.0, 128
      %879 = vxpose.xlu0.b32.cont [14/16] 0.0, 128
      %880 = vxpose.xlu0.b32.cont [15/16] 0.0, 128
      %881 = vxpose.xlu0.b32.end [16/16] 0.0, 128
      %v882 = vpop.trf.xlu0
      %v883 = vpop.trf.xlu0
      %v884 = vpop.trf.xlu0
      %v885 = vpop.trf.xlu0
      %v886 = vpop.trf.xlu0
      %v887 = vpop.trf.xlu0
      %v888 = vpop.trf.xlu0
      %v889 = vpop.trf.xlu0
      %v890 = vpop.trf.xlu0
      %v891 = vpop.trf.xlu0
      %v892 = vpop.trf.xlu0
      %v893 = vpop.trf.xlu0
      %v894 = vpop.trf.xlu0
      %v895 = vpop.trf.xlu0
      %v896 = vpop.trf.xlu0
      %v897 = vpop.trf.xlu0
      %vm898 = vcmask 523264
      %v900 = vsel %vm898, %v882, 0
      %v903 = vsel %vm898, %v883, 0
      %v906 = vsel %vm898, %v884, 0
      %v909 = vsel %vm898, %v885, 0
      %911 = vmatpush.msra.mxu0 0.0
      %912 = vmatpush.msra.mxu0 0.0
      %913 = vmatpush.msra.mxu0 0.0
      %914 = vmatpush.msra.mxu0 0.0
      %915 = vmatpush.msra.mxu0 0.0
      %916 = vmatpush.msra.mxu0 0.0
      %917 = vmatpush.msra.mxu0 0.0
      %918 = vmatpush.msra.mxu0 0.0
      %919 = vmatpush.msra.mxu0 %v692
      %920 = vmatpush.msra.mxu0 %v689
      %921 = vmatpush.msra.mxu0 %v686
      %922 = vmatpush.msra.mxu0 %v683
      %923 = vmatpush.msra.mxu0 %v680
      %924 = vmatpush.msra.mxu0 %v677
      %925 = vmatpush.msra.mxu0 %v674
      %926 = vmatpush.msra.mxu0 %v671
      %927 = vmatmul.f32.gmra.mxu0 %v900
      %v928 = vpop.f32.mrf.mxu0
      %v929 = vadd.f32 0.0, %v928
      %930 = vmatmul.f32.gmra.mxu0 %v903
      %v931 = vpop.f32.mrf.mxu0
      %v932 = vadd.f32 0.0, %v931
      %933 = vmatmul.f32.gmra.mxu0 %v906
      %v934 = vpop.f32.mrf.mxu0
      %v935 = vadd.f32 0.0, %v934
      %936 = vmatmul.f32.gmra.mxu0 %v909
      %v937 = vpop.f32.mrf.mxu0
      %v938 = vadd.f32 0.0, %v937
      %939 = vdwg.mxu0
      %v941 = vsel %vm694, %v783, 0
      %v944 = vsel %vm694, %v784, 0
      %v947 = vsel %vm694, %v785, 0
      %v950 = vsel %vm694, %v786, 0
      %v953 = vsel %vm694, %v787, 0
      %v956 = vsel %vm694, %v788, 0
      %v959 = vsel %vm694, %v789, 0
      %v962 = vsel %vm694, %v790, 0
      %964 = vmatpush.msra.mxu0 0.0
      %965 = vmatpush.msra.mxu0 0.0
      %966 = vmatpush.msra.mxu0 0.0
      %967 = vmatpush.msra.mxu0 0.0
      %968 = vmatpush.msra.mxu0 0.0
      %969 = vmatpush.msra.mxu0 0.0
      %970 = vmatpush.msra.mxu0 0.0
      %971 = vmatpush.msra.mxu0 0.0
      %972 = vmatpush.msra.mxu0 0.0
      %973 = vmatpush.msra.mxu0 0.0
      %974 = vmatpush.msra.mxu0 0.0
      %975 = vmatpush.msra.mxu0 0.0
      %976 = vmatpush.msra.mxu0 %v938
      %977 = vmatpush.msra.mxu0 %v935
      %978 = vmatpush.msra.mxu0 %v932
      %979 = vmatpush.msra.mxu0 %v929
      %980 = vmatmul.f32.gmra.mxu0 %v941
      %v981 = vpop.f32.mrf.mxu0
      %v982 = vadd.f32 0.0, %v981
      %983 = vmatmul.f32.gmra.mxu0 %v944
      %v984 = vpop.f32.mrf.mxu0
      %v985 = vadd.f32 0.0, %v984
      %986 = vmatmul.f32.gmra.mxu0 %v947
      %v987 = vpop.f32.mrf.mxu0
      %v988 = vadd.f32 0.0, %v987
      %989 = vmatmul.f32.gmra.mxu0 %v950
      %v990 = vpop.f32.mrf.mxu0
      %v991 = vadd.f32 0.0, %v990
      %992 = vmatmul.f32.gmra.mxu0 %v953
      %v993 = vpop.f32.mrf.mxu0
      %v994 = vadd.f32 0.0, %v993
      %995 = vmatmul.f32.gmra.mxu0 %v956
      %v996 = vpop.f32.mrf.mxu0
      %v997 = vadd.f32 0.0, %v996
      %998 = vmatmul.f32.gmra.mxu0 %v959
      %v999 = vpop.f32.mrf.mxu0
      %v1000 = vadd.f32 0.0, %v999
      %1001 = vmatmul.f32.gmra.mxu0 %v962
      %v1002 = vpop.f32.mrf.mxu0
      %v1003 = vadd.f32 0.0, %v1002
      %1004 = vdwg.mxu0
      %v1005 = vld [vmem:[%s6] sm:$0xff]
      %v1006 = vld [vmem:[%s6 + $0x8] sm:$0xff]
      %v1007 = vld [vmem:[%s6 + $0x10] sm:$0xff]
      %v1008 = vld [vmem:[%s6 + $0x18] sm:$0xff]
      %s1009 = scalar_lea.vmem %s3, 16
      %v1010 = vld [vmem:[%s1009] sm:$0xff]
      %v1011 = vld [vmem:[%s1009 + $0x8] sm:$0xff]
      %1012 = vmatpush.msra.mxu0 0.0
      %1013 = vmatpush.msra.mxu0 0.0
      %1014 = vmatpush.msra.mxu0 0.0
      %1015 = vmatpush.msra.mxu0 0.0
      %1016 = vmatpush.msra.mxu0 0.0
      %1017 = vmatpush.msra.mxu0 0.0
      %1018 = vmatpush.msra.mxu0 0.0
      %1019 = vmatpush.msra.mxu0 0.0
      %1020 = vmatpush.msra.mxu0 0.0
      %1021 = vmatpush.msra.mxu0 0.0
      %1022 = vmatpush.msra.mxu0 0.0
      %1023 = vmatpush.msra.mxu0 0.0
      %1024 = vmatpush.msra.mxu0 0.0
      %1025 = vmatpush.msra.mxu0 0.0
      %1026 = vmatpush.msra.mxu0 %v1011
      %1027 = vmatpush.msra.mxu0 %v1010
      %1028 = vmatmul.f32.gmra.mxu0 %v544
      %v1029 = vpop.f32.mrf.mxu0
      %v1030 = vadd.f32 0.0, %v1029
      %1031 = vmatmul.f32.gmra.mxu0 %v547
      %v1032 = vpop.f32.mrf.mxu0
      %v1033 = vadd.f32 0.0, %v1032
      %1034 = vmatmul.f32.gmra.mxu0 %v550
      %v1035 = vpop.f32.mrf.mxu0
      %v1036 = vadd.f32 0.0, %v1035
      %1037 = vmatmul.f32.gmra.mxu0 %v553
      %v1038 = vpop.f32.mrf.mxu0
      %v1039 = vadd.f32 0.0, %v1038
      %1040 = vmatmul.f32.gmra.mxu0 %v556
      %v1041 = vpop.f32.mrf.mxu0
      %v1042 = vadd.f32 0.0, %v1041
      %1043 = vmatmul.f32.gmra.mxu0 %v559
      %v1044 = vpop.f32.mrf.mxu0
      %v1045 = vadd.f32 0.0, %v1044
      %1046 = vmatmul.f32.gmra.mxu0 %v562
      %v1047 = vpop.f32.mrf.mxu0
      %v1048 = vadd.f32 0.0, %v1047
      %1049 = vmatmul.f32.gmra.mxu0 %v565
      %v1050 = vpop.f32.mrf.mxu0
      %v1051 = vadd.f32 0.0, %v1050
      %1052 = vdwg.mxu0
      %s1053 = scalar_lea.vmem %s4, 16
      %v1054 = vld [vmem:[%s1053] sm:$0xff]
      %v1055 = vld [vmem:[%s1053 + $0x8] sm:$0xff]
      %1056 = vmatpush.msra.mxu0 0.0
      %1057 = vmatpush.msra.mxu0 0.0
      %1058 = vmatpush.msra.mxu0 0.0
      %1059 = vmatpush.msra.mxu0 0.0
      %1060 = vmatpush.msra.mxu0 0.0
      %1061 = vmatpush.msra.mxu0 0.0
      %1062 = vmatpush.msra.mxu0 0.0
      %1063 = vmatpush.msra.mxu0 0.0
      %1064 = vmatpush.msra.mxu0 0.0
      %1065 = vmatpush.msra.mxu0 0.0
      %1066 = vmatpush.msra.mxu0 0.0
      %1067 = vmatpush.msra.mxu0 0.0
      %1068 = vmatpush.msra.mxu0 0.0
      %1069 = vmatpush.msra.mxu0 0.0
      %1070 = vmatpush.msra.mxu0 %v1055
      %1071 = vmatpush.msra.mxu0 %v1054
      %1072 = vmatmul.f32.gmra.mxu0 %v544
      %v1073 = vpop.f32.mrf.mxu0
      %v1074 = vadd.f32 0.0, %v1073
      %1075 = vmatmul.f32.gmra.mxu0 %v547
      %v1076 = vpop.f32.mrf.mxu0
      %v1077 = vadd.f32 0.0, %v1076
      %1078 = vmatmul.f32.gmra.mxu0 %v550
      %v1079 = vpop.f32.mrf.mxu0
      %v1080 = vadd.f32 0.0, %v1079
      %1081 = vmatmul.f32.gmra.mxu0 %v553
      %v1082 = vpop.f32.mrf.mxu0
      %v1083 = vadd.f32 0.0, %v1082
      %1084 = vmatmul.f32.gmra.mxu0 %v556
      %v1085 = vpop.f32.mrf.mxu0
      %v1086 = vadd.f32 0.0, %v1085
      %1087 = vmatmul.f32.gmra.mxu0 %v559
      %v1088 = vpop.f32.mrf.mxu0
      %v1089 = vadd.f32 0.0, %v1088
      %1090 = vmatmul.f32.gmra.mxu0 %v562
      %v1091 = vpop.f32.mrf.mxu0
      %v1092 = vadd.f32 0.0, %v1091
      %1093 = vmatmul.f32.gmra.mxu0 %v565
      %v1094 = vpop.f32.mrf.mxu0
      %v1095 = vadd.f32 0.0, %v1094
      %1096 = vdwg.mxu0
      %s1097 = scalar_lea.vmem %s5, 16
      %v1098 = vld [vmem:[%s1097] sm:$0xff]
      %v1099 = vld [vmem:[%s1097 + $0x8] sm:$0xff]
      %1100 = vmatpush.msra.mxu0 0.0
      %1101 = vmatpush.msra.mxu0 0.0
      %1102 = vmatpush.msra.mxu0 0.0
      %1103 = vmatpush.msra.mxu0 0.0
      %1104 = vmatpush.msra.mxu0 0.0
      %1105 = vmatpush.msra.mxu0 0.0
      %1106 = vmatpush.msra.mxu0 0.0
      %1107 = vmatpush.msra.mxu0 0.0
      %1108 = vmatpush.msra.mxu0 0.0
      %1109 = vmatpush.msra.mxu0 0.0
      %1110 = vmatpush.msra.mxu0 0.0
      %1111 = vmatpush.msra.mxu0 0.0
      %1112 = vmatpush.msra.mxu0 0.0
      %1113 = vmatpush.msra.mxu0 0.0
      %1114 = vmatpush.msra.mxu0 %v1099
      %1115 = vmatpush.msra.mxu0 %v1098
      %1116 = vmatmul.f32.gmra.mxu0 %v544
      %v1117 = vpop.f32.mrf.mxu0
      %v1118 = vadd.f32 0.0, %v1117
      %1119 = vmatmul.f32.gmra.mxu0 %v547
      %v1120 = vpop.f32.mrf.mxu0
      %v1121 = vadd.f32 0.0, %v1120
      %1122 = vmatmul.f32.gmra.mxu0 %v550
      %v1123 = vpop.f32.mrf.mxu0
      %v1124 = vadd.f32 0.0, %v1123
      %1125 = vmatmul.f32.gmra.mxu0 %v553
      %v1126 = vpop.f32.mrf.mxu0
      %v1127 = vadd.f32 0.0, %v1126
      %1128 = vmatmul.f32.gmra.mxu0 %v556
      %v1129 = vpop.f32.mrf.mxu0
      %v1130 = vadd.f32 0.0, %v1129
      %1131 = vmatmul.f32.gmra.mxu0 %v559
      %v1132 = vpop.f32.mrf.mxu0
      %v1133 = vadd.f32 0.0, %v1132
      %1134 = vmatmul.f32.gmra.mxu0 %v562
      %v1135 = vpop.f32.mrf.mxu0
      %v1136 = vadd.f32 0.0, %v1135
      %1137 = vmatmul.f32.gmra.mxu0 %v565
      %v1138 = vpop.f32.mrf.mxu0
      %v1139 = vadd.f32 0.0, %v1138
      %1140 = vdwg.mxu0
      %v1141 = vsel %vm694, %v1030, -inf
      %1142 = vmax.xlane.f32.xlu0 %v1141
      %v1143 = vpop.xlane.xlu0 %1142
      %v1144 = vsel %vm694, %v1033, -inf
      %1145 = vmax.xlane.f32.xlu0 %v1144
      %v1146 = vpop.xlane.xlu0 %1145
      %v1147 = vsel %vm694, %v1036, -inf
      %1148 = vmax.xlane.f32.xlu0 %v1147
      %v1149 = vpop.xlane.xlu0 %1148
      %v1150 = vsel %vm694, %v1039, -inf
      %1151 = vmax.xlane.f32.xlu0 %v1150
      %v1152 = vpop.xlane.xlu0 %1151
      %v1153 = vsel %vm694, %v1042, -inf
      %1154 = vmax.xlane.f32.xlu0 %v1153
      %v1155 = vpop.xlane.xlu0 %1154
      %v1156 = vsel %vm694, %v1045, -inf
      %1157 = vmax.xlane.f32.xlu0 %v1156
      %v1158 = vpop.xlane.xlu0 %1157
      %v1159 = vsel %vm694, %v1048, -inf
      %1160 = vmax.xlane.f32.xlu0 %v1159
      %v1161 = vpop.xlane.xlu0 %1160
      %v1162 = vsel %vm694, %v1051, -inf
      %1163 = vmax.xlane.f32.xlu0 %v1162
      %v1164 = vpop.xlane.xlu0 %1163
      %v1165 = vsub.f32 %v1030, %v1143
      %v1166 = vsub.f32 %v1033, %v1146
      %v1167 = vsub.f32 %v1036, %v1149
      %v1168 = vsub.f32 %v1039, %v1152
      %v1169 = vsub.f32 %v1042, %v1155
      %v1170 = vsub.f32 %v1045, %v1158
      %v1171 = vsub.f32 %v1048, %v1161
      %v1172 = vsub.f32 %v1051, %v1164
      %v1173 = vmul.f32 %v1165, 1.442695
      %v1174 = vpow.pop %v1173
      %v1175 = vmul.f32 %v1166, 1.442695
      %v1176 = vpow.pop %v1175
      %v1177 = vmul.f32 %v1167, 1.442695
      %v1178 = vpow.pop %v1177
      %v1179 = vmul.f32 %v1168, 1.442695
      %v1180 = vpow.pop %v1179
      %v1181 = vmul.f32 %v1169, 1.442695
      %v1182 = vpow.pop %v1181
      %v1183 = vmul.f32 %v1170, 1.442695
      %v1184 = vpow.pop %v1183
      %v1185 = vmul.f32 %v1171, 1.442695
      %v1186 = vpow.pop %v1185
      %v1187 = vmul.f32 %v1172, 1.442695
      %v1188 = vpow.pop %v1187
      %v1189 = vsel %vm694, %v1174, 0.0
      %1190 = vadd.xlane.f32.xlu0 %v1189
      %v1191 = vpop.xlane.xlu0 %1190
      %v1192 = vsel %vm694, %v1176, 0.0
      %1193 = vadd.xlane.f32.xlu0 %v1192
      %v1194 = vpop.xlane.xlu0 %1193
      %v1195 = vsel %vm694, %v1178, 0.0
      %1196 = vadd.xlane.f32.xlu0 %v1195
      %v1197 = vpop.xlane.xlu0 %1196
      %v1198 = vsel %vm694, %v1180, 0.0
      %1199 = vadd.xlane.f32.xlu0 %v1198
      %v1200 = vpop.xlane.xlu0 %1199
      %v1201 = vsel %vm694, %v1182, 0.0
      %1202 = vadd.xlane.f32.xlu0 %v1201
      %v1203 = vpop.xlane.xlu0 %1202
      %v1204 = vsel %vm694, %v1184, 0.0
      %1205 = vadd.xlane.f32.xlu0 %v1204
      %v1206 = vpop.xlane.xlu0 %1205
      %v1207 = vsel %vm694, %v1186, 0.0
      %1208 = vadd.xlane.f32.xlu0 %v1207
      %v1209 = vpop.xlane.xlu0 %1208
      %v1210 = vsel %vm694, %v1188, 0.0
      %1211 = vadd.xlane.f32.xlu0 %v1210
      %v1212 = vpop.xlane.xlu0 %1211
      %v1213 = vrcp.pop %v1191
      %v1214 = vrcp.pop %v1194
      %v1215 = vrcp.pop %v1197
      %v1216 = vrcp.pop %v1200
      %v1217 = vrcp.pop %v1203
      %v1218 = vrcp.pop %v1206
      %v1219 = vrcp.pop %v1209
      %v1220 = vrcp.pop %v1212
      %v1221 = vmul.f32 %v1174, %v1213
      %v1222 = vmul.f32 %v1176, %v1214
      %v1223 = vmul.f32 %v1178, %v1215
      %v1224 = vmul.f32 %v1180, %v1216
      %v1225 = vmul.f32 %v1182, %v1217
      %v1226 = vmul.f32 %v1184, %v1218
      %v1227 = vmul.f32 %v1186, %v1219
      %v1228 = vmul.f32 %v1188, %v1220
      %v1229 = vmul.f32 %v1221, 0.17677669
      %v1230 = vmul.f32 %v1222, 0.17677669
      %v1231 = vmul.f32 %v1223, 0.17677669
      %v1232 = vmul.f32 %v1224, 0.17677669
      %v1233 = vmul.f32 %v1225, 0.17677669
      %v1234 = vmul.f32 %v1226, 0.17677669
      %v1235 = vmul.f32 %v1227, 0.17677669
      %v1236 = vmul.f32 %v1228, 0.17677669
      %v1237 = vsel %vm694, %v1074, -inf
      %v1238 = vsel %vm694, %v1077, -inf
      %v1239 = vsel %vm694, %v1080, -inf
      %v1240 = vsel %vm694, %v1083, -inf
      %v1241 = vsel %vm694, %v1086, -inf
      %v1242 = vmax.f32 %v1237, %v1241
      %v1243 = vsel %vm694, %v1089, -inf
      %v1244 = vmax.f32 %v1238, %v1243
      %v1245 = vsel %vm694, %v1092, -inf
      %v1246 = vmax.f32 %v1239, %v1245
      %v1247 = vsel %vm694, %v1095, -inf
      %v1248 = vmax.f32 %v1240, %v1247
      %v1249 = vmax.f32 %v1242, %v1244
      %v1250 = vmax.f32 %v1246, %v1248
      %v1251 = vmax.f32 %v1249, %v1250
      %v1252 = vrot.slane %v1251, 4
      %v1253 = vmax.f32 %v1251, %v1252
      %v1254 = vrot.slane %v1253, 2
      %v1255 = vmax.f32 %v1253, %v1254
      %v1256 = vrot.slane %v1255, 1
      %v1257 = vmax.f32 %v1255, %v1256
      %v1258 = vsub.f32 %v1074, %v1257
      %v1259 = vsub.f32 %v1077, %v1257
      %v1260 = vsub.f32 %v1080, %v1257
      %v1261 = vsub.f32 %v1083, %v1257
      %v1262 = vsub.f32 %v1086, %v1257
      %v1263 = vsub.f32 %v1089, %v1257
      %v1264 = vsub.f32 %v1092, %v1257
      %v1265 = vsub.f32 %v1095, %v1257
      %v1266 = vmul.f32 %v1258, 1.442695
      %v1267 = vpow.pop %v1266
      %v1268 = vmul.f32 %v1259, 1.442695
      %v1269 = vpow.pop %v1268
      %v1270 = vmul.f32 %v1260, 1.442695
      %v1271 = vpow.pop %v1270
      %v1272 = vmul.f32 %v1261, 1.442695
      %v1273 = vpow.pop %v1272
      %v1274 = vmul.f32 %v1262, 1.442695
      %v1275 = vpow.pop %v1274
      %v1276 = vmul.f32 %v1263, 1.442695
      %v1277 = vpow.pop %v1276
      %v1278 = vmul.f32 %v1264, 1.442695
      %v1279 = vpow.pop %v1278
      %v1280 = vmul.f32 %v1265, 1.442695
      %v1281 = vpow.pop %v1280
      %v1282 = vsel %vm694, %v1267, 0.0
      %v1283 = vsel %vm694, %v1269, 0.0
      %v1284 = vadd.f32 %v1282, %v1283
      %v1285 = vsel %vm694, %v1271, 0.0
      %v1286 = vadd.f32 %v1284, %v1285
      %v1287 = vsel %vm694, %v1273, 0.0
      %v1288 = vadd.f32 %v1286, %v1287
      %v1289 = vsel %vm694, %v1275, 0.0
      %v1290 = vadd.f32 %v1288, %v1289
      %v1291 = vsel %vm694, %v1277, 0.0
      %v1292 = vadd.f32 %v1290, %v1291
      %v1293 = vsel %vm694, %v1279, 0.0
      %v1294 = vadd.f32 %v1292, %v1293
      %v1295 = vsel %vm694, %v1281, 0.0
      %v1296 = vadd.f32 %v1294, %v1295
      %v1297 = vrot.slane %v1296, 4
      %v1298 = vadd.f32 %v1296, %v1297
      %v1299 = vrot.slane %v1298, 2
      %v1300 = vadd.f32 %v1298, %v1299
      %v1301 = vrot.slane %v1300, 1
      %v1302 = vadd.f32 %v1300, %v1301
      %v1303 = vrcp.pop %v1302
      %v1304 = vmul.f32 %v1267, %v1303
      %v1305 = vmul.f32 %v1269, %v1303
      %v1306 = vmul.f32 %v1271, %v1303
      %v1307 = vmul.f32 %v1273, %v1303
      %v1308 = vmul.f32 %v1275, %v1303
      %v1309 = vmul.f32 %v1277, %v1303
      %v1310 = vmul.f32 %v1279, %v1303
      %v1311 = vmul.f32 %v1281, %v1303
      %1312 = vxpose.xlu0.b32.start [1/16] %v1304, 128
      %1313 = vxpose.xlu0.b32.cont [2/16] %v1305, 128
      %1314 = vxpose.xlu0.b32.cont [3/16] %v1306, 128
      %1315 = vxpose.xlu0.b32.cont [4/16] %v1307, 128
      %1316 = vxpose.xlu0.b32.cont [5/16] %v1308, 128
      %1317 = vxpose.xlu0.b32.cont [6/16] %v1309, 128
      %1318 = vxpose.xlu0.b32.cont [7/16] %v1310, 128
      %1319 = vxpose.xlu0.b32.cont [8/16] %v1311, 128
      %1320 = vxpose.xlu0.b32.cont [9/16] 0.0, 128
      %1321 = vxpose.xlu0.b32.cont [10/16] 0.0, 128
      %1322 = vxpose.xlu0.b32.cont [11/16] 0.0, 128
      %1323 = vxpose.xlu0.b32.cont [12/16] 0.0, 128
      %1324 = vxpose.xlu0.b32.cont [13/16] 0.0, 128
      %1325 = vxpose.xlu0.b32.cont [14/16] 0.0, 128
      %1326 = vxpose.xlu0.b32.cont [15/16] 0.0, 128
      %1327 = vxpose.xlu0.b32.end [16/16] 0.0, 128
      %v1328 = vpop.trf.xlu0
      %v1329 = vpop.trf.xlu0
      %v1330 = vpop.trf.xlu0
      %v1331 = vpop.trf.xlu0
      %v1332 = vpop.trf.xlu0
      %v1333 = vpop.trf.xlu0
      %v1334 = vpop.trf.xlu0
      %v1335 = vpop.trf.xlu0
      %v1336 = vpop.trf.xlu0
      %v1337 = vpop.trf.xlu0
      %v1338 = vpop.trf.xlu0
      %v1339 = vpop.trf.xlu0
      %v1340 = vpop.trf.xlu0
      %v1341 = vpop.trf.xlu0
      %v1342 = vpop.trf.xlu0
      %v1343 = vpop.trf.xlu0
      %v1345 = vsel %vm898, %v1328, 0
      %v1348 = vsel %vm898, %v1329, 0
      %v1351 = vsel %vm898, %v1330, 0
      %v1354 = vsel %vm898, %v1331, 0
      %1356 = vmatpush.msra.mxu0 0.0
      %1357 = vmatpush.msra.mxu0 0.0
      %1358 = vmatpush.msra.mxu0 0.0
      %1359 = vmatpush.msra.mxu0 0.0
      %1360 = vmatpush.msra.mxu0 0.0
      %1361 = vmatpush.msra.mxu0 0.0
      %1362 = vmatpush.msra.mxu0 0.0
      %1363 = vmatpush.msra.mxu0 0.0
      %1364 = vmatpush.msra.mxu0 %v1139
      %1365 = vmatpush.msra.mxu0 %v1136
      %1366 = vmatpush.msra.mxu0 %v1133
      %1367 = vmatpush.msra.mxu0 %v1130
      %1368 = vmatpush.msra.mxu0 %v1127
      %1369 = vmatpush.msra.mxu0 %v1124
      %1370 = vmatpush.msra.mxu0 %v1121
      %1371 = vmatpush.msra.mxu0 %v1118
      %1372 = vmatmul.f32.gmra.mxu0 %v1345
      %v1373 = vpop.f32.mrf.mxu0
      %v1374 = vadd.f32 0.0, %v1373
      %1375 = vmatmul.f32.gmra.mxu0 %v1348
      %v1376 = vpop.f32.mrf.mxu0
      %v1377 = vadd.f32 0.0, %v1376
      %1378 = vmatmul.f32.gmra.mxu0 %v1351
      %v1379 = vpop.f32.mrf.mxu0
      %v1380 = vadd.f32 0.0, %v1379
      %1381 = vmatmul.f32.gmra.mxu0 %v1354
      %v1382 = vpop.f32.mrf.mxu0
      %v1383 = vadd.f32 0.0, %v1382
      %1384 = vdwg.mxu0
      %v1386 = vsel %vm694, %v1229, 0
      %v1389 = vsel %vm694, %v1230, 0
      %v1392 = vsel %vm694, %v1231, 0
      %v1395 = vsel %vm694, %v1232, 0
      %v1398 = vsel %vm694, %v1233, 0
      %v1401 = vsel %vm694, %v1234, 0
      %v1404 = vsel %vm694, %v1235, 0
      %v1407 = vsel %vm694, %v1236, 0
      %1409 = vmatpush.msra.mxu0 0.0
      %1410 = vmatpush.msra.mxu0 0.0
      %1411 = vmatpush.msra.mxu0 0.0
      %1412 = vmatpush.msra.mxu0 0.0
      %1413 = vmatpush.msra.mxu0 0.0
      %1414 = vmatpush.msra.mxu0 0.0
      %1415 = vmatpush.msra.mxu0 0.0
      %1416 = vmatpush.msra.mxu0 0.0
      %1417 = vmatpush.msra.mxu0 0.0
      %1418 = vmatpush.msra.mxu0 0.0
      %1419 = vmatpush.msra.mxu0 0.0
      %1420 = vmatpush.msra.mxu0 0.0
      %1421 = vmatpush.msra.mxu0 %v1383
      %1422 = vmatpush.msra.mxu0 %v1380
      %1423 = vmatpush.msra.mxu0 %v1377
      %1424 = vmatpush.msra.mxu0 %v1374
      %1425 = vmatmul.f32.gmra.mxu0 %v1386
      %v1426 = vpop.f32.mrf.mxu0
      %v1427 = vadd.f32 0.0, %v1426
      %1428 = vmatmul.f32.gmra.mxu0 %v1389
      %v1429 = vpop.f32.mrf.mxu0
      %v1430 = vadd.f32 0.0, %v1429
      %1431 = vmatmul.f32.gmra.mxu0 %v1392
      %v1432 = vpop.f32.mrf.mxu0
      %v1433 = vadd.f32 0.0, %v1432
      %1434 = vmatmul.f32.gmra.mxu0 %v1395
      %v1435 = vpop.f32.mrf.mxu0
      %v1436 = vadd.f32 0.0, %v1435
      %1437 = vmatmul.f32.gmra.mxu0 %v1398
      %v1438 = vpop.f32.mrf.mxu0
      %v1439 = vadd.f32 0.0, %v1438
      %1440 = vmatmul.f32.gmra.mxu0 %v1401
      %v1441 = vpop.f32.mrf.mxu0
      %v1442 = vadd.f32 0.0, %v1441
      %1443 = vmatmul.f32.gmra.mxu0 %v1404
      %v1444 = vpop.f32.mrf.mxu0
      %v1445 = vadd.f32 0.0, %v1444
      %1446 = vmatmul.f32.gmra.mxu0 %v1407
      %v1447 = vpop.f32.mrf.mxu0
      %v1448 = vadd.f32 0.0, %v1447
      %1449 = vdwg.mxu0
      %s1450 = scalar_lea.vmem %s6, 32
      %v1451 = vld [vmem:[%s1450] sm:$0xff]
      %v1452 = vld [vmem:[%s1450 + $0x8] sm:$0xff]
      %v1453 = vld [vmem:[%s1450 + $0x10] sm:$0xff]
      %v1454 = vld [vmem:[%s1450 + $0x18] sm:$0xff]
      %v1456 = vsel %vm694, %v1427, 0
      %v1459 = vsel %vm694, %v1430, 0
      %v1462 = vsel %vm694, %v1433, 0
      %v1465 = vsel %vm694, %v1436, 0
      %v1468 = vsel %vm694, %v1439, 0
      %v1471 = vsel %vm694, %v1442, 0
      %v1474 = vsel %vm694, %v1445, 0
      %v1477 = vsel %vm694, %v1448, 0
      %1479 = vmatpush.msra.mxu0 0.0
      %1480 = vmatpush.msra.mxu0 0.0
      %1481 = vmatpush.msra.mxu0 0.0
      %1482 = vmatpush.msra.mxu0 0.0
      %1483 = vmatpush.msra.mxu0 0.0
      %1484 = vmatpush.msra.mxu0 0.0
      %1485 = vmatpush.msra.mxu0 0.0
      %1486 = vmatpush.msra.mxu0 0.0
      %1487 = vmatpush.msra.mxu0 0.0
      %1488 = vmatpush.msra.mxu0 0.0
      %1489 = vmatpush.msra.mxu0 0.0
      %1490 = vmatpush.msra.mxu0 0.0
      %1491 = vmatpush.msra.mxu0 %v1454
      %1492 = vmatpush.msra.mxu0 %v1453
      %1493 = vmatpush.msra.mxu0 %v1452
      %1494 = vmatpush.msra.mxu0 %v1451
      %1495 = vmatmul.f32.gmra.mxu0 %v1456
      %v1496 = vpop.f32.mrf.mxu0
      %v1497 = vadd.f32 0.0, %v1496
      %1498 = vmatmul.f32.gmra.mxu0 %v1459
      %v1499 = vpop.f32.mrf.mxu0
      %v1500 = vadd.f32 0.0, %v1499
      %1501 = vmatmul.f32.gmra.mxu0 %v1462
      %v1502 = vpop.f32.mrf.mxu0
      %v1503 = vadd.f32 0.0, %v1502
      %1504 = vmatmul.f32.gmra.mxu0 %v1465
      %v1505 = vpop.f32.mrf.mxu0
      %v1506 = vadd.f32 0.0, %v1505
      %1507 = vmatmul.f32.gmra.mxu0 %v1468
      %v1508 = vpop.f32.mrf.mxu0
      %v1509 = vadd.f32 0.0, %v1508
      %1510 = vmatmul.f32.gmra.mxu0 %v1471
      %v1511 = vpop.f32.mrf.mxu0
      %v1512 = vadd.f32 0.0, %v1511
      %1513 = vmatmul.f32.gmra.mxu0 %v1474
      %v1514 = vpop.f32.mrf.mxu0
      %v1515 = vadd.f32 0.0, %v1514
      %1516 = vmatmul.f32.gmra.mxu0 %v1477
      %v1517 = vpop.f32.mrf.mxu0
      %v1518 = vadd.f32 0.0, %v1517
      %1519 = vdwg.mxu0
      %v1521 = vsel %vm694, %v982, 0
      %v1524 = vsel %vm694, %v985, 0
      %v1527 = vsel %vm694, %v988, 0
      %v1530 = vsel %vm694, %v991, 0
      %v1533 = vsel %vm694, %v994, 0
      %v1536 = vsel %vm694, %v997, 0
      %v1539 = vsel %vm694, %v1000, 0
      %v1542 = vsel %vm694, %v1003, 0
      %1544 = vmatpush.msra.mxu0 0.0
      %1545 = vmatpush.msra.mxu0 0.0
      %1546 = vmatpush.msra.mxu0 0.0
      %1547 = vmatpush.msra.mxu0 0.0
      %1548 = vmatpush.msra.mxu0 0.0
      %1549 = vmatpush.msra.mxu0 0.0
      %1550 = vmatpush.msra.mxu0 0.0
      %1551 = vmatpush.msra.mxu0 0.0
      %1552 = vmatpush.msra.mxu0 0.0
      %1553 = vmatpush.msra.mxu0 0.0
      %1554 = vmatpush.msra.mxu0 0.0
      %1555 = vmatpush.msra.mxu0 0.0
      %1556 = vmatpush.msra.mxu0 %v1008
      %1557 = vmatpush.msra.mxu0 %v1007
      %1558 = vmatpush.msra.mxu0 %v1006
      %1559 = vmatpush.msra.mxu0 %v1005
      %1560 = vmatmul.f32.gmra.mxu0 %v1521
      %v1561 = vpop.f32.mrf.mxu0
      %v1562 = vadd.f32 %v1497, %v1561
      %1563 = vmatmul.f32.gmra.mxu0 %v1524
      %v1564 = vpop.f32.mrf.mxu0
      %v1565 = vadd.f32 %v1500, %v1564
      %1566 = vmatmul.f32.gmra.mxu0 %v1527
      %v1567 = vpop.f32.mrf.mxu0
      %v1568 = vadd.f32 %v1503, %v1567
      %1569 = vmatmul.f32.gmra.mxu0 %v1530
      %v1570 = vpop.f32.mrf.mxu0
      %v1571 = vadd.f32 %v1506, %v1570
      %1572 = vmatmul.f32.gmra.mxu0 %v1533
      %v1573 = vpop.f32.mrf.mxu0
      %v1574 = vadd.f32 %v1509, %v1573
      %1575 = vmatmul.f32.gmra.mxu0 %v1536
      %v1576 = vpop.f32.mrf.mxu0
      %v1577 = vadd.f32 %v1512, %v1576
      %1578 = vmatmul.f32.gmra.mxu0 %v1539
      %v1579 = vpop.f32.mrf.mxu0
      %v1580 = vadd.f32 %v1515, %v1579
      %1581 = vmatmul.f32.gmra.mxu0 %v1542
      %v1582 = vpop.f32.mrf.mxu0
      %v1583 = vadd.f32 %v1518, %v1582
      %1584 = vdwg.mxu0
      %s1585 = scalar_lea.vmem %s3, 32
      %v1586 = vld [vmem:[%s1585] sm:$0xff]
      %v1587 = vld [vmem:[%s1585 + $0x8] sm:$0xff]
      %1588 = vmatpush.msra.mxu0 0.0
      %1589 = vmatpush.msra.mxu0 0.0
      %1590 = vmatpush.msra.mxu0 0.0
      %1591 = vmatpush.msra.mxu0 0.0
      %1592 = vmatpush.msra.mxu0 0.0
      %1593 = vmatpush.msra.mxu0 0.0
      %1594 = vmatpush.msra.mxu0 0.0
      %1595 = vmatpush.msra.mxu0 0.0
      %1596 = vmatpush.msra.mxu0 0.0
      %1597 = vmatpush.msra.mxu0 0.0
      %1598 = vmatpush.msra.mxu0 0.0
      %1599 = vmatpush.msra.mxu0 0.0
      %1600 = vmatpush.msra.mxu0 0.0
      %1601 = vmatpush.msra.mxu0 0.0
      %1602 = vmatpush.msra.mxu0 %v1587
      %1603 = vmatpush.msra.mxu0 %v1586
      %1604 = vmatmul.f32.gmra.mxu0 %v544
      %v1605 = vpop.f32.mrf.mxu0
      %v1606 = vadd.f32 0.0, %v1605
      %1607 = vmatmul.f32.gmra.mxu0 %v547
      %v1608 = vpop.f32.mrf.mxu0
      %v1609 = vadd.f32 0.0, %v1608
      %1610 = vmatmul.f32.gmra.mxu0 %v550
      %v1611 = vpop.f32.mrf.mxu0
      %v1612 = vadd.f32 0.0, %v1611
      %1613 = vmatmul.f32.gmra.mxu0 %v553
      %v1614 = vpop.f32.mrf.mxu0
      %v1615 = vadd.f32 0.0, %v1614
      %1616 = vmatmul.f32.gmra.mxu0 %v556
      %v1617 = vpop.f32.mrf.mxu0
      %v1618 = vadd.f32 0.0, %v1617
      %1619 = vmatmul.f32.gmra.mxu0 %v559
      %v1620 = vpop.f32.mrf.mxu0
      %v1621 = vadd.f32 0.0, %v1620
      %1622 = vmatmul.f32.gmra.mxu0 %v562
      %v1623 = vpop.f32.mrf.mxu0
      %v1624 = vadd.f32 0.0, %v1623
      %1625 = vmatmul.f32.gmra.mxu0 %v565
      %v1626 = vpop.f32.mrf.mxu0
      %v1627 = vadd.f32 0.0, %v1626
      %1628 = vdwg.mxu0
      %s1629 = scalar_lea.vmem %s4, 32
      %v1630 = vld [vmem:[%s1629] sm:$0xff]
      %v1631 = vld [vmem:[%s1629 + $0x8] sm:$0xff]
      %1632 = vmatpush.msra.mxu0 0.0
      %1633 = vmatpush.msra.mxu0 0.0
      %1634 = vmatpush.msra.mxu0 0.0
      %1635 = vmatpush.msra.mxu0 0.0
      %1636 = vmatpush.msra.mxu0 0.0
      %1637 = vmatpush.msra.mxu0 0.0
      %1638 = vmatpush.msra.mxu0 0.0
      %1639 = vmatpush.msra.mxu0 0.0
      %1640 = vmatpush.msra.mxu0 0.0
      %1641 = vmatpush.msra.mxu0 0.0
      %1642 = vmatpush.msra.mxu0 0.0
      %1643 = vmatpush.msra.mxu0 0.0
      %1644 = vmatpush.msra.mxu0 0.0
      %1645 = vmatpush.msra.mxu0 0.0
      %1646 = vmatpush.msra.mxu0 %v1631
      %1647 = vmatpush.msra.mxu0 %v1630
      %1648 = vmatmul.f32.gmra.mxu0 %v544
      %v1649 = vpop.f32.mrf.mxu0
      %v1650 = vadd.f32 0.0, %v1649
      %1651 = vmatmul.f32.gmra.mxu0 %v547
      %v1652 = vpop.f32.mrf.mxu0
      %v1653 = vadd.f32 0.0, %v1652
      %1654 = vmatmul.f32.gmra.mxu0 %v550
      %v1655 = vpop.f32.mrf.mxu0
      %v1656 = vadd.f32 0.0, %v1655
      %1657 = vmatmul.f32.gmra.mxu0 %v553
      %v1658 = vpop.f32.mrf.mxu0
      %v1659 = vadd.f32 0.0, %v1658
      %1660 = vmatmul.f32.gmra.mxu0 %v556
      %v1661 = vpop.f32.mrf.mxu0
      %v1662 = vadd.f32 0.0, %v1661
      %1663 = vmatmul.f32.gmra.mxu0 %v559
      %v1664 = vpop.f32.mrf.mxu0
      %v1665 = vadd.f32 0.0, %v1664
      %1666 = vmatmul.f32.gmra.mxu0 %v562
      %v1667 = vpop.f32.mrf.mxu0
      %v1668 = vadd.f32 0.0, %v1667
      %1669 = vmatmul.f32.gmra.mxu0 %v565
      %v1670 = vpop.f32.mrf.mxu0
      %v1671 = vadd.f32 0.0, %v1670
      %1672 = vdwg.mxu0
      %s1673 = scalar_lea.vmem %s5, 32
      %v1674 = vld [vmem:[%s1673] sm:$0xff]
      %v1675 = vld [vmem:[%s1673 + $0x8] sm:$0xff]
      %1676 = vmatpush.msra.mxu0 0.0
      %1677 = vmatpush.msra.mxu0 0.0
      %1678 = vmatpush.msra.mxu0 0.0
      %1679 = vmatpush.msra.mxu0 0.0
      %1680 = vmatpush.msra.mxu0 0.0
      %1681 = vmatpush.msra.mxu0 0.0
      %1682 = vmatpush.msra.mxu0 0.0
      %1683 = vmatpush.msra.mxu0 0.0
      %1684 = vmatpush.msra.mxu0 0.0
      %1685 = vmatpush.msra.mxu0 0.0
      %1686 = vmatpush.msra.mxu0 0.0
      %1687 = vmatpush.msra.mxu0 0.0
      %1688 = vmatpush.msra.mxu0 0.0
      %1689 = vmatpush.msra.mxu0 0.0
      %1690 = vmatpush.msra.mxu0 %v1675
      %1691 = vmatpush.msra.mxu0 %v1674
      %1692 = vmatmul.f32.gmra.mxu0 %v544
      %v1693 = vpop.f32.mrf.mxu0
      %v1694 = vadd.f32 0.0, %v1693
      %1695 = vmatmul.f32.gmra.mxu0 %v547
      %v1696 = vpop.f32.mrf.mxu0
      %v1697 = vadd.f32 0.0, %v1696
      %1698 = vmatmul.f32.gmra.mxu0 %v550
      %v1699 = vpop.f32.mrf.mxu0
      %v1700 = vadd.f32 0.0, %v1699
      %1701 = vmatmul.f32.gmra.mxu0 %v553
      %v1702 = vpop.f32.mrf.mxu0
      %v1703 = vadd.f32 0.0, %v1702
      %1704 = vmatmul.f32.gmra.mxu0 %v556
      %v1705 = vpop.f32.mrf.mxu0
      %v1706 = vadd.f32 0.0, %v1705
      %1707 = vmatmul.f32.gmra.mxu0 %v559
      %v1708 = vpop.f32.mrf.mxu0
      %v1709 = vadd.f32 0.0, %v1708
      %1710 = vmatmul.f32.gmra.mxu0 %v562
      %v1711 = vpop.f32.mrf.mxu0
      %v1712 = vadd.f32 0.0, %v1711
      %1713 = vmatmul.f32.gmra.mxu0 %v565
      %v1714 = vpop.f32.mrf.mxu0
      %v1715 = vadd.f32 0.0, %v1714
      %1716 = vdwg.mxu0
      %v1717 = vsel %vm694, %v1606, -inf
      %1718 = vmax.xlane.f32.xlu0 %v1717
      %v1719 = vpop.xlane.xlu0 %1718
      %v1720 = vsel %vm694, %v1609, -inf
      %1721 = vmax.xlane.f32.xlu0 %v1720
      %v1722 = vpop.xlane.xlu0 %1721
      %v1723 = vsel %vm694, %v1612, -inf
      %1724 = vmax.xlane.f32.xlu0 %v1723
      %v1725 = vpop.xlane.xlu0 %1724
      %v1726 = vsel %vm694, %v1615, -inf
      %1727 = vmax.xlane.f32.xlu0 %v1726
      %v1728 = vpop.xlane.xlu0 %1727
      %v1729 = vsel %vm694, %v1618, -inf
      %1730 = vmax.xlane.f32.xlu0 %v1729
      %v1731 = vpop.xlane.xlu0 %1730
      %v1732 = vsel %vm694, %v1621, -inf
      %1733 = vmax.xlane.f32.xlu0 %v1732
      %v1734 = vpop.xlane.xlu0 %1733
      %v1735 = vsel %vm694, %v1624, -inf
      %1736 = vmax.xlane.f32.xlu0 %v1735
      %v1737 = vpop.xlane.xlu0 %1736
      %v1738 = vsel %vm694, %v1627, -inf
      %1739 = vmax.xlane.f32.xlu0 %v1738
      %v1740 = vpop.xlane.xlu0 %1739
      %v1741 = vsub.f32 %v1606, %v1719
      %v1742 = vsub.f32 %v1609, %v1722
      %v1743 = vsub.f32 %v1612, %v1725
      %v1744 = vsub.f32 %v1615, %v1728
      %v1745 = vsub.f32 %v1618, %v1731
      %v1746 = vsub.f32 %v1621, %v1734
      %v1747 = vsub.f32 %v1624, %v1737
      %v1748 = vsub.f32 %v1627, %v1740
      %v1749 = vmul.f32 %v1741, 1.442695
      %v1750 = vpow.pop %v1749
      %v1751 = vmul.f32 %v1742, 1.442695
      %v1752 = vpow.pop %v1751
      %v1753 = vmul.f32 %v1743, 1.442695
      %v1754 = vpow.pop %v1753
      %v1755 = vmul.f32 %v1744, 1.442695
      %v1756 = vpow.pop %v1755
      %v1757 = vmul.f32 %v1745, 1.442695
      %v1758 = vpow.pop %v1757
      %v1759 = vmul.f32 %v1746, 1.442695
      %v1760 = vpow.pop %v1759
      %v1761 = vmul.f32 %v1747, 1.442695
      %v1762 = vpow.pop %v1761
      %v1763 = vmul.f32 %v1748, 1.442695
      %v1764 = vpow.pop %v1763
      %v1765 = vsel %vm694, %v1750, 0.0
      %1766 = vadd.xlane.f32.xlu0 %v1765
      %v1767 = vpop.xlane.xlu0 %1766
      %v1768 = vsel %vm694, %v1752, 0.0
      %1769 = vadd.xlane.f32.xlu0 %v1768
      %v1770 = vpop.xlane.xlu0 %1769
      %v1771 = vsel %vm694, %v1754, 0.0
      %1772 = vadd.xlane.f32.xlu0 %v1771
      %v1773 = vpop.xlane.xlu0 %1772
      %v1774 = vsel %vm694, %v1756, 0.0
      %1775 = vadd.xlane.f32.xlu0 %v1774
      %v1776 = vpop.xlane.xlu0 %1775
      %v1777 = vsel %vm694, %v1758, 0.0
      %1778 = vadd.xlane.f32.xlu0 %v1777
      %v1779 = vpop.xlane.xlu0 %1778
      %v1780 = vsel %vm694, %v1760, 0.0
      %1781 = vadd.xlane.f32.xlu0 %v1780
      %v1782 = vpop.xlane.xlu0 %1781
      %v1783 = vsel %vm694, %v1762, 0.0
      %1784 = vadd.xlane.f32.xlu0 %v1783
      %v1785 = vpop.xlane.xlu0 %1784
      %v1786 = vsel %vm694, %v1764, 0.0
      %1787 = vadd.xlane.f32.xlu0 %v1786
      %v1788 = vpop.xlane.xlu0 %1787
      %v1789 = vrcp.pop %v1767
      %v1790 = vrcp.pop %v1770
      %v1791 = vrcp.pop %v1773
      %v1792 = vrcp.pop %v1776
      %v1793 = vrcp.pop %v1779
      %v1794 = vrcp.pop %v1782
      %v1795 = vrcp.pop %v1785
      %v1796 = vrcp.pop %v1788
      %v1797 = vmul.f32 %v1750, %v1789
      %v1798 = vmul.f32 %v1752, %v1790
      %v1799 = vmul.f32 %v1754, %v1791
      %v1800 = vmul.f32 %v1756, %v1792
      %v1801 = vmul.f32 %v1758, %v1793
      %v1802 = vmul.f32 %v1760, %v1794
      %v1803 = vmul.f32 %v1762, %v1795
      %v1804 = vmul.f32 %v1764, %v1796
      %v1805 = vmul.f32 %v1797, 0.17677669
      %v1806 = vmul.f32 %v1798, 0.17677669
      %v1807 = vmul.f32 %v1799, 0.17677669
      %v1808 = vmul.f32 %v1800, 0.17677669
      %v1809 = vmul.f32 %v1801, 0.17677669
      %v1810 = vmul.f32 %v1802, 0.17677669
      %v1811 = vmul.f32 %v1803, 0.17677669
      %v1812 = vmul.f32 %v1804, 0.17677669
      %v1813 = vsel %vm694, %v1650, -inf
      %v1814 = vsel %vm694, %v1653, -inf
      %v1815 = vsel %vm694, %v1656, -inf
      %v1816 = vsel %vm694, %v1659, -inf
      %v1817 = vsel %vm694, %v1662, -inf
      %v1818 = vmax.f32 %v1813, %v1817
      %v1819 = vsel %vm694, %v1665, -inf
      %v1820 = vmax.f32 %v1814, %v1819
      %v1821 = vsel %vm694, %v1668, -inf
      %v1822 = vmax.f32 %v1815, %v1821
      %v1823 = vsel %vm694, %v1671, -inf
      %v1824 = vmax.f32 %v1816, %v1823
      %v1825 = vmax.f32 %v1818, %v1820
      %v1826 = vmax.f32 %v1822, %v1824
      %v1827 = vmax.f32 %v1825, %v1826
      %v1828 = vrot.slane %v1827, 4
      %v1829 = vmax.f32 %v1827, %v1828
      %v1830 = vrot.slane %v1829, 2
      %v1831 = vmax.f32 %v1829, %v1830
      %v1832 = vrot.slane %v1831, 1
      %v1833 = vmax.f32 %v1831, %v1832
      %v1834 = vsub.f32 %v1650, %v1833
      %v1835 = vsub.f32 %v1653, %v1833
      %v1836 = vsub.f32 %v1656, %v1833
      %v1837 = vsub.f32 %v1659, %v1833
      %v1838 = vsub.f32 %v1662, %v1833
      %v1839 = vsub.f32 %v1665, %v1833
      %v1840 = vsub.f32 %v1668, %v1833
      %v1841 = vsub.f32 %v1671, %v1833
      %v1842 = vmul.f32 %v1834, 1.442695
      %v1843 = vpow.pop %v1842
      %v1844 = vmul.f32 %v1835, 1.442695
      %v1845 = vpow.pop %v1844
      %v1846 = vmul.f32 %v1836, 1.442695
      %v1847 = vpow.pop %v1846
      %v1848 = vmul.f32 %v1837, 1.442695
      %v1849 = vpow.pop %v1848
      %v1850 = vmul.f32 %v1838, 1.442695
      %v1851 = vpow.pop %v1850
      %v1852 = vmul.f32 %v1839, 1.442695
      %v1853 = vpow.pop %v1852
      %v1854 = vmul.f32 %v1840, 1.442695
      %v1855 = vpow.pop %v1854
      %v1856 = vmul.f32 %v1841, 1.442695
      %v1857 = vpow.pop %v1856
      %v1858 = vsel %vm694, %v1843, 0.0
      %v1859 = vsel %vm694, %v1845, 0.0
      %v1860 = vadd.f32 %v1858, %v1859
      %v1861 = vsel %vm694, %v1847, 0.0
      %v1862 = vadd.f32 %v1860, %v1861
      %v1863 = vsel %vm694, %v1849, 0.0
      %v1864 = vadd.f32 %v1862, %v1863
      %v1865 = vsel %vm694, %v1851, 0.0
      %v1866 = vadd.f32 %v1864, %v1865
      %v1867 = vsel %vm694, %v1853, 0.0
      %v1868 = vadd.f32 %v1866, %v1867
      %v1869 = vsel %vm694, %v1855, 0.0
      %v1870 = vadd.f32 %v1868, %v1869
      %v1871 = vsel %vm694, %v1857, 0.0
      %v1872 = vadd.f32 %v1870, %v1871
      %v1873 = vrot.slane %v1872, 4
      %v1874 = vadd.f32 %v1872, %v1873
      %v1875 = vrot.slane %v1874, 2
      %v1876 = vadd.f32 %v1874, %v1875
      %v1877 = vrot.slane %v1876, 1
      %v1878 = vadd.f32 %v1876, %v1877
      %v1879 = vrcp.pop %v1878
      %v1880 = vmul.f32 %v1843, %v1879
      %v1881 = vmul.f32 %v1845, %v1879
      %v1882 = vmul.f32 %v1847, %v1879
      %v1883 = vmul.f32 %v1849, %v1879
      %v1884 = vmul.f32 %v1851, %v1879
      %v1885 = vmul.f32 %v1853, %v1879
      %v1886 = vmul.f32 %v1855, %v1879
      %v1887 = vmul.f32 %v1857, %v1879
      %1888 = vxpose.xlu0.b32.start [1/16] %v1880, 128
      %1889 = vxpose.xlu0.b32.cont [2/16] %v1881, 128
      %1890 = vxpose.xlu0.b32.cont [3/16] %v1882, 128
      %1891 = vxpose.xlu0.b32.cont [4/16] %v1883, 128
      %1892 = vxpose.xlu0.b32.cont [5/16] %v1884, 128
      %1893 = vxpose.xlu0.b32.cont [6/16] %v1885, 128
      %1894 = vxpose.xlu0.b32.cont [7/16] %v1886, 128
      %1895 = vxpose.xlu0.b32.cont [8/16] %v1887, 128
      %1896 = vxpose.xlu0.b32.cont [9/16] 0.0, 128
      %1897 = vxpose.xlu0.b32.cont [10/16] 0.0, 128
      %1898 = vxpose.xlu0.b32.cont [11/16] 0.0, 128
      %1899 = vxpose.xlu0.b32.cont [12/16] 0.0, 128
      %1900 = vxpose.xlu0.b32.cont [13/16] 0.0, 128
      %1901 = vxpose.xlu0.b32.cont [14/16] 0.0, 128
      %1902 = vxpose.xlu0.b32.cont [15/16] 0.0, 128
      %1903 = vxpose.xlu0.b32.end [16/16] 0.0, 128
      %v1904 = vpop.trf.xlu0
      %v1905 = vpop.trf.xlu0
      %v1906 = vpop.trf.xlu0
      %v1907 = vpop.trf.xlu0
      %v1908 = vpop.trf.xlu0
      %v1909 = vpop.trf.xlu0
      %v1910 = vpop.trf.xlu0
      %v1911 = vpop.trf.xlu0
      %v1912 = vpop.trf.xlu0
      %v1913 = vpop.trf.xlu0
      %v1914 = vpop.trf.xlu0
      %v1915 = vpop.trf.xlu0
      %v1916 = vpop.trf.xlu0
      %v1917 = vpop.trf.xlu0
      %v1918 = vpop.trf.xlu0
      %v1919 = vpop.trf.xlu0
      %v1921 = vsel %vm898, %v1904, 0
      %v1924 = vsel %vm898, %v1905, 0
      %v1927 = vsel %vm898, %v1906, 0
      %v1930 = vsel %vm898, %v1907, 0
      %1932 = vmatpush.msra.mxu0 0.0
      %1933 = vmatpush.msra.mxu0 0.0
      %1934 = vmatpush.msra.mxu0 0.0
      %1935 = vmatpush.msra.mxu0 0.0
      %1936 = vmatpush.msra.mxu0 0.0
      %1937 = vmatpush.msra.mxu0 0.0
      %1938 = vmatpush.msra.mxu0 0.0
      %1939 = vmatpush.msra.mxu0 0.0
      %1940 = vmatpush.msra.mxu0 %v1715
      %1941 = vmatpush.msra.mxu0 %v1712
      %1942 = vmatpush.msra.mxu0 %v1709
      %1943 = vmatpush.msra.mxu0 %v1706
      %1944 = vmatpush.msra.mxu0 %v1703
      %1945 = vmatpush.msra.mxu0 %v1700
      %1946 = vmatpush.msra.mxu0 %v1697
      %1947 = vmatpush.msra.mxu0 %v1694
      %1948 = vmatmul.f32.gmra.mxu0 %v1921
      %v1949 = vpop.f32.mrf.mxu0
      %v1950 = vadd.f32 0.0, %v1949
      %1951 = vmatmul.f32.gmra.mxu0 %v1924
      %v1952 = vpop.f32.mrf.mxu0
      %v1953 = vadd.f32 0.0, %v1952
      %1954 = vmatmul.f32.gmra.mxu0 %v1927
      %v1955 = vpop.f32.mrf.mxu0
      %v1956 = vadd.f32 0.0, %v1955
      %1957 = vmatmul.f32.gmra.mxu0 %v1930
      %v1958 = vpop.f32.mrf.mxu0
      %v1959 = vadd.f32 0.0, %v1958
      %1960 = vdwg.mxu0
      %v1962 = vsel %vm694, %v1805, 0
      %v1965 = vsel %vm694, %v1806, 0
      %v1968 = vsel %vm694, %v1807, 0
      %v1971 = vsel %vm694, %v1808, 0
      %v1974 = vsel %vm694, %v1809, 0
      %v1977 = vsel %vm694, %v1810, 0
      %v1980 = vsel %vm694, %v1811, 0
      %v1983 = vsel %vm694, %v1812, 0
      %1985 = vmatpush.msra.mxu0 0.0
      %1986 = vmatpush.msra.mxu0 0.0
      %1987 = vmatpush.msra.mxu0 0.0
      %1988 = vmatpush.msra.mxu0 0.0
      %1989 = vmatpush.msra.mxu0 0.0
      %1990 = vmatpush.msra.mxu0 0.0
      %1991 = vmatpush.msra.mxu0 0.0
      %1992 = vmatpush.msra.mxu0 0.0
      %1993 = vmatpush.msra.mxu0 0.0
      %1994 = vmatpush.msra.mxu0 0.0
      %1995 = vmatpush.msra.mxu0 0.0
      %1996 = vmatpush.msra.mxu0 0.0
      %1997 = vmatpush.msra.mxu0 %v1959
      %1998 = vmatpush.msra.mxu0 %v1956
      %1999 = vmatpush.msra.mxu0 %v1953
      %2000 = vmatpush.msra.mxu0 %v1950
      %2001 = vmatmul.f32.gmra.mxu0 %v1962
      %v2002 = vpop.f32.mrf.mxu0
      %v2003 = vadd.f32 0.0, %v2002
      %2004 = vmatmul.f32.gmra.mxu0 %v1965
      %v2005 = vpop.f32.mrf.mxu0
      %v2006 = vadd.f32 0.0, %v2005
      %2007 = vmatmul.f32.gmra.mxu0 %v1968
      %v2008 = vpop.f32.mrf.mxu0
      %v2009 = vadd.f32 0.0, %v2008
      %2010 = vmatmul.f32.gmra.mxu0 %v1971
      %v2011 = vpop.f32.mrf.mxu0
      %v2012 = vadd.f32 0.0, %v2011
      %2013 = vmatmul.f32.gmra.mxu0 %v1974
      %v2014 = vpop.f32.mrf.mxu0
      %v2015 = vadd.f32 0.0, %v2014
      %2016 = vmatmul.f32.gmra.mxu0 %v1977
      %v2017 = vpop.f32.mrf.mxu0
      %v2018 = vadd.f32 0.0, %v2017
      %2019 = vmatmul.f32.gmra.mxu0 %v1980
      %v2020 = vpop.f32.mrf.mxu0
      %v2021 = vadd.f32 0.0, %v2020
      %2022 = vmatmul.f32.gmra.mxu0 %v1983
      %v2023 = vpop.f32.mrf.mxu0
      %v2024 = vadd.f32 0.0, %v2023
      %2025 = vdwg.mxu0
      %s2026 = scalar_lea.vmem %s6, 64
      %v2027 = vld [vmem:[%s2026] sm:$0xff]
      %v2028 = vld [vmem:[%s2026 + $0x8] sm:$0xff]
      %v2029 = vld [vmem:[%s2026 + $0x10] sm:$0xff]
      %v2030 = vld [vmem:[%s2026 + $0x18] sm:$0xff]
      %v2032 = vsel %vm694, %v2003, 0
      %v2035 = vsel %vm694, %v2006, 0
      %v2038 = vsel %vm694, %v2009, 0
      %v2041 = vsel %vm694, %v2012, 0
      %v2044 = vsel %vm694, %v2015, 0
      %v2047 = vsel %vm694, %v2018, 0
      %v2050 = vsel %vm694, %v2021, 0
      %v2053 = vsel %vm694, %v2024, 0
      %2055 = vmatpush.msra.mxu0 0.0
      %2056 = vmatpush.msra.mxu0 0.0
      %2057 = vmatpush.msra.mxu0 0.0
      %2058 = vmatpush.msra.mxu0 0.0
      %2059 = vmatpush.msra.mxu0 0.0
      %2060 = vmatpush.msra.mxu0 0.0
      %2061 = vmatpush.msra.mxu0 0.0
      %2062 = vmatpush.msra.mxu0 0.0
      %2063 = vmatpush.msra.mxu0 0.0
      %2064 = vmatpush.msra.mxu0 0.0
      %2065 = vmatpush.msra.mxu0 0.0
      %2066 = vmatpush.msra.mxu0 0.0
      %2067 = vmatpush.msra.mxu0 %v2030
      %2068 = vmatpush.msra.mxu0 %v2029
      %2069 = vmatpush.msra.mxu0 %v2028
      %2070 = vmatpush.msra.mxu0 %v2027
      %2071 = vmatmul.f32.gmra.mxu0 %v2032
      %v2072 = vpop.f32.mrf.mxu0
      %v2073 = vadd.f32 0.0, %v2072
      %2074 = vmatmul.f32.gmra.mxu0 %v2035
      %v2075 = vpop.f32.mrf.mxu0
      %v2076 = vadd.f32 0.0, %v2075
      %2077 = vmatmul.f32.gmra.mxu0 %v2038
      %v2078 = vpop.f32.mrf.mxu0
      %v2079 = vadd.f32 0.0, %v2078
      %2080 = vmatmul.f32.gmra.mxu0 %v2041
      %v2081 = vpop.f32.mrf.mxu0
      %v2082 = vadd.f32 0.0, %v2081
      %2083 = vmatmul.f32.gmra.mxu0 %v2044
      %v2084 = vpop.f32.mrf.mxu0
      %v2085 = vadd.f32 0.0, %v2084
      %2086 = vmatmul.f32.gmra.mxu0 %v2047
      %v2087 = vpop.f32.mrf.mxu0
      %v2088 = vadd.f32 0.0, %v2087
      %2089 = vmatmul.f32.gmra.mxu0 %v2050
      %v2090 = vpop.f32.mrf.mxu0
      %v2091 = vadd.f32 0.0, %v2090
      %2092 = vmatmul.f32.gmra.mxu0 %v2053
      %v2093 = vpop.f32.mrf.mxu0
      %v2094 = vadd.f32 0.0, %v2093
      %2095 = vdwg.mxu0
      %v2096 = vadd.f32 %v1562, %v2073
      %v2097 = vadd.f32 %v1565, %v2076
      %v2098 = vadd.f32 %v1568, %v2079
      %v2099 = vadd.f32 %v1571, %v2082
      %v2100 = vadd.f32 %v1574, %v2085
      %v2101 = vadd.f32 %v1577, %v2088
      %v2102 = vadd.f32 %v1580, %v2091
      %v2103 = vadd.f32 %v1583, %v2094
      %s2104 = scalar_lea.vmem %s3, 48
      %v2105 = vld [vmem:[%s2104] sm:$0xff]
      %v2106 = vld [vmem:[%s2104 + $0x8] sm:$0xff]
      %2107 = vmatpush.msra.mxu0 0.0
      %2108 = vmatpush.msra.mxu0 0.0
      %2109 = vmatpush.msra.mxu0 0.0
      %2110 = vmatpush.msra.mxu0 0.0
      %2111 = vmatpush.msra.mxu0 0.0
      %2112 = vmatpush.msra.mxu0 0.0
      %2113 = vmatpush.msra.mxu0 0.0
      %2114 = vmatpush.msra.mxu0 0.0
      %2115 = vmatpush.msra.mxu0 0.0
      %2116 = vmatpush.msra.mxu0 0.0
      %2117 = vmatpush.msra.mxu0 0.0
      %2118 = vmatpush.msra.mxu0 0.0
      %2119 = vmatpush.msra.mxu0 0.0
      %2120 = vmatpush.msra.mxu0 0.0
      %2121 = vmatpush.msra.mxu0 %v2106
      %2122 = vmatpush.msra.mxu0 %v2105
      %2123 = vmatmul.f32.gmra.mxu0 %v544
      %v2124 = vpop.f32.mrf.mxu0
      %v2125 = vadd.f32 0.0, %v2124
      %2126 = vmatmul.f32.gmra.mxu0 %v547
      %v2127 = vpop.f32.mrf.mxu0
      %v2128 = vadd.f32 0.0, %v2127
      %2129 = vmatmul.f32.gmra.mxu0 %v550
      %v2130 = vpop.f32.mrf.mxu0
      %v2131 = vadd.f32 0.0, %v2130
      %2132 = vmatmul.f32.gmra.mxu0 %v553
      %v2133 = vpop.f32.mrf.mxu0
      %v2134 = vadd.f32 0.0, %v2133
      %2135 = vmatmul.f32.gmra.mxu0 %v556
      %v2136 = vpop.f32.mrf.mxu0
      %v2137 = vadd.f32 0.0, %v2136
      %2138 = vmatmul.f32.gmra.mxu0 %v559
      %v2139 = vpop.f32.mrf.mxu0
      %v2140 = vadd.f32 0.0, %v2139
      %2141 = vmatmul.f32.gmra.mxu0 %v562
      %v2142 = vpop.f32.mrf.mxu0
      %v2143 = vadd.f32 0.0, %v2142
      %2144 = vmatmul.f32.gmra.mxu0 %v565
      %v2145 = vpop.f32.mrf.mxu0
      %v2146 = vadd.f32 0.0, %v2145
      %2147 = vdwg.mxu0
      %s2148 = scalar_lea.vmem %s4, 48
      %v2149 = vld [vmem:[%s2148] sm:$0xff]
      %v2150 = vld [vmem:[%s2148 + $0x8] sm:$0xff]
      %2151 = vmatpush.msra.mxu0 0.0
      %2152 = vmatpush.msra.mxu0 0.0
      %2153 = vmatpush.msra.mxu0 0.0
      %2154 = vmatpush.msra.mxu0 0.0
      %2155 = vmatpush.msra.mxu0 0.0
      %2156 = vmatpush.msra.mxu0 0.0
      %2157 = vmatpush.msra.mxu0 0.0
      %2158 = vmatpush.msra.mxu0 0.0
      %2159 = vmatpush.msra.mxu0 0.0
      %2160 = vmatpush.msra.mxu0 0.0
      %2161 = vmatpush.msra.mxu0 0.0
      %2162 = vmatpush.msra.mxu0 0.0
      %2163 = vmatpush.msra.mxu0 0.0
      %2164 = vmatpush.msra.mxu0 0.0
      %2165 = vmatpush.msra.mxu0 %v2150
      %2166 = vmatpush.msra.mxu0 %v2149
      %2167 = vmatmul.f32.gmra.mxu0 %v544
      %v2168 = vpop.f32.mrf.mxu0
      %v2169 = vadd.f32 0.0, %v2168
      %2170 = vmatmul.f32.gmra.mxu0 %v547
      %v2171 = vpop.f32.mrf.mxu0
      %v2172 = vadd.f32 0.0, %v2171
      %2173 = vmatmul.f32.gmra.mxu0 %v550
      %v2174 = vpop.f32.mrf.mxu0
      %v2175 = vadd.f32 0.0, %v2174
      %2176 = vmatmul.f32.gmra.mxu0 %v553
      %v2177 = vpop.f32.mrf.mxu0
      %v2178 = vadd.f32 0.0, %v2177
      %2179 = vmatmul.f32.gmra.mxu0 %v556
      %v2180 = vpop.f32.mrf.mxu0
      %v2181 = vadd.f32 0.0, %v2180
      %2182 = vmatmul.f32.gmra.mxu0 %v559
      %v2183 = vpop.f32.mrf.mxu0
      %v2184 = vadd.f32 0.0, %v2183
      %2185 = vmatmul.f32.gmra.mxu0 %v562
      %v2186 = vpop.f32.mrf.mxu0
      %v2187 = vadd.f32 0.0, %v2186
      %2188 = vmatmul.f32.gmra.mxu0 %v565
      %v2189 = vpop.f32.mrf.mxu0
      %v2190 = vadd.f32 0.0, %v2189
      %2191 = vdwg.mxu0
      %s2192 = scalar_lea.vmem %s5, 48
      %v2193 = vld [vmem:[%s2192] sm:$0xff]
      %v2194 = vld [vmem:[%s2192 + $0x8] sm:$0xff]
      %2195 = vmatpush.msra.mxu0 0.0
      %2196 = vmatpush.msra.mxu0 0.0
      %2197 = vmatpush.msra.mxu0 0.0
      %2198 = vmatpush.msra.mxu0 0.0
      %2199 = vmatpush.msra.mxu0 0.0
      %2200 = vmatpush.msra.mxu0 0.0
      %2201 = vmatpush.msra.mxu0 0.0
      %2202 = vmatpush.msra.mxu0 0.0
      %2203 = vmatpush.msra.mxu0 0.0
      %2204 = vmatpush.msra.mxu0 0.0
      %2205 = vmatpush.msra.mxu0 0.0
      %2206 = vmatpush.msra.mxu0 0.0
      %2207 = vmatpush.msra.mxu0 0.0
      %2208 = vmatpush.msra.mxu0 0.0
      %2209 = vmatpush.msra.mxu0 %v2194
      %2210 = vmatpush.msra.mxu0 %v2193
      %2211 = vmatmul.f32.gmra.mxu0 %v544
      %v2212 = vpop.f32.mrf.mxu0
      %v2213 = vadd.f32 0.0, %v2212
      %2214 = vmatmul.f32.gmra.mxu0 %v547
      %v2215 = vpop.f32.mrf.mxu0
      %v2216 = vadd.f32 0.0, %v2215
      %2217 = vmatmul.f32.gmra.mxu0 %v550
      %v2218 = vpop.f32.mrf.mxu0
      %v2219 = vadd.f32 0.0, %v2218
      %2220 = vmatmul.f32.gmra.mxu0 %v553
      %v2221 = vpop.f32.mrf.mxu0
      %v2222 = vadd.f32 0.0, %v2221
      %2223 = vmatmul.f32.gmra.mxu0 %v556
      %v2224 = vpop.f32.mrf.mxu0
      %v2225 = vadd.f32 0.0, %v2224
      %2226 = vmatmul.f32.gmra.mxu0 %v559
      %v2227 = vpop.f32.mrf.mxu0
      %v2228 = vadd.f32 0.0, %v2227
      %2229 = vmatmul.f32.gmra.mxu0 %v562
      %v2230 = vpop.f32.mrf.mxu0
      %v2231 = vadd.f32 0.0, %v2230
      %2232 = vmatmul.f32.gmra.mxu0 %v565
      %v2233 = vpop.f32.mrf.mxu0
      %v2234 = vadd.f32 0.0, %v2233
      %2235 = vdwg.mxu0
      %v2236 = vsel %vm694, %v2125, -inf
      %2237 = vmax.xlane.f32.xlu0 %v2236
      %v2238 = vpop.xlane.xlu0 %2237
      %v2239 = vsel %vm694, %v2128, -inf
      %2240 = vmax.xlane.f32.xlu0 %v2239
      %v2241 = vpop.xlane.xlu0 %2240
      %v2242 = vsel %vm694, %v2131, -inf
      %2243 = vmax.xlane.f32.xlu0 %v2242
      %v2244 = vpop.xlane.xlu0 %2243
      %v2245 = vsel %vm694, %v2134, -inf
      %2246 = vmax.xlane.f32.xlu0 %v2245
      %v2247 = vpop.xlane.xlu0 %2246
      %v2248 = vsel %vm694, %v2137, -inf
      %2249 = vmax.xlane.f32.xlu0 %v2248
      %v2250 = vpop.xlane.xlu0 %2249
      %v2251 = vsel %vm694, %v2140, -inf
      %2252 = vmax.xlane.f32.xlu0 %v2251
      %v2253 = vpop.xlane.xlu0 %2252
      %v2254 = vsel %vm694, %v2143, -inf
      %2255 = vmax.xlane.f32.xlu0 %v2254
      %v2256 = vpop.xlane.xlu0 %2255
      %v2257 = vsel %vm694, %v2146, -inf
      %2258 = vmax.xlane.f32.xlu0 %v2257
      %v2259 = vpop.xlane.xlu0 %2258
      %v2260 = vsub.f32 %v2125, %v2238
      %v2261 = vsub.f32 %v2128, %v2241
      %v2262 = vsub.f32 %v2131, %v2244
      %v2263 = vsub.f32 %v2134, %v2247
      %v2264 = vsub.f32 %v2137, %v2250
      %v2265 = vsub.f32 %v2140, %v2253
      %v2266 = vsub.f32 %v2143, %v2256
      %v2267 = vsub.f32 %v2146, %v2259
      %v2268 = vmul.f32 %v2260, 1.442695
      %v2269 = vpow.pop %v2268
      %v2270 = vmul.f32 %v2261, 1.442695
      %v2271 = vpow.pop %v2270
      %v2272 = vmul.f32 %v2262, 1.442695
      %v2273 = vpow.pop %v2272
      %v2274 = vmul.f32 %v2263, 1.442695
      %v2275 = vpow.pop %v2274
      %v2276 = vmul.f32 %v2264, 1.442695
      %v2277 = vpow.pop %v2276
      %v2278 = vmul.f32 %v2265, 1.442695
      %v2279 = vpow.pop %v2278
      %v2280 = vmul.f32 %v2266, 1.442695
      %v2281 = vpow.pop %v2280
      %v2282 = vmul.f32 %v2267, 1.442695
      %v2283 = vpow.pop %v2282
      %v2284 = vsel %vm694, %v2269, 0.0
      %2285 = vadd.xlane.f32.xlu0 %v2284
      %v2286 = vpop.xlane.xlu0 %2285
      %v2287 = vsel %vm694, %v2271, 0.0
      %2288 = vadd.xlane.f32.xlu0 %v2287
      %v2289 = vpop.xlane.xlu0 %2288
      %v2290 = vsel %vm694, %v2273, 0.0
      %2291 = vadd.xlane.f32.xlu0 %v2290
      %v2292 = vpop.xlane.xlu0 %2291
      %v2293 = vsel %vm694, %v2275, 0.0
      %2294 = vadd.xlane.f32.xlu0 %v2293
      %v2295 = vpop.xlane.xlu0 %2294
      %v2296 = vsel %vm694, %v2277, 0.0
      %2297 = vadd.xlane.f32.xlu0 %v2296
      %v2298 = vpop.xlane.xlu0 %2297
      %v2299 = vsel %vm694, %v2279, 0.0
      %2300 = vadd.xlane.f32.xlu0 %v2299
      %v2301 = vpop.xlane.xlu0 %2300
      %v2302 = vsel %vm694, %v2281, 0.0
      %2303 = vadd.xlane.f32.xlu0 %v2302
      %v2304 = vpop.xlane.xlu0 %2303
      %v2305 = vsel %vm694, %v2283, 0.0
      %2306 = vadd.xlane.f32.xlu0 %v2305
      %v2307 = vpop.xlane.xlu0 %2306
      %v2308 = vrcp.pop %v2286
      %v2309 = vrcp.pop %v2289
      %v2310 = vrcp.pop %v2292
      %v2311 = vrcp.pop %v2295
      %v2312 = vrcp.pop %v2298
      %v2313 = vrcp.pop %v2301
      %v2314 = vrcp.pop %v2304
      %v2315 = vrcp.pop %v2307
      %v2316 = vmul.f32 %v2269, %v2308
      %v2317 = vmul.f32 %v2271, %v2309
      %v2318 = vmul.f32 %v2273, %v2310
      %v2319 = vmul.f32 %v2275, %v2311
      %v2320 = vmul.f32 %v2277, %v2312
      %v2321 = vmul.f32 %v2279, %v2313
      %v2322 = vmul.f32 %v2281, %v2314
      %v2323 = vmul.f32 %v2283, %v2315
      %v2324 = vmul.f32 %v2316, 0.17677669
      %v2325 = vmul.f32 %v2317, 0.17677669
      %v2326 = vmul.f32 %v2318, 0.17677669
      %v2327 = vmul.f32 %v2319, 0.17677669
      %v2328 = vmul.f32 %v2320, 0.17677669
      %v2329 = vmul.f32 %v2321, 0.17677669
      %v2330 = vmul.f32 %v2322, 0.17677669
      %v2331 = vmul.f32 %v2323, 0.17677669
      %v2332 = vsel %vm694, %v2169, -inf
      %v2333 = vsel %vm694, %v2172, -inf
      %v2334 = vsel %vm694, %v2175, -inf
      %v2335 = vsel %vm694, %v2178, -inf
      %v2336 = vsel %vm694, %v2181, -inf
      %v2337 = vmax.f32 %v2332, %v2336
      %v2338 = vsel %vm694, %v2184, -inf
      %v2339 = vmax.f32 %v2333, %v2338
      %v2340 = vsel %vm694, %v2187, -inf
      %v2341 = vmax.f32 %v2334, %v2340
      %v2342 = vsel %vm694, %v2190, -inf
      %v2343 = vmax.f32 %v2335, %v2342
      %v2344 = vmax.f32 %v2337, %v2339
      %v2345 = vmax.f32 %v2341, %v2343
      %v2346 = vmax.f32 %v2344, %v2345
      %v2347 = vrot.slane %v2346, 4
      %v2348 = vmax.f32 %v2346, %v2347
      %v2349 = vrot.slane %v2348, 2
      %v2350 = vmax.f32 %v2348, %v2349
      %v2351 = vrot.slane %v2350, 1
      %v2352 = vmax.f32 %v2350, %v2351
      %v2353 = vsub.f32 %v2169, %v2352
      %v2354 = vsub.f32 %v2172, %v2352
      %v2355 = vsub.f32 %v2175, %v2352
      %v2356 = vsub.f32 %v2178, %v2352
      %v2357 = vsub.f32 %v2181, %v2352
      %v2358 = vsub.f32 %v2184, %v2352
      %v2359 = vsub.f32 %v2187, %v2352
      %v2360 = vsub.f32 %v2190, %v2352
      %v2361 = vmul.f32 %v2353, 1.442695
      %v2362 = vpow.pop %v2361
      %v2363 = vmul.f32 %v2354, 1.442695
      %v2364 = vpow.pop %v2363
      %v2365 = vmul.f32 %v2355, 1.442695
      %v2366 = vpow.pop %v2365
      %v2367 = vmul.f32 %v2356, 1.442695
      %v2368 = vpow.pop %v2367
      %v2369 = vmul.f32 %v2357, 1.442695
      %v2370 = vpow.pop %v2369
      %v2371 = vmul.f32 %v2358, 1.442695
      %v2372 = vpow.pop %v2371
      %v2373 = vmul.f32 %v2359, 1.442695
      %v2374 = vpow.pop %v2373
      %v2375 = vmul.f32 %v2360, 1.442695
      %v2376 = vpow.pop %v2375
      %v2377 = vsel %vm694, %v2362, 0.0
      %v2378 = vsel %vm694, %v2364, 0.0
      %v2379 = vadd.f32 %v2377, %v2378
      %v2380 = vsel %vm694, %v2366, 0.0
      %v2381 = vadd.f32 %v2379, %v2380
      %v2382 = vsel %vm694, %v2368, 0.0
      %v2383 = vadd.f32 %v2381, %v2382
      %v2384 = vsel %vm694, %v2370, 0.0
      %v2385 = vadd.f32 %v2383, %v2384
      %v2386 = vsel %vm694, %v2372, 0.0
      %v2387 = vadd.f32 %v2385, %v2386
      %v2388 = vsel %vm694, %v2374, 0.0
      %v2389 = vadd.f32 %v2387, %v2388
      %v2390 = vsel %vm694, %v2376, 0.0
      %v2391 = vadd.f32 %v2389, %v2390
      %v2392 = vrot.slane %v2391, 4
      %v2393 = vadd.f32 %v2391, %v2392
      %v2394 = vrot.slane %v2393, 2
      %v2395 = vadd.f32 %v2393, %v2394
      %v2396 = vrot.slane %v2395, 1
      %v2397 = vadd.f32 %v2395, %v2396
      %v2398 = vrcp.pop %v2397
      %v2399 = vmul.f32 %v2362, %v2398
      %v2400 = vmul.f32 %v2364, %v2398
      %v2401 = vmul.f32 %v2366, %v2398
      %v2402 = vmul.f32 %v2368, %v2398
      %v2403 = vmul.f32 %v2370, %v2398
      %v2404 = vmul.f32 %v2372, %v2398
      %v2405 = vmul.f32 %v2374, %v2398
      %v2406 = vmul.f32 %v2376, %v2398
      %2407 = vxpose.xlu0.b32.start [1/16] %v2399, 128
      %2408 = vxpose.xlu0.b32.cont [2/16] %v2400, 128
      %2409 = vxpose.xlu0.b32.cont [3/16] %v2401, 128
      %2410 = vxpose.xlu0.b32.cont [4/16] %v2402, 128
      %2411 = vxpose.xlu0.b32.cont [5/16] %v2403, 128
      %2412 = vxpose.xlu0.b32.cont [6/16] %v2404, 128
      %2413 = vxpose.xlu0.b32.cont [7/16] %v2405, 128
      %2414 = vxpose.xlu0.b32.cont [8/16] %v2406, 128
      %2415 = vxpose.xlu0.b32.cont [9/16] 0.0, 128
      %2416 = vxpose.xlu0.b32.cont [10/16] 0.0, 128
      %2417 = vxpose.xlu0.b32.cont [11/16] 0.0, 128
      %2418 = vxpose.xlu0.b32.cont [12/16] 0.0, 128
      %2419 = vxpose.xlu0.b32.cont [13/16] 0.0, 128
      %2420 = vxpose.xlu0.b32.cont [14/16] 0.0, 128
      %2421 = vxpose.xlu0.b32.cont [15/16] 0.0, 128
      %2422 = vxpose.xlu0.b32.end [16/16] 0.0, 128
      %v2423 = vpop.trf.xlu0
      %v2424 = vpop.trf.xlu0
      %v2425 = vpop.trf.xlu0
      %v2426 = vpop.trf.xlu0
      %v2427 = vpop.trf.xlu0
      %v2428 = vpop.trf.xlu0
      %v2429 = vpop.trf.xlu0
      %v2430 = vpop.trf.xlu0
      %v2431 = vpop.trf.xlu0
      %v2432 = vpop.trf.xlu0
      %v2433 = vpop.trf.xlu0
      %v2434 = vpop.trf.xlu0
      %v2435 = vpop.trf.xlu0
      %v2436 = vpop.trf.xlu0
      %v2437 = vpop.trf.xlu0
      %v2438 = vpop.trf.xlu0
      %v2440 = vsel %vm898, %v2423, 0
      %v2443 = vsel %vm898, %v2424, 0
      %v2446 = vsel %vm898, %v2425, 0
      %v2449 = vsel %vm898, %v2426, 0
      %2451 = vmatpush.msra.mxu0 0.0
      %2452 = vmatpush.msra.mxu0 0.0
      %2453 = vmatpush.msra.mxu0 0.0
      %2454 = vmatpush.msra.mxu0 0.0
      %2455 = vmatpush.msra.mxu0 0.0
      %2456 = vmatpush.msra.mxu0 0.0
      %2457 = vmatpush.msra.mxu0 0.0
      %2458 = vmatpush.msra.mxu0 0.0
      %2459 = vmatpush.msra.mxu0 %v2234
      %2460 = vmatpush.msra.mxu0 %v2231
      %2461 = vmatpush.msra.mxu0 %v2228
      %2462 = vmatpush.msra.mxu0 %v2225
      %2463 = vmatpush.msra.mxu0 %v2222
      %2464 = vmatpush.msra.mxu0 %v2219
      %2465 = vmatpush.msra.mxu0 %v2216
      %2466 = vmatpush.msra.mxu0 %v2213
      %2467 = vmatmul.f32.gmra.mxu0 %v2440
      %v2468 = vpop.f32.mrf.mxu0
      %v2469 = vadd.f32 0.0, %v2468
      %2470 = vmatmul.f32.gmra.mxu0 %v2443
      %v2471 = vpop.f32.mrf.mxu0
      %v2472 = vadd.f32 0.0, %v2471
      %2473 = vmatmul.f32.gmra.mxu0 %v2446
      %v2474 = vpop.f32.mrf.mxu0
      %v2475 = vadd.f32 0.0, %v2474
      %2476 = vmatmul.f32.gmra.mxu0 %v2449
      %v2477 = vpop.f32.mrf.mxu0
      %v2478 = vadd.f32 0.0, %v2477
      %2479 = vdwg.mxu0
      %v2481 = vsel %vm694, %v2324, 0
      %v2484 = vsel %vm694, %v2325, 0
      %v2487 = vsel %vm694, %v2326, 0
      %v2490 = vsel %vm694, %v2327, 0
      %v2493 = vsel %vm694, %v2328, 0
      %v2496 = vsel %vm694, %v2329, 0
      %v2499 = vsel %vm694, %v2330, 0
      %v2502 = vsel %vm694, %v2331, 0
      %2504 = vmatpush.msra.mxu0 0.0
      %2505 = vmatpush.msra.mxu0 0.0
      %2506 = vmatpush.msra.mxu0 0.0
      %2507 = vmatpush.msra.mxu0 0.0
      %2508 = vmatpush.msra.mxu0 0.0
      %2509 = vmatpush.msra.mxu0 0.0
      %2510 = vmatpush.msra.mxu0 0.0
      %2511 = vmatpush.msra.mxu0 0.0
      %2512 = vmatpush.msra.mxu0 0.0
      %2513 = vmatpush.msra.mxu0 0.0
      %2514 = vmatpush.msra.mxu0 0.0
      %2515 = vmatpush.msra.mxu0 0.0
      %2516 = vmatpush.msra.mxu0 %v2478
      %2517 = vmatpush.msra.mxu0 %v2475
      %2518 = vmatpush.msra.mxu0 %v2472
      %2519 = vmatpush.msra.mxu0 %v2469
      %2520 = vmatmul.f32.gmra.mxu0 %v2481
      %v2521 = vpop.f32.mrf.mxu0
      %v2522 = vadd.f32 0.0, %v2521
      %2523 = vmatmul.f32.gmra.mxu0 %v2484
      %v2524 = vpop.f32.mrf.mxu0
      %v2525 = vadd.f32 0.0, %v2524
      %2526 = vmatmul.f32.gmra.mxu0 %v2487
      %v2527 = vpop.f32.mrf.mxu0
      %v2528 = vadd.f32 0.0, %v2527
      %2529 = vmatmul.f32.gmra.mxu0 %v2490
      %v2530 = vpop.f32.mrf.mxu0
      %v2531 = vadd.f32 0.0, %v2530
      %2532 = vmatmul.f32.gmra.mxu0 %v2493
      %v2533 = vpop.f32.mrf.mxu0
      %v2534 = vadd.f32 0.0, %v2533
      %2535 = vmatmul.f32.gmra.mxu0 %v2496
      %v2536 = vpop.f32.mrf.mxu0
      %v2537 = vadd.f32 0.0, %v2536
      %2538 = vmatmul.f32.gmra.mxu0 %v2499
      %v2539 = vpop.f32.mrf.mxu0
      %v2540 = vadd.f32 0.0, %v2539
      %2541 = vmatmul.f32.gmra.mxu0 %v2502
      %v2542 = vpop.f32.mrf.mxu0
      %v2543 = vadd.f32 0.0, %v2542
      %2544 = vdwg.mxu0
      %s2545 = scalar_lea.vmem %s6, 96
      %v2546 = vld [vmem:[%s2545] sm:$0xff]
      %v2547 = vld [vmem:[%s2545 + $0x8] sm:$0xff]
      %v2548 = vld [vmem:[%s2545 + $0x10] sm:$0xff]
      %v2549 = vld [vmem:[%s2545 + $0x18] sm:$0xff]
      %v2551 = vsel %vm694, %v2522, 0
      %v2554 = vsel %vm694, %v2525, 0
      %v2557 = vsel %vm694, %v2528, 0
      %v2560 = vsel %vm694, %v2531, 0
      %v2563 = vsel %vm694, %v2534, 0
      %v2566 = vsel %vm694, %v2537, 0
      %v2569 = vsel %vm694, %v2540, 0
      %v2572 = vsel %vm694, %v2543, 0
      %2574 = vmatpush.msra.mxu0 0.0
      %2575 = vmatpush.msra.mxu0 0.0
      %2576 = vmatpush.msra.mxu0 0.0
      %2577 = vmatpush.msra.mxu0 0.0
      %2578 = vmatpush.msra.mxu0 0.0
      %2579 = vmatpush.msra.mxu0 0.0
      %2580 = vmatpush.msra.mxu0 0.0
      %2581 = vmatpush.msra.mxu0 0.0
      %2582 = vmatpush.msra.mxu0 0.0
      %2583 = vmatpush.msra.mxu0 0.0
      %2584 = vmatpush.msra.mxu0 0.0
      %2585 = vmatpush.msra.mxu0 0.0
      %2586 = vmatpush.msra.mxu0 %v2549
      %2587 = vmatpush.msra.mxu0 %v2548
      %2588 = vmatpush.msra.mxu0 %v2547
      %2589 = vmatpush.msra.mxu0 %v2546
      %2590 = vmatmul.f32.gmra.mxu0 %v2551
      %v2591 = vpop.f32.mrf.mxu0
      %v2592 = vadd.f32 0.0, %v2591
      %2593 = vmatmul.f32.gmra.mxu0 %v2554
      %v2594 = vpop.f32.mrf.mxu0
      %v2595 = vadd.f32 0.0, %v2594
      %2596 = vmatmul.f32.gmra.mxu0 %v2557
      %v2597 = vpop.f32.mrf.mxu0
      %v2598 = vadd.f32 0.0, %v2597
      %2599 = vmatmul.f32.gmra.mxu0 %v2560
      %v2600 = vpop.f32.mrf.mxu0
      %v2601 = vadd.f32 0.0, %v2600
      %2602 = vmatmul.f32.gmra.mxu0 %v2563
      %v2603 = vpop.f32.mrf.mxu0
      %v2604 = vadd.f32 0.0, %v2603
      %2605 = vmatmul.f32.gmra.mxu0 %v2566
      %v2606 = vpop.f32.mrf.mxu0
      %v2607 = vadd.f32 0.0, %v2606
      %2608 = vmatmul.f32.gmra.mxu0 %v2569
      %v2609 = vpop.f32.mrf.mxu0
      %v2610 = vadd.f32 0.0, %v2609
      %2611 = vmatmul.f32.gmra.mxu0 %v2572
      %v2612 = vpop.f32.mrf.mxu0
      %v2613 = vadd.f32 0.0, %v2612
      %2614 = vdwg.mxu0
      %v2615 = vadd.f32 %v2096, %v2592
      %v2616 = vadd.f32 %v2097, %v2595
      %v2617 = vadd.f32 %v2098, %v2598
      %v2618 = vadd.f32 %v2099, %v2601
      %v2619 = vadd.f32 %v2100, %v2604
      %v2620 = vadd.f32 %v2101, %v2607
      %v2621 = vadd.f32 %v2102, %v2610
      %v2622 = vadd.f32 %v2103, %v2613
      %v2623 = vld [vmem:[%s7] sm:$0x1]
      %v2625 = vperm.slane %v2623, 0
      %v2627 = vadd.f32 %v2615, %v2625
      %v2628 = vadd.f32 %v2616, %v2625
      %v2629 = vadd.f32 %v2617, %v2625
      %v2630 = vadd.f32 %v2618, %v2625
      %v2631 = vadd.f32 %v2619, %v2625
      %v2632 = vadd.f32 %v2620, %v2625
      %v2633 = vadd.f32 %v2621, %v2625
      %v2634 = vadd.f32 %v2622, %v2625
      %v2635 = vld [vmem:[%s8] sm:$0x1]
      %v2636 = vld [vmem:[%s9] sm:$0x1]
      %v2637 = vsel %vm424, %v2627, 0.0
      %v2638 = vsel %vm424, %v2628, 0.0
      %v2639 = vadd.f32 %v2637, %v2638
      %v2640 = vsel %vm424, %v2629, 0.0
      %v2641 = vadd.f32 %v2639, %v2640
      %v2642 = vsel %vm424, %v2630, 0.0
      %v2643 = vadd.f32 %v2641, %v2642
      %v2644 = vsel %vm424, %v2631, 0.0
      %v2645 = vadd.f32 %v2643, %v2644
      %v2646 = vsel %vm424, %v2632, 0.0
      %v2647 = vadd.f32 %v2645, %v2646
      %v2648 = vsel %vm424, %v2633, 0.0
      %v2649 = vadd.f32 %v2647, %v2648
      %v2650 = vsel %vm424, %v2634, 0.0
      %v2651 = vadd.f32 %v2649, %v2650
      %v2652 = vrot.slane %v2651, 4
      %v2653 = vadd.f32 %v2651, %v2652
      %v2654 = vrot.slane %v2653, 2
      %v2655 = vadd.f32 %v2653, %v2654
      %v2656 = vrot.slane %v2655, 1
      %v2657 = vadd.f32 %v2655, %v2656
      %v2658 = vsel %vm424, %v2657, 0.0
      %2659 = vadd.xlane.f32.xlu0 %v2658
      %v2660 = vpop.xlane.xlu0 %2659
      %v2661 = vmul.f32 %v2627, %v2627
      %v2662 = vmul.f32 %v2628, %v2628
      %v2663 = vmul.f32 %v2629, %v2629
      %v2664 = vmul.f32 %v2630, %v2630
      %v2665 = vmul.f32 %v2631, %v2631
      %v2666 = vmul.f32 %v2632, %v2632
      %v2667 = vmul.f32 %v2633, %v2633
      %v2668 = vmul.f32 %v2634, %v2634
      %v2669 = vsel %vm424, %v2661, 0.0
      %v2670 = vsel %vm424, %v2662, 0.0
      %v2671 = vadd.f32 %v2669, %v2670
      %v2672 = vsel %vm424, %v2663, 0.0
      %v2673 = vadd.f32 %v2671, %v2672
      %v2674 = vsel %vm424, %v2664, 0.0
      %v2675 = vadd.f32 %v2673, %v2674
      %v2676 = vsel %vm424, %v2665, 0.0
      %v2677 = vadd.f32 %v2675, %v2676
      %v2678 = vsel %vm424, %v2666, 0.0
      %v2679 = vadd.f32 %v2677, %v2678
      %v2680 = vsel %vm424, %v2667, 0.0
      %v2681 = vadd.f32 %v2679, %v2680
      %v2682 = vsel %vm424, %v2668, 0.0
      %v2683 = vadd.f32 %v2681, %v2682
      %v2684 = vrot.slane %v2683, 4
      %v2685 = vadd.f32 %v2683, %v2684
      %v2686 = vrot.slane %v2685, 2
      %v2687 = vadd.f32 %v2685, %v2686
      %v2688 = vrot.slane %v2687, 1
      %v2689 = vadd.f32 %v2687, %v2688
      %v2690 = vsel %vm424, %v2689, 0.0
      %2691 = vadd.xlane.f32.xlu0 %v2690
      %v2692 = vpop.xlane.xlu0 %2691
      %v2693 = vmul.f32 %v2660, %v487
      %v2694 = vmul.f32 %v2692, %v487
      %v2695 = vmul.f32 %v2693, %v2693
      %v2696 = vsub.f32 %v2694, %v2695
      %v2697 = vsub.f32 %v2627, %v2693
      %v2698 = vsub.f32 %v2628, %v2693
      %v2699 = vsub.f32 %v2629, %v2693
      %v2700 = vsub.f32 %v2630, %v2693
      %v2701 = vsub.f32 %v2631, %v2693
      %v2702 = vsub.f32 %v2632, %v2693
      %v2703 = vsub.f32 %v2633, %v2693
      %v2704 = vsub.f32 %v2634, %v2693
      %v2705 = vadd.f32 %v2696, 1e-05
      %v2706 = vrsqrt.pop %v2705
      %v2707 = vmul.f32 %v2706, %v2705
      %v2708 = vmul.f32 %v2707, %v2706
      %v2709 = vmul.f32 0.5, %v2708
      %v2710 = vsub.f32 1.5, %v2709
      %v2711 = vmul.f32 %v2706, %v2710
      %vm2712 = vweird.f32 %v2705
      %vm2713 = vweird.f32 %v2706
      %vm2714 = vmor %vm2712, %vm2713
      %v2715 = vsel %vm2714, %v2706, %v2711
      %v2716 = vmul.f32 %v2697, %v2715
      %v2717 = vmul.f32 %v2698, %v2715
      %v2718 = vmul.f32 %v2699, %v2715
      %v2719 = vmul.f32 %v2700, %v2715
      %v2720 = vmul.f32 %v2701, %v2715
      %v2721 = vmul.f32 %v2702, %v2715
      %v2722 = vmul.f32 %v2703, %v2715
      %v2723 = vmul.f32 %v2704, %v2715
      %v2725 = vperm.slane %v2635, 0
      %v2727 = vmul.f32 %v2716, %v2725
      %v2728 = vmul.f32 %v2717, %v2725
      %v2729 = vmul.f32 %v2718, %v2725
      %v2730 = vmul.f32 %v2719, %v2725
      %v2731 = vmul.f32 %v2720, %v2725
      %v2732 = vmul.f32 %v2721, %v2725
      %v2733 = vmul.f32 %v2722, %v2725
      %v2734 = vmul.f32 %v2723, %v2725
      %v2736 = vperm.slane %v2636, 0
      %v2738 = vadd.f32 %v2727, %v2736
      %v2739 = vadd.f32 %v2728, %v2736
      %v2740 = vadd.f32 %v2729, %v2736
      %v2741 = vadd.f32 %v2730, %v2736
      %v2742 = vadd.f32 %v2731, %v2736
      %v2743 = vadd.f32 %v2732, %v2736
      %v2744 = vadd.f32 %v2733, %v2736
      %v2745 = vadd.f32 %v2734, %v2736
      %v2746 = vadd.f32 %v414, %v2738
      %v2747 = vadd.f32 %v415, %v2739
      %v2748 = vadd.f32 %v416, %v2740
      %v2749 = vadd.f32 %v417, %v2741
      %v2750 = vadd.f32 %v418, %v2742
      %v2751 = vadd.f32 %v419, %v2743
      %v2752 = vadd.f32 %v420, %v2744
      %v2753 = vadd.f32 %v421, %v2745
      %v2754 = vld [vmem:[%s10] sm:$0xff]
      %v2755 = vld [vmem:[%s10 + $0x8] sm:$0xff]
      %v2756 = vld [vmem:[%s11] sm:$0x1]
      %v2758 = vperm.slane %v2756, 0
      %v2761 = vsel %vm424, %v2746, 0
      %v2764 = vsel %vm424, %v2747, 0
      %v2767 = vsel %vm424, %v2748, 0
      %v2770 = vsel %vm424, %v2749, 0
      %v2773 = vsel %vm424, %v2750, 0
      %v2776 = vsel %vm424, %v2751, 0
      %v2779 = vsel %vm424, %v2752, 0
      %v2782 = vsel %vm424, %v2753, 0
      %2784 = vmatpush.msra.mxu0 0.0
      %2785 = vmatpush.msra.mxu0 0.0
      %2786 = vmatpush.msra.mxu0 0.0
      %2787 = vmatpush.msra.mxu0 0.0
      %2788 = vmatpush.msra.mxu0 0.0
      %2789 = vmatpush.msra.mxu0 0.0
      %2790 = vmatpush.msra.mxu0 0.0
      %2791 = vmatpush.msra.mxu0 0.0
      %2792 = vmatpush.msra.mxu0 0.0
      %2793 = vmatpush.msra.mxu0 0.0
      %2794 = vmatpush.msra.mxu0 0.0
      %2795 = vmatpush.msra.mxu0 0.0
      %2796 = vmatpush.msra.mxu0 0.0
      %2797 = vmatpush.msra.mxu0 0.0
      %2798 = vmatpush.msra.mxu0 %v2755
      %2799 = vmatpush.msra.mxu0 %v2754
      %2800 = vmatmul.f32.gmra.mxu0 %v2761
      %v2801 = vpop.f32.mrf.mxu0
      %v2802 = vadd.f32 %v2758, %v2801
      %2803 = vmatmul.f32.gmra.mxu0 %v2764
      %v2804 = vpop.f32.mrf.mxu0
      %v2805 = vadd.f32 %v2758, %v2804
      %2806 = vmatmul.f32.gmra.mxu0 %v2767
      %v2807 = vpop.f32.mrf.mxu0
      %v2808 = vadd.f32 %v2758, %v2807
      %2809 = vmatmul.f32.gmra.mxu0 %v2770
      %v2810 = vpop.f32.mrf.mxu0
      %v2811 = vadd.f32 %v2758, %v2810
      %2812 = vmatmul.f32.gmra.mxu0 %v2773
      %v2813 = vpop.f32.mrf.mxu0
      %v2814 = vadd.f32 %v2758, %v2813
      %2815 = vmatmul.f32.gmra.mxu0 %v2776
      %v2816 = vpop.f32.mrf.mxu0
      %v2817 = vadd.f32 %v2758, %v2816
      %2818 = vmatmul.f32.gmra.mxu0 %v2779
      %v2819 = vpop.f32.mrf.mxu0
      %v2820 = vadd.f32 %v2758, %v2819
      %2821 = vmatmul.f32.gmra.mxu0 %v2782
      %v2822 = vpop.f32.mrf.mxu0
      %v2823 = vadd.f32 %v2758, %v2822
      %2824 = vdwg.mxu0
      %vm2825 = vcmask 64512
      %2826 = vst.msk [vmem:[%s413] sm:$0xff] %vm2825, %v2802
      %2827 = vst.msk [vmem:[%s413 + $0x8] sm:$0xff] %vm2825, %v2805
      %2828 = vst.msk [vmem:[%s413 + $0x10] sm:$0xff] %vm2825, %v2808
      %2829 = vst.msk [vmem:[%s413 + $0x18] sm:$0xff] %vm2825, %v2811
      %2830 = vst.msk [vmem:[%s413 + $0x20] sm:$0xff] %vm2825, %v2814
      %2831 = vst.msk [vmem:[%s413 + $0x28] sm:$0xff] %vm2825, %v2817
      %2832 = vst.msk [vmem:[%s413 + $0x30] sm:$0xff] %vm2825, %v2820
      %2833 = vst.msk [vmem:[%s413 + $0x38] sm:$0xff] %vm2825, %v2823
      %p2834 = scmp.lt.s32.totalorder %s23, 1
      %s2835 = scalar_select %p2834, %s23, 1
      %s2836 = smul.addr %s2835, 8
      %s2837 = smul.addr %s2836, 8
      %s2838 = scalar_lea.vmem %s12, %s2837
      // Predicated region
      $region69: #{dec_block_forward.9} parent=67 // pred_check
        %p2839 = pneg %p298
      $region70: #{dec_block_forward.9} parent=67 // pred_check_branch
        %2841 = sbr.rel (%p2839) target = $region72
      $region71: #{dec_block_forward.9} parent=67 // pred_region
        _
      $region72: #{dec_block_forward.9} parent=67 // pred_fallthru
        _
    $region68: #{dec_block_forward.9} parent=5 // pred_fallthru
      _
    %p2842 = scmp.le.s32.totalorder 2, %s18
    // Predicated region
    $region73: #{dec_block_forward.9} parent=5 // pred_check
      %p2843 = pneg %p2842
    $region74: #{dec_block_forward.9} parent=5 // pred_check_branch
      %2845 = sbr.rel (%p2843) target = $region76
    $region75: #{dec_block_forward.9} parent=5 // pred_region
      %s2846 = ssub.s32 %s18, 2
      // Predicated region
      $region77: #{dec_block_forward.9} parent=75 // pred_check
        %p2847 = pneg %p304
      $region78: #{dec_block_forward.9} parent=75 // pred_check_branch
        %2849 = sbr.rel (%p2847) target = $region80
      $region79: #{dec_block_forward.9} parent=75 // pred_region
        %p2850 = scmp.lt.s32.totalorder %s24, 1
        %s2851 = scalar_select %p2850, %s24, 1
        %s2852 = smul.addr %s2851, 8
        %s2853 = smul.addr %s2852, 8
        %s2854 = scalar_lea.vmem %s12, %s2853
      $region80: #{dec_block_forward.9} parent=75 // pred_fallthru
        _
    $region76: #{dec_block_forward.9} parent=5 // pred_fallthru
      _
  $region6: #{dec_block_forward.9} parent=0 // loop_footer
    %s22 = sadd.s32 1, %s18
  $region7: #{dec_block_forward.9} parent=0 // loop_footer_branch
    %17 = sbr.rel target = $region3
  $region8: #{dec_block_forward.9} parent=0 // loop_exit
    _

</llo_original>
